<compile_context>
chip_gen: v7x
topology: tpu7x:2x2x1
jax: 0.10.0
libtpu: 0.0.40
codegen_flags: <defaults>
</compile_context>

<pallas_src>
import functools

import numpy as np
import jax
import jax.numpy as jnp
from jax.experimental import pallas as pl
from jax.experimental.pallas import tpu as pltpu  # noqa: F401  (kept for TPU-specific tuning hooks)

# ---------------- GSTParams-like config ----------------
REF_ENC_FILTERS = [4, 8]      # conv channels
EMB_DIM = 32                  # config.emb_dim
NUM_HEADS = 4                 # config.num_heads
TOKEN_NUM = 10                # config.token_num
N_MELS = 16                   # n_mel_channels
BATCH = 2
SEQ = 16                      # mel time frames


def _conv_out(size):
    # 3x3 conv, stride 2, pad 1
    return (size - 3 + 2) // 2 + 1


# ====================== fused Pallas kernel ======================

def _gst_fused_kernel(p1_ref, w1_ref, b1_ref,
                      g2_ref, w2_ref, b2_ref,
                      hsel_ref, wih_ref, bih_ref,
                      whh_ref, bhh_ref,
                      emb_ref, wq_ref, wk_ref, wv_ref,
                      o_ref, *, n_batch, t_gru, num_heads, key_dim):
    f32 = jnp.float32

    # ---- conv1: lane-dense GEMM  [C1, 9] @ [9, N*H1*W1] + bias + ReLU ----
    o1 = jnp.dot(w1_ref[...], p1_ref[...], preferred_element_type=f32)
    o1 = jnp.maximum(o1 + b1_ref[...], 0.0)                              # [C1, 128]

    # ---- conv2: im2col realised as constant selection matmuls, accumulated per tap ----
    o2 = b2_ref[...]                                                     # [C2, 1] (broadcasts)
    for k in range(g2_ref.shape[0]):                                     # 9 taps
        p2k = jnp.dot(o1, g2_ref[k], preferred_element_type=f32)         # [C1, N*T'*M']
        o2 = o2 + jnp.dot(w2_ref[k], p2k, preferred_element_type=f32)    # [C2, N*T'*M']
    o2 = jnp.maximum(o2, 0.0)

    # ---- GRU input projection: gather mel columns into features, one GEMM per column ----
    # xproj rows are p = t*N + n, columns are [r|z|n] gates (input bias folded in).
    xproj = bih_ref[...]                                                 # [1, 3H]
    for m in range(hsel_ref.shape[0]):                                   # M' mel columns
        gm = jnp.dot(o2, hsel_ref[m], preferred_element_type=f32)        # [C2, N*T']
        xproj = xproj + jnp.dot(gm.T, wih_ref[m], preferred_element_type=f32)  # [N*T', 3H]

    # ---- GRU recurrence: statically unrolled, single [H, 3H] GEMM per step ----
    hidden = whh_ref.shape[0]
    h = jnp.zeros((n_batch, hidden), f32)
    for t in range(t_gru):
        x_t = xproj[t * n_batch:(t + 1) * n_batch, :]                    # [N, 3H]
        g = jnp.dot(h, whh_ref[...], preferred_element_type=f32) + bhh_ref[...]
        r = jax.nn.sigmoid(x_t[:, 0 * hidden:1 * hidden] + g[:, 0 * hidden:1 * hidden])
        z = jax.nn.sigmoid(x_t[:, 1 * hidden:2 * hidden] + g[:, 1 * hidden:2 * hidden])
        nn = jnp.tanh(x_t[:, 2 * hidden:3 * hidden] + r * g[:, 2 * hidden:3 * hidden])
        h = (1.0 - z) * nn + z * h                                       # [N, H]

    # ---- STL multi-head attention over style tokens ----
    keys = jnp.tanh(emb_ref[...])                                        # [Tk, dk]
    q = jnp.dot(h, wq_ref[...], preferred_element_type=f32)              # [N, E]
    kk = jnp.dot(keys, wk_ref[...], preferred_element_type=f32)          # [Tk, E]
    vv = jnp.dot(keys, wv_ref[...], preferred_element_type=f32)          # [Tk, E]
    dh = q.shape[1] // num_heads
    scale = 1.0 / (float(key_dim) ** 0.5)
    for hh in range(num_heads):
        qh = q[:, hh * dh:(hh + 1) * dh]
        kh = kk[:, hh * dh:(hh + 1) * dh]
        vh = vv[:, hh * dh:(hh + 1) * dh]
        s = jnp.dot(qh, kh.T, preferred_element_type=f32) * scale        # [N, Tk]
        s = s - jnp.max(s, axis=-1, keepdims=True)
        e = jnp.exp(s)
        p = e * pl.reciprocal(jnp.sum(e, axis=-1, keepdims=True), approx=True)
        o_ref[hh] = jnp.dot(p, vh, preferred_element_type=f32)           # [N, dh]


# ====================== wrapper ======================

def gst_forward(x, params):
    n, t, m = x.shape
    h1, w1 = _conv_out(t), _conv_out(m)
    h2 = _conv_out(h1)

    # conv1 im2col of the raw input (tiny; fused by XLA right before the single Pallas call)
    xp = jnp.pad(x, ((0, 0), (1, 1), (1, 1)))
    taps = [xp[:, ky:ky + 2 * h1:2, kx:kx + 2 * w1:2].reshape(-1)
            for ky in range(3) for kx in range(3)]
    p1 = jnp.stack(taps, axis=0)                                         # [9, N*H1*W1]

    dh = EMB_DIM // NUM_HEADS
    out = pl.pallas_call(
        functools.partial(_gst_fused_kernel, n_batch=n, t_gru=h2,
                          num_heads=NUM_HEADS, key_dim=EMB_DIM // NUM_HEADS),
        out_shape=jax.ShapeDtypeStruct((NUM_HEADS, n, dh), jnp.float32),
    )(p1, params["w1mat"], params["b1col"],
      params["g2sel"], params["w2k"], params["b2col"],
      params["hsel"], params["wihm"], params["bih"],
      params["whh"], params["bhh"],
      params["embed"], params["wq"], params["wk"], params["wv"])
    # torch: cat(split(out, 1, dim=0), dim=3).squeeze(0) -> [N, 1, E] (head-major)
    return jnp.transpose(out, (1, 0, 2)).reshape(n, 1, NUM_HEADS * dh)


gst_forward = jax.jit(gst_forward)


# ====================== parameter construction ======================

def init_params(key):
    c1, c2 = REF_ENC_FILTERS
    n = BATCH
    h1, w1o = _conv_out(SEQ), _conv_out(N_MELS)      # 8, 8
    h2, w2o = _conv_out(h1), _conv_out(w1o)          # 4, 4
    hid = EMB_DIM // 2                               # 16
    feat = c2 * w2o                                  # GRU input size = C * M'

    params = {}
    # ---- reference-encoder convs (weights kept as [kh, kw, cin, cout]) ----
    key, k1, k2, k3, k4 = jax.random.split(key, 5)
    w1 = 0.1 * jax.random.normal(k1, (3, 3, 1, c1), jnp.float32)
    b1 = 0.1 * jax.random.normal(k2, (c1,), jnp.float32)
    w2 = 0.1 * jax.random.normal(k3, (3, 3, c1, c2), jnp.float32)
    b2 = 0.1 * jax.random.normal(k4, (c2,), jnp.float32)
    params["w1mat"] = w1.reshape(9, c1).T                        # [C1, 9]
    params["b1col"] = b1.reshape(c1, 1)
    params["w2k"] = w2.reshape(9, c1, c2).transpose(0, 2, 1)     # [9, C2, C1]
    params["b2col"] = b2.reshape(c2, 1)

    # ---- GRU (gate order [r|z|n], PyTorch semantics) ----
    key, k1, k2, k3, k4 = jax.random.split(key, 5)
    w_ih = 0.1 * jax.random.normal(k1, (feat, 3 * hid), jnp.float32)
    b_ih = 0.1 * jax.random.normal(k2, (3 * hid,), jnp.float32)
    w_hh = 0.1 * jax.random.normal(k3, (hid, 3 * hid), jnp.float32)
    b_hh = 0.1 * jax.random.normal(k4, (3 * hid,), jnp.float32)
    # reorder W_ih rows from torch feature order (c*M'+m) to kernel order (m*C2+c)
    perm = np.array([c * w2o + m for m in range(w2o) for c in range(c2)], np.int32)
    params["wihm"] = w_ih[perm, :].reshape(w2o, c2, 3 * hid)     # [M', C2, 3H]
    params["bih"] = b_ih.reshape(1, 3 * hid)
    params["whh"] = w_hh                                         # [H, 3H]
    params["bhh"] = b_hh.reshape(1, 3 * hid)

    # ---- STL (projection matrices stored as [in, out], i.e. torch weight.T) ----
    dq = EMB_DIM // 2
    dk = EMB_DIM // NUM_HEADS
    key, k1, k2, k3, k4 = jax.random.split(key, 5)
    params["embed"] = 0.5 * jax.random.normal(k1, (TOKEN_NUM, dk), jnp.float32)
    params["wq"] = 0.1 * jax.random.normal(k2, (dq, EMB_DIM), jnp.float32)
    params["wk"] = 0.1 * jax.random.normal(k3, (dk, EMB_DIM), jnp.float32)
    params["wv"] = 0.1 * jax.random.normal(k4, (dk, EMB_DIM), jnp.float32)

    # ---- constant 0/1 selection matrices (gather-as-matmul, built once with numpy) ----
    # conv2 im2col: tap k=(ky,kx) maps conv1 lane q=n*H1*W1+oy*W1+ox to conv2 column
    # p2=(t*N+n)*M'+m ; all-zero column == zero padding.
    g2 = np.zeros((9, n * h1 * w1o, n * h2 * w2o), np.float32)
    for ky in range(3):
        for kx in range(3):
            k_ = ky * 3 + kx
            for t in range(h2):
                for b in range(n):
                    for m in range(w2o):
                        oy, ox = 2 * t + ky - 1, 2 * m + kx - 1
                        if 0 <= oy < h1 and 0 <= ox < w1o:
                            q = b * h1 * w1o + oy * w1o + ox
                            p2 = (t * n + b) * w2o + m
                            g2[k_, q, p2] = 1.0
    params["g2sel"] = jnp.asarray(g2)

    # GRU-input gather: for mel column m, pick conv2 lane p*M'+m into column p=t*N+n.
    hsel = np.zeros((w2o, n * h2 * w2o, n * h2), np.float32)
    for m in range(w2o):
        for p in range(n * h2):
            hsel[m, p * w2o + m, p] = 1.0
    params["hsel"] = jnp.asarray(hsel)
    return params


if __name__ == "__main__":
    key = jax.random.PRNGKey(0)
    kx, kp = jax.random.split(key)
    x = jax.random.normal(kx, (BATCH, SEQ, N_MELS), jnp.float32)
    params = init_params(kp)

    out = gst_forward(x, params)
    out = jax.block_until_ready(out)
    assert out.shape == (BATCH, 1, EMB_DIM), out.shape
    assert bool(jnp.all(jnp.isfinite(out)))
    print("KERNEL_OK")
</pallas_src>

<mosaic_0001>
module attributes {stable_mosaic.version = 11 : i64} {
  func.func @_gst_fused_kernel(%arg0: memref<9x128xf32, #tpu.memory_space<vmem>>, %arg1: memref<4x9xf32, #tpu.memory_space<vmem>>, %arg2: memref<4x1xf32, #tpu.memory_space<vmem>>, %arg3: memref<9x128x32xf32, #tpu.memory_space<vmem>>, %arg4: memref<9x8x4xf32, #tpu.memory_space<vmem>>, %arg5: memref<8x1xf32, #tpu.memory_space<vmem>>, %arg6: memref<4x32x8xf32, #tpu.memory_space<vmem>>, %arg7: memref<4x8x48xf32, #tpu.memory_space<vmem>>, %arg8: memref<1x48xf32, #tpu.memory_space<vmem>>, %arg9: memref<16x48xf32, #tpu.memory_space<vmem>>, %arg10: memref<1x48xf32, #tpu.memory_space<vmem>>, %arg11: memref<10x8xf32, #tpu.memory_space<vmem>>, %arg12: memref<16x32xf32, #tpu.memory_space<vmem>>, %arg13: memref<8x32xf32, #tpu.memory_space<vmem>>, %arg14: memref<8x32xf32, #tpu.memory_space<vmem>>, %arg15: memref<4x2x8xf32, #tpu.memory_space<vmem>>) attributes {dimension_semantics = [], scalar_prefetch = 0 : i64, scratch_operands = 0 : i64, tpu.core_type = #tpu.core_type<tc>} {
    %c0 = arith.constant 0 : index
    %c0_0 = arith.constant 0 : index
    %0 = vector.load %arg1[%c0, %c0_0] : memref<4x9xf32, #tpu.memory_space<vmem>>, vector<4x9xf32>
    %c0_1 = arith.constant 0 : index
    %c0_2 = arith.constant 0 : index
    %1 = vector.load %arg0[%c0_1, %c0_2] : memref<9x128xf32, #tpu.memory_space<vmem>>, vector<9x128xf32>
    %cst = arith.constant dense<0.000000e+00> : vector<4x128xf32>
    %2 = tpu.matmul %0, %1, %cst {dimension_numbers = #tpu.dot_dimension_numbers<[1], [0], [0], [1], [0, 0, 1, 1], [], []>} : vector<4x9xf32>, vector<9x128xf32>, vector<4x128xf32> -> vector<4x128xf32>
    %c0_3 = arith.constant 0 : index
    %c0_4 = arith.constant 0 : index
    %3 = vector.load %arg2[%c0_3, %c0_4] : memref<4x1xf32, #tpu.memory_space<vmem>>, vector<4x1xf32>
    %4 = vector.broadcast %3 : vector<4x1xf32> to vector<4x128xf32>
    %5 = arith.addf %2, %4 : vector<4x128xf32>
    %cst_5 = arith.constant 0.000000e+00 : f32
    %6 = vector.broadcast %cst_5 : f32 to vector<4x128xf32>
    %7 = arith.maximumf %5, %6 : vector<4x128xf32>
    %c0_6 = arith.constant 0 : index
    %c0_7 = arith.constant 0 : index
    %8 = vector.load %arg5[%c0_6, %c0_7] : memref<8x1xf32, #tpu.memory_space<vmem>>, vector<8x1xf32>
    %c0_8 = arith.constant 0 : index
    %c0_9 = arith.constant 0 : index
    %c0_10 = arith.constant 0 : index
    %9 = vector.load %arg3[%c0_8, %c0_9, %c0_10] : memref<9x128x32xf32, #tpu.memory_space<vmem>>, vector<1x128x32xf32>
    %10 = vector.shape_cast %9 : vector<1x128x32xf32> to vector<128x32xf32>
    %cst_11 = arith.constant dense<0.000000e+00> : vector<4x32xf32>
    %11 = tpu.matmul %7, %10, %cst_11 {dimension_numbers = #tpu.dot_dimension_numbers<[1], [0], [0], [1], [0, 0, 1, 1], [], []>} : vector<4x128xf32>, vector<128x32xf32>, vector<4x32xf32> -> vector<4x32xf32>
    %c0_12 = arith.constant 0 : index
    %c0_13 = arith.constant 0 : index
    %c0_14 = arith.constant 0 : index
    %12 = vector.load %arg4[%c0_12, %c0_13, %c0_14] : memref<9x8x4xf32, #tpu.memory_space<vmem>>, vector<1x8x4xf32>
    %13 = vector.shape_cast %12 : vector<1x8x4xf32> to vector<8x4xf32>
    %cst_15 = arith.constant dense<0.000000e+00> : vector<8x32xf32>
    %14 = tpu.matmul %13, %11, %cst_15 {dimension_numbers = #tpu.dot_dimension_numbers<[1], [0], [0], [1], [0, 0, 1, 1], [], []>} : vector<8x4xf32>, vector<4x32xf32>, vector<8x32xf32> -> vector<8x32xf32>
    %15 = vector.broadcast %8 : vector<8x1xf32> to vector<8x32xf32>
    %16 = arith.addf %15, %14 : vector<8x32xf32>
    %c1 = arith.constant 1 : index
    %c0_16 = arith.constant 0 : index
    %c0_17 = arith.constant 0 : index
    %17 = vector.load %arg3[%c1, %c0_16, %c0_17] : memref<9x128x32xf32, #tpu.memory_space<vmem>>, vector<1x128x32xf32>
    %18 = vector.shape_cast %17 : vector<1x128x32xf32> to vector<128x32xf32>
    %cst_18 = arith.constant dense<0.000000e+00> : vector<4x32xf32>
    %19 = tpu.matmul %7, %18, %cst_18 {dimension_numbers = #tpu.dot_dimension_numbers<[1], [0], [0], [1], [0, 0, 1, 1], [], []>} : vector<4x128xf32>, vector<128x32xf32>, vector<4x32xf32> -> vector<4x32xf32>
    %c1_19 = arith.constant 1 : index
    %c0_20 = arith.constant 0 : index
    %c0_21 = arith.constant 0 : index
    %20 = vector.load %arg4[%c1_19, %c0_20, %c0_21] : memref<9x8x4xf32, #tpu.memory_space<vmem>>, vector<1x8x4xf32>
    %21 = vector.shape_cast %20 : vector<1x8x4xf32> to vector<8x4xf32>
    %cst_22 = arith.constant dense<0.000000e+00> : vector<8x32xf32>
    %22 = tpu.matmul %21, %19, %cst_22 {dimension_numbers = #tpu.dot_dimension_numbers<[1], [0], [0], [1], [0, 0, 1, 1], [], []>} : vector<8x4xf32>, vector<4x32xf32>, vector<8x32xf32> -> vector<8x32xf32>
    %23 = arith.addf %16, %22 : vector<8x32xf32>
    %c2 = arith.constant 2 : index
    %c0_23 = arith.constant 0 : index
    %c0_24 = arith.constant 0 : index
    %24 = vector.load %arg3[%c2, %c0_23, %c0_24] : memref<9x128x32xf32, #tpu.memory_space<vmem>>, vector<1x128x32xf32>
    %25 = vector.shape_cast %24 : vector<1x128x32xf32> to vector<128x32xf32>
    %cst_25 = arith.constant dense<0.000000e+00> : vector<4x32xf32>
    %26 = tpu.matmul %7, %25, %cst_25 {dimension_numbers = #tpu.dot_dimension_numbers<[1], [0], [0], [1], [0, 0, 1, 1], [], []>} : vector<4x128xf32>, vector<128x32xf32>, vector<4x32xf32> -> vector<4x32xf32>
    %c2_26 = arith.constant 2 : index
    %c0_27 = arith.constant 0 : index
    %c0_28 = arith.constant 0 : index
    %27 = vector.load %arg4[%c2_26, %c0_27, %c0_28] : memref<9x8x4xf32, #tpu.memory_space<vmem>>, vector<1x8x4xf32>
    %28 = vector.shape_cast %27 : vector<1x8x4xf32> to vector<8x4xf32>
    %cst_29 = arith.constant dense<0.000000e+00> : vector<8x32xf32>
    %29 = tpu.matmul %28, %26, %cst_29 {dimension_numbers = #tpu.dot_dimension_numbers<[1], [0], [0], [1], [0, 0, 1, 1], [], []>} : vector<8x4xf32>, vector<4x32xf32>, vector<8x32xf32> -> vector<8x32xf32>
    %30 = arith.addf %23, %29 : vector<8x32xf32>
    %c3 = arith.constant 3 : index
    %c0_30 = arith.constant 0 : index
    %c0_31 = arith.constant 0 : index
    %31 = vector.load %arg3[%c3, %c0_30, %c0_31] : memref<9x128x32xf32, #tpu.memory_space<vmem>>, vector<1x128x32xf32>
    %32 = vector.shape_cast %31 : vector<1x128x32xf32> to vector<128x32xf32>
    %cst_32 = arith.constant dense<0.000000e+00> : vector<4x32xf32>
    %33 = tpu.matmul %7, %32, %cst_32 {dimension_numbers = #tpu.dot_dimension_numbers<[1], [0], [0], [1], [0, 0, 1, 1], [], []>} : vector<4x128xf32>, vector<128x32xf32>, vector<4x32xf32> -> vector<4x32xf32>
    %c3_33 = arith.constant 3 : index
    %c0_34 = arith.constant 0 : index
    %c0_35 = arith.constant 0 : index
    %34 = vector.load %arg4[%c3_33, %c0_34, %c0_35] : memref<9x8x4xf32, #tpu.memory_space<vmem>>, vector<1x8x4xf32>
    %35 = vector.shape_cast %34 : vector<1x8x4xf32> to vector<8x4xf32>
    %cst_36 = arith.constant dense<0.000000e+00> : vector<8x32xf32>
    %36 = tpu.matmul %35, %33, %cst_36 {dimension_numbers = #tpu.dot_dimension_numbers<[1], [0], [0], [1], [0, 0, 1, 1], [], []>} : vector<8x4xf32>, vector<4x32xf32>, vector<8x32xf32> -> vector<8x32xf32>
    %37 = arith.addf %30, %36 : vector<8x32xf32>
    %c4 = arith.constant 4 : index
    %c0_37 = arith.constant 0 : index
    %c0_38 = arith.constant 0 : index
    %38 = vector.load %arg3[%c4, %c0_37, %c0_38] : memref<9x128x32xf32, #tpu.memory_space<vmem>>, vector<1x128x32xf32>
    %39 = vector.shape_cast %38 : vector<1x128x32xf32> to vector<128x32xf32>
    %cst_39 = arith.constant dense<0.000000e+00> : vector<4x32xf32>
    %40 = tpu.matmul %7, %39, %cst_39 {dimension_numbers = #tpu.dot_dimension_numbers<[1], [0], [0], [1], [0, 0, 1, 1], [], []>} : vector<4x128xf32>, vector<128x32xf32>, vector<4x32xf32> -> vector<4x32xf32>
    %c4_40 = arith.constant 4 : index
    %c0_41 = arith.constant 0 : index
    %c0_42 = arith.constant 0 : index
    %41 = vector.load %arg4[%c4_40, %c0_41, %c0_42] : memref<9x8x4xf32, #tpu.memory_space<vmem>>, vector<1x8x4xf32>
    %42 = vector.shape_cast %41 : vector<1x8x4xf32> to vector<8x4xf32>
    %cst_43 = arith.constant dense<0.000000e+00> : vector<8x32xf32>
    %43 = tpu.matmul %42, %40, %cst_43 {dimension_numbers = #tpu.dot_dimension_numbers<[1], [0], [0], [1], [0, 0, 1, 1], [], []>} : vector<8x4xf32>, vector<4x32xf32>, vector<8x32xf32> -> vector<8x32xf32>
    %44 = arith.addf %37, %43 : vector<8x32xf32>
    %c5 = arith.constant 5 : index
    %c0_44 = arith.constant 0 : index
    %c0_45 = arith.constant 0 : index
    %45 = vector.load %arg3[%c5, %c0_44, %c0_45] : memref<9x128x32xf32, #tpu.memory_space<vmem>>, vector<1x128x32xf32>
    %46 = vector.shape_cast %45 : vector<1x128x32xf32> to vector<128x32xf32>
    %cst_46 = arith.constant dense<0.000000e+00> : vector<4x32xf32>
    %47 = tpu.matmul %7, %46, %cst_46 {dimension_numbers = #tpu.dot_dimension_numbers<[1], [0], [0], [1], [0, 0, 1, 1], [], []>} : vector<4x128xf32>, vector<128x32xf32>, vector<4x32xf32> -> vector<4x32xf32>
    %c5_47 = arith.constant 5 : index
    %c0_48 = arith.constant 0 : index
    %c0_49 = arith.constant 0 : index
    %48 = vector.load %arg4[%c5_47, %c0_48, %c0_49] : memref<9x8x4xf32, #tpu.memory_space<vmem>>, vector<1x8x4xf32>
    %49 = vector.shape_cast %48 : vector<1x8x4xf32> to vector<8x4xf32>
    %cst_50 = arith.constant dense<0.000000e+00> : vector<8x32xf32>
    %50 = tpu.matmul %49, %47, %cst_50 {dimension_numbers = #tpu.dot_dimension_numbers<[1], [0], [0], [1], [0, 0, 1, 1], [], []>} : vector<8x4xf32>, vector<4x32xf32>, vector<8x32xf32> -> vector<8x32xf32>
    %51 = arith.addf %44, %50 : vector<8x32xf32>
    %c6 = arith.constant 6 : index
    %c0_51 = arith.constant 0 : index
    %c0_52 = arith.constant 0 : index
    %52 = vector.load %arg3[%c6, %c0_51, %c0_52] : memref<9x128x32xf32, #tpu.memory_space<vmem>>, vector<1x128x32xf32>
    %53 = vector.shape_cast %52 : vector<1x128x32xf32> to vector<128x32xf32>
    %cst_53 = arith.constant dense<0.000000e+00> : vector<4x32xf32>
    %54 = tpu.matmul %7, %53, %cst_53 {dimension_numbers = #tpu.dot_dimension_numbers<[1], [0], [0], [1], [0, 0, 1, 1], [], []>} : vector<4x128xf32>, vector<128x32xf32>, vector<4x32xf32> -> vector<4x32xf32>
    %c6_54 = arith.constant 6 : index
    %c0_55 = arith.constant 0 : index
    %c0_56 = arith.constant 0 : index
    %55 = vector.load %arg4[%c6_54, %c0_55, %c0_56] : memref<9x8x4xf32, #tpu.memory_space<vmem>>, vector<1x8x4xf32>
    %56 = vector.shape_cast %55 : vector<1x8x4xf32> to vector<8x4xf32>
    %cst_57 = arith.constant dense<0.000000e+00> : vector<8x32xf32>
    %57 = tpu.matmul %56, %54, %cst_57 {dimension_numbers = #tpu.dot_dimension_numbers<[1], [0], [0], [1], [0, 0, 1, 1], [], []>} : vector<8x4xf32>, vector<4x32xf32>, vector<8x32xf32> -> vector<8x32xf32>
    %58 = arith.addf %51, %57 : vector<8x32xf32>
    %c7 = arith.constant 7 : index
    %c0_58 = arith.constant 0 : index
    %c0_59 = arith.constant 0 : index
    %59 = vector.load %arg3[%c7, %c0_58, %c0_59] : memref<9x128x32xf32, #tpu.memory_space<vmem>>, vector<1x128x32xf32>
    %60 = vector.shape_cast %59 : vector<1x128x32xf32> to vector<128x32xf32>
    %cst_60 = arith.constant dense<0.000000e+00> : vector<4x32xf32>
    %61 = tpu.matmul %7, %60, %cst_60 {dimension_numbers = #tpu.dot_dimension_numbers<[1], [0], [0], [1], [0, 0, 1, 1], [], []>} : vector<4x128xf32>, vector<128x32xf32>, vector<4x32xf32> -> vector<4x32xf32>
    %c7_61 = arith.constant 7 : index
    %c0_62 = arith.constant 0 : index
    %c0_63 = arith.constant 0 : index
    %62 = vector.load %arg4[%c7_61, %c0_62, %c0_63] : memref<9x8x4xf32, #tpu.memory_space<vmem>>, vector<1x8x4xf32>
    %63 = vector.shape_cast %62 : vector<1x8x4xf32> to vector<8x4xf32>
    %cst_64 = arith.constant dense<0.000000e+00> : vector<8x32xf32>
    %64 = tpu.matmul %63, %61, %cst_64 {dimension_numbers = #tpu.dot_dimension_numbers<[1], [0], [0], [1], [0, 0, 1, 1], [], []>} : vector<8x4xf32>, vector<4x32xf32>, vector<8x32xf32> -> vector<8x32xf32>
    %65 = arith.addf %58, %64 : vector<8x32xf32>
    %c8 = arith.constant 8 : index
    %c0_65 = arith.constant 0 : index
    %c0_66 = arith.constant 0 : index
    %66 = vector.load %arg3[%c8, %c0_65, %c0_66] : memref<9x128x32xf32, #tpu.memory_space<vmem>>, vector<1x128x32xf32>
    %67 = vector.shape_cast %66 : vector<1x128x32xf32> to vector<128x32xf32>
    %cst_67 = arith.constant dense<0.000000e+00> : vector<4x32xf32>
    %68 = tpu.matmul %7, %67, %cst_67 {dimension_numbers = #tpu.dot_dimension_numbers<[1], [0], [0], [1], [0, 0, 1, 1], [], []>} : vector<4x128xf32>, vector<128x32xf32>, vector<4x32xf32> -> vector<4x32xf32>
    %c8_68 = arith.constant 8 : index
    %c0_69 = arith.constant 0 : index
    %c0_70 = arith.constant 0 : index
    %69 = vector.load %arg4[%c8_68, %c0_69, %c0_70] : memref<9x8x4xf32, #tpu.memory_space<vmem>>, vector<1x8x4xf32>
    %70 = vector.shape_cast %69 : vector<1x8x4xf32> to vector<8x4xf32>
    %cst_71 = arith.constant dense<0.000000e+00> : vector<8x32xf32>
    %71 = tpu.matmul %70, %68, %cst_71 {dimension_numbers = #tpu.dot_dimension_numbers<[1], [0], [0], [1], [0, 0, 1, 1], [], []>} : vector<8x4xf32>, vector<4x32xf32>, vector<8x32xf32> -> vector<8x32xf32>
    %72 = arith.addf %65, %71 : vector<8x32xf32>
    %cst_72 = arith.constant 0.000000e+00 : f32
    %73 = vector.broadcast %cst_72 : f32 to vector<8x32xf32>
    %74 = arith.maximumf %72, %73 : vector<8x32xf32>
    %c0_73 = arith.constant 0 : index
    %c0_74 = arith.constant 0 : index
    %75 = vector.load %arg8[%c0_73, %c0_74] : memref<1x48xf32, #tpu.memory_space<vmem>>, vector<1x48xf32>
    %c0_75 = arith.constant 0 : index
    %c0_76 = arith.constant 0 : index
    %c0_77 = arith.constant 0 : index
    %76 = vector.load %arg6[%c0_75, %c0_76, %c0_77] : memref<4x32x8xf32, #tpu.memory_space<vmem>>, vector<1x32x8xf32>
    %77 = vector.shape_cast %76 : vector<1x32x8xf32> to vector<32x8xf32>
    %cst_78 = arith.constant dense<0.000000e+00> : vector<8x8xf32>
    %78 = tpu.matmul %74, %77, %cst_78 {dimension_numbers = #tpu.dot_dimension_numbers<[1], [0], [0], [1], [0, 0, 1, 1], [], []>} : vector<8x32xf32>, vector<32x8xf32>, vector<8x8xf32> -> vector<8x8xf32>
    %79 = tpu.transpose %78, [1, 0] : vector<8x8xf32> -> vector<8x8xf32>
    %c0_79 = arith.constant 0 : index
    %c0_80 = arith.constant 0 : index
    %c0_81 = arith.constant 0 : index
    %80 = vector.load %arg7[%c0_79, %c0_80, %c0_81] : memref<4x8x48xf32, #tpu.memory_space<vmem>>, vector<1x8x48xf32>
    %81 = vector.shape_cast %80 : vector<1x8x48xf32> to vector<8x48xf32>
    %cst_82 = arith.constant dense<0.000000e+00> : vector<8x48xf32>
    %82 = tpu.matmul %79, %81, %cst_82 {dimension_numbers = #tpu.dot_dimension_numbers<[1], [0], [0], [1], [0, 0, 1, 1], [], []>} : vector<8x8xf32>, vector<8x48xf32>, vector<8x48xf32> -> vector<8x48xf32>
    %83 = vector.broadcast %75 : vector<1x48xf32> to vector<8x48xf32>
    %84 = arith.addf %83, %82 : vector<8x48xf32>
    %c1_83 = arith.constant 1 : index
    %c0_84 = arith.constant 0 : index
    %c0_85 = arith.constant 0 : index
    %85 = vector.load %arg6[%c1_83, %c0_84, %c0_85] : memref<4x32x8xf32, #tpu.memory_space<vmem>>, vector<1x32x8xf32>
    %86 = vector.shape_cast %85 : vector<1x32x8xf32> to vector<32x8xf32>
    %cst_86 = arith.constant dense<0.000000e+00> : vector<8x8xf32>
    %87 = tpu.matmul %74, %86, %cst_86 {dimension_numbers = #tpu.dot_dimension_numbers<[1], [0], [0], [1], [0, 0, 1, 1], [], []>} : vector<8x32xf32>, vector<32x8xf32>, vector<8x8xf32> -> vector<8x8xf32>
    %88 = tpu.transpose %87, [1, 0] : vector<8x8xf32> -> vector<8x8xf32>
    %c1_87 = arith.constant 1 : index
    %c0_88 = arith.constant 0 : index
    %c0_89 = arith.constant 0 : index
    %89 = vector.load %arg7[%c1_87, %c0_88, %c0_89] : memref<4x8x48xf32, #tpu.memory_space<vmem>>, vector<1x8x48xf32>
    %90 = vector.shape_cast %89 : vector<1x8x48xf32> to vector<8x48xf32>
    %cst_90 = arith.constant dense<0.000000e+00> : vector<8x48xf32>
    %91 = tpu.matmul %88, %90, %cst_90 {dimension_numbers = #tpu.dot_dimension_numbers<[1], [0], [0], [1], [0, 0, 1, 1], [], []>} : vector<8x8xf32>, vector<8x48xf32>, vector<8x48xf32> -> vector<8x48xf32>
    %92 = arith.addf %84, %91 : vector<8x48xf32>
    %c2_91 = arith.constant 2 : index
    %c0_92 = arith.constant 0 : index
    %c0_93 = arith.constant 0 : index
    %93 = vector.load %arg6[%c2_91, %c0_92, %c0_93] : memref<4x32x8xf32, #tpu.memory_space<vmem>>, vector<1x32x8xf32>
    %94 = vector.shape_cast %93 : vector<1x32x8xf32> to vector<32x8xf32>
    %cst_94 = arith.constant dense<0.000000e+00> : vector<8x8xf32>
    %95 = tpu.matmul %74, %94, %cst_94 {dimension_numbers = #tpu.dot_dimension_numbers<[1], [0], [0], [1], [0, 0, 1, 1], [], []>} : vector<8x32xf32>, vector<32x8xf32>, vector<8x8xf32> -> vector<8x8xf32>
    %96 = tpu.transpose %95, [1, 0] : vector<8x8xf32> -> vector<8x8xf32>
    %c2_95 = arith.constant 2 : index
    %c0_96 = arith.constant 0 : index
    %c0_97 = arith.constant 0 : index
    %97 = vector.load %arg7[%c2_95, %c0_96, %c0_97] : memref<4x8x48xf32, #tpu.memory_space<vmem>>, vector<1x8x48xf32>
    %98 = vector.shape_cast %97 : vector<1x8x48xf32> to vector<8x48xf32>
    %cst_98 = arith.constant dense<0.000000e+00> : vector<8x48xf32>
    %99 = tpu.matmul %96, %98, %cst_98 {dimension_numbers = #tpu.dot_dimension_numbers<[1], [0], [0], [1], [0, 0, 1, 1], [], []>} : vector<8x8xf32>, vector<8x48xf32>, vector<8x48xf32> -> vector<8x48xf32>
    %100 = arith.addf %92, %99 : vector<8x48xf32>
    %c3_99 = arith.constant 3 : index
    %c0_100 = arith.constant 0 : index
    %c0_101 = arith.constant 0 : index
    %101 = vector.load %arg6[%c3_99, %c0_100, %c0_101] : memref<4x32x8xf32, #tpu.memory_space<vmem>>, vector<1x32x8xf32>
    %102 = vector.shape_cast %101 : vector<1x32x8xf32> to vector<32x8xf32>
    %cst_102 = arith.constant dense<0.000000e+00> : vector<8x8xf32>
    %103 = tpu.matmul %74, %102, %cst_102 {dimension_numbers = #tpu.dot_dimension_numbers<[1], [0], [0], [1], [0, 0, 1, 1], [], []>} : vector<8x32xf32>, vector<32x8xf32>, vector<8x8xf32> -> vector<8x8xf32>
    %104 = tpu.transpose %103, [1, 0] : vector<8x8xf32> -> vector<8x8xf32>
    %c3_103 = arith.constant 3 : index
    %c0_104 = arith.constant 0 : index
    %c0_105 = arith.constant 0 : index
    %105 = vector.load %arg7[%c3_103, %c0_104, %c0_105] : memref<4x8x48xf32, #tpu.memory_space<vmem>>, vector<1x8x48xf32>
    %106 = vector.shape_cast %105 : vector<1x8x48xf32> to vector<8x48xf32>
    %cst_106 = arith.constant dense<0.000000e+00> : vector<8x48xf32>
    %107 = tpu.matmul %104, %106, %cst_106 {dimension_numbers = #tpu.dot_dimension_numbers<[1], [0], [0], [1], [0, 0, 1, 1], [], []>} : vector<8x8xf32>, vector<8x48xf32>, vector<8x48xf32> -> vector<8x48xf32>
    %108 = arith.addf %100, %107 : vector<8x48xf32>
    %cst_107 = arith.constant 0.000000e+00 : f32
    %109 = vector.broadcast %cst_107 : f32 to vector<2x16xf32>
    %110 = vector.extract_strided_slice %108 {offsets = [0, 0], sizes = [2, 48], strides = [1, 1]} : vector<8x48xf32> to vector<2x48xf32>
    %c0_108 = arith.constant 0 : index
    %c0_109 = arith.constant 0 : index
    %111 = vector.load %arg9[%c0_108, %c0_109] : memref<16x48xf32, #tpu.memory_space<vmem>>, vector<16x48xf32>
    %cst_110 = arith.constant dense<0.000000e+00> : vector<2x48xf32>
    %112 = tpu.matmul %109, %111, %cst_110 {dimension_numbers = #tpu.dot_dimension_numbers<[1], [0], [0], [1], [0, 0, 1, 1], [], []>} : vector<2x16xf32>, vector<16x48xf32>, vector<2x48xf32> -> vector<2x48xf32>
    %c0_111 = arith.constant 0 : index
    %c0_112 = arith.constant 0 : index
    %113 = vector.load %arg10[%c0_111, %c0_112] : memref<1x48xf32, #tpu.memory_space<vmem>>, vector<1x48xf32>
    %114 = vector.broadcast %113 : vector<1x48xf32> to vector<2x48xf32>
    %115 = arith.addf %112, %114 : vector<2x48xf32>
    %116 = vector.extract_strided_slice %110 {offsets = [0, 0], sizes = [2, 16], strides = [1, 1]} : vector<2x48xf32> to vector<2x16xf32>
    %117 = vector.extract_strided_slice %115 {offsets = [0, 0], sizes = [2, 16], strides = [1, 1]} : vector<2x48xf32> to vector<2x16xf32>
    %118 = arith.addf %116, %117 : vector<2x16xf32>
    %119 = arith.negf %118 : vector<2x16xf32>
    %120 = math.exp %119 : vector<2x16xf32>
    %cst_113 = arith.constant 1.000000e+00 : f32
    %121 = vector.broadcast %cst_113 : f32 to vector<2x16xf32>
    %122 = arith.addf %121, %120 : vector<2x16xf32>
    %123 = arith.divf %121, %122 : vector<2x16xf32>
    %124 = vector.extract_strided_slice %110 {offsets = [0, 16], sizes = [2, 16], strides = [1, 1]} : vector<2x48xf32> to vector<2x16xf32>
    %125 = vector.extract_strided_slice %115 {offsets = [0, 16], sizes = [2, 16], strides = [1, 1]} : vector<2x48xf32> to vector<2x16xf32>
    %126 = arith.addf %124, %125 : vector<2x16xf32>
    %127 = arith.negf %126 : vector<2x16xf32>
    %128 = math.exp %127 : vector<2x16xf32>
    %cst_114 = arith.constant 1.000000e+00 : f32
    %129 = vector.broadcast %cst_114 : f32 to vector<2x16xf32>
    %130 = arith.addf %129, %128 : vector<2x16xf32>
    %131 = arith.divf %129, %130 : vector<2x16xf32>
    %132 = vector.extract_strided_slice %110 {offsets = [0, 32], sizes = [2, 16], strides = [1, 1]} : vector<2x48xf32> to vector<2x16xf32>
    %133 = vector.extract_strided_slice %115 {offsets = [0, 32], sizes = [2, 16], strides = [1, 1]} : vector<2x48xf32> to vector<2x16xf32>
    %134 = arith.mulf %123, %133 : vector<2x16xf32>
    %135 = arith.addf %132, %134 : vector<2x16xf32>
    %136 = math.tanh %135 : vector<2x16xf32>
    %cst_115 = arith.constant 1.000000e+00 : f32
    %137 = vector.broadcast %cst_115 : f32 to vector<2x16xf32>
    %138 = arith.subf %137, %131 : vector<2x16xf32>
    %139 = arith.mulf %138, %136 : vector<2x16xf32>
    %140 = arith.mulf %131, %109 : vector<2x16xf32>
    %141 = arith.addf %139, %140 : vector<2x16xf32>
    %142 = vector.extract_strided_slice %108 {offsets = [2, 0], sizes = [2, 48], strides = [1, 1]} : vector<8x48xf32> to vector<2x48xf32>
    %c0_116 = arith.constant 0 : index
    %c0_117 = arith.constant 0 : index
    %143 = vector.load %arg9[%c0_116, %c0_117] : memref<16x48xf32, #tpu.memory_space<vmem>>, vector<16x48xf32>
    %cst_118 = arith.constant dense<0.000000e+00> : vector<2x48xf32>
    %144 = tpu.matmul %141, %143, %cst_118 {dimension_numbers = #tpu.dot_dimension_numbers<[1], [0], [0], [1], [0, 0, 1, 1], [], []>} : vector<2x16xf32>, vector<16x48xf32>, vector<2x48xf32> -> vector<2x48xf32>
    %c0_119 = arith.constant 0 : index
    %c0_120 = arith.constant 0 : index
    %145 = vector.load %arg10[%c0_119, %c0_120] : memref<1x48xf32, #tpu.memory_space<vmem>>, vector<1x48xf32>
    %146 = vector.broadcast %145 : vector<1x48xf32> to vector<2x48xf32>
    %147 = arith.addf %144, %146 : vector<2x48xf32>
    %148 = vector.extract_strided_slice %142 {offsets = [0, 0], sizes = [2, 16], strides = [1, 1]} : vector<2x48xf32> to vector<2x16xf32>
    %149 = vector.extract_strided_slice %147 {offsets = [0, 0], sizes = [2, 16], strides = [1, 1]} : vector<2x48xf32> to vector<2x16xf32>
    %150 = arith.addf %148, %149 : vector<2x16xf32>
    %151 = arith.negf %150 : vector<2x16xf32>
    %152 = math.exp %151 : vector<2x16xf32>
    %cst_121 = arith.constant 1.000000e+00 : f32
    %153 = vector.broadcast %cst_121 : f32 to vector<2x16xf32>
    %154 = arith.addf %153, %152 : vector<2x16xf32>
    %155 = arith.divf %153, %154 : vector<2x16xf32>
    %156 = vector.extract_strided_slice %142 {offsets = [0, 16], sizes = [2, 16], strides = [1, 1]} : vector<2x48xf32> to vector<2x16xf32>
    %157 = vector.extract_strided_slice %147 {offsets = [0, 16], sizes = [2, 16], strides = [1, 1]} : vector<2x48xf32> to vector<2x16xf32>
    %158 = arith.addf %156, %157 : vector<2x16xf32>
    %159 = arith.negf %158 : vector<2x16xf32>
    %160 = math.exp %159 : vector<2x16xf32>
    %cst_122 = arith.constant 1.000000e+00 : f32
    %161 = vector.broadcast %cst_122 : f32 to vector<2x16xf32>
    %162 = arith.addf %161, %160 : vector<2x16xf32>
    %163 = arith.divf %161, %162 : vector<2x16xf32>
    %164 = vector.extract_strided_slice %142 {offsets = [0, 32], sizes = [2, 16], strides = [1, 1]} : vector<2x48xf32> to vector<2x16xf32>
    %165 = vector.extract_strided_slice %147 {offsets = [0, 32], sizes = [2, 16], strides = [1, 1]} : vector<2x48xf32> to vector<2x16xf32>
    %166 = arith.mulf %155, %165 : vector<2x16xf32>
    %167 = arith.addf %164, %166 : vector<2x16xf32>
    %168 = math.tanh %167 : vector<2x16xf32>
    %cst_123 = arith.constant 1.000000e+00 : f32
    %169 = vector.broadcast %cst_123 : f32 to vector<2x16xf32>
    %170 = arith.subf %169, %163 : vector<2x16xf32>
    %171 = arith.mulf %170, %168 : vector<2x16xf32>
    %172 = arith.mulf %163, %141 : vector<2x16xf32>
    %173 = arith.addf %171, %172 : vector<2x16xf32>
    %174 = vector.extract_strided_slice %108 {offsets = [4, 0], sizes = [2, 48], strides = [1, 1]} : vector<8x48xf32> to vector<2x48xf32>
    %c0_124 = arith.constant 0 : index
    %c0_125 = arith.constant 0 : index
    %175 = vector.load %arg9[%c0_124, %c0_125] : memref<16x48xf32, #tpu.memory_space<vmem>>, vector<16x48xf32>
    %cst_126 = arith.constant dense<0.000000e+00> : vector<2x48xf32>
    %176 = tpu.matmul %173, %175, %cst_126 {dimension_numbers = #tpu.dot_dimension_numbers<[1], [0], [0], [1], [0, 0, 1, 1], [], []>} : vector<2x16xf32>, vector<16x48xf32>, vector<2x48xf32> -> vector<2x48xf32>
    %c0_127 = arith.constant 0 : index
    %c0_128 = arith.constant 0 : index
    %177 = vector.load %arg10[%c0_127, %c0_128] : memref<1x48xf32, #tpu.memory_space<vmem>>, vector<1x48xf32>
    %178 = vector.broadcast %177 : vector<1x48xf32> to vector<2x48xf32>
    %179 = arith.addf %176, %178 : vector<2x48xf32>
    %180 = vector.extract_strided_slice %174 {offsets = [0, 0], sizes = [2, 16], strides = [1, 1]} : vector<2x48xf32> to vector<2x16xf32>
    %181 = vector.extract_strided_slice %179 {offsets = [0, 0], sizes = [2, 16], strides = [1, 1]} : vector<2x48xf32> to vector<2x16xf32>
    %182 = arith.addf %180, %181 : vector<2x16xf32>
    %183 = arith.negf %182 : vector<2x16xf32>
    %184 = math.exp %183 : vector<2x16xf32>
    %cst_129 = arith.constant 1.000000e+00 : f32
    %185 = vector.broadcast %cst_129 : f32 to vector<2x16xf32>
    %186 = arith.addf %185, %184 : vector<2x16xf32>
    %187 = arith.divf %185, %186 : vector<2x16xf32>
    %188 = vector.extract_strided_slice %174 {offsets = [0, 16], sizes = [2, 16], strides = [1, 1]} : vector<2x48xf32> to vector<2x16xf32>
    %189 = vector.extract_strided_slice %179 {offsets = [0, 16], sizes = [2, 16], strides = [1, 1]} : vector<2x48xf32> to vector<2x16xf32>
    %190 = arith.addf %188, %189 : vector<2x16xf32>
    %191 = arith.negf %190 : vector<2x16xf32>
    %192 = math.exp %191 : vector<2x16xf32>
    %cst_130 = arith.constant 1.000000e+00 : f32
    %193 = vector.broadcast %cst_130 : f32 to vector<2x16xf32>
    %194 = arith.addf %193, %192 : vector<2x16xf32>
    %195 = arith.divf %193, %194 : vector<2x16xf32>
    %196 = vector.extract_strided_slice %174 {offsets = [0, 32], sizes = [2, 16], strides = [1, 1]} : vector<2x48xf32> to vector<2x16xf32>
    %197 = vector.extract_strided_slice %179 {offsets = [0, 32], sizes = [2, 16], strides = [1, 1]} : vector<2x48xf32> to vector<2x16xf32>
    %198 = arith.mulf %187, %197 : vector<2x16xf32>
    %199 = arith.addf %196, %198 : vector<2x16xf32>
    %200 = math.tanh %199 : vector<2x16xf32>
    %cst_131 = arith.constant 1.000000e+00 : f32
    %201 = vector.broadcast %cst_131 : f32 to vector<2x16xf32>
    %202 = arith.subf %201, %195 : vector<2x16xf32>
    %203 = arith.mulf %202, %200 : vector<2x16xf32>
    %204 = arith.mulf %195, %173 : vector<2x16xf32>
    %205 = arith.addf %203, %204 : vector<2x16xf32>
    %206 = vector.extract_strided_slice %108 {offsets = [6, 0], sizes = [2, 48], strides = [1, 1]} : vector<8x48xf32> to vector<2x48xf32>
    %c0_132 = arith.constant 0 : index
    %c0_133 = arith.constant 0 : index
    %207 = vector.load %arg9[%c0_132, %c0_133] : memref<16x48xf32, #tpu.memory_space<vmem>>, vector<16x48xf32>
    %cst_134 = arith.constant dense<0.000000e+00> : vector<2x48xf32>
    %208 = tpu.matmul %205, %207, %cst_134 {dimension_numbers = #tpu.dot_dimension_numbers<[1], [0], [0], [1], [0, 0, 1, 1], [], []>} : vector<2x16xf32>, vector<16x48xf32>, vector<2x48xf32> -> vector<2x48xf32>
    %c0_135 = arith.constant 0 : index
    %c0_136 = arith.constant 0 : index
    %209 = vector.load %arg10[%c0_135, %c0_136] : memref<1x48xf32, #tpu.memory_space<vmem>>, vector<1x48xf32>
    %210 = vector.broadcast %209 : vector<1x48xf32> to vector<2x48xf32>
    %211 = arith.addf %208, %210 : vector<2x48xf32>
    %212 = vector.extract_strided_slice %206 {offsets = [0, 0], sizes = [2, 16], strides = [1, 1]} : vector<2x48xf32> to vector<2x16xf32>
    %213 = vector.extract_strided_slice %211 {offsets = [0, 0], sizes = [2, 16], strides = [1, 1]} : vector<2x48xf32> to vector<2x16xf32>
    %214 = arith.addf %212, %213 : vector<2x16xf32>
    %215 = arith.negf %214 : vector<2x16xf32>
    %216 = math.exp %215 : vector<2x16xf32>
    %cst_137 = arith.constant 1.000000e+00 : f32
    %217 = vector.broadcast %cst_137 : f32 to vector<2x16xf32>
    %218 = arith.addf %217, %216 : vector<2x16xf32>
    %219 = arith.divf %217, %218 : vector<2x16xf32>
    %220 = vector.extract_strided_slice %206 {offsets = [0, 16], sizes = [2, 16], strides = [1, 1]} : vector<2x48xf32> to vector<2x16xf32>
    %221 = vector.extract_strided_slice %211 {offsets = [0, 16], sizes = [2, 16], strides = [1, 1]} : vector<2x48xf32> to vector<2x16xf32>
    %222 = arith.addf %220, %221 : vector<2x16xf32>
    %223 = arith.negf %222 : vector<2x16xf32>
    %224 = math.exp %223 : vector<2x16xf32>
    %cst_138 = arith.constant 1.000000e+00 : f32
    %225 = vector.broadcast %cst_138 : f32 to vector<2x16xf32>
    %226 = arith.addf %225, %224 : vector<2x16xf32>
    %227 = arith.divf %225, %226 : vector<2x16xf32>
    %228 = vector.extract_strided_slice %206 {offsets = [0, 32], sizes = [2, 16], strides = [1, 1]} : vector<2x48xf32> to vector<2x16xf32>
    %229 = vector.extract_strided_slice %211 {offsets = [0, 32], sizes = [2, 16], strides = [1, 1]} : vector<2x48xf32> to vector<2x16xf32>
    %230 = arith.mulf %219, %229 : vector<2x16xf32>
    %231 = arith.addf %228, %230 : vector<2x16xf32>
    %232 = math.tanh %231 : vector<2x16xf32>
    %cst_139 = arith.constant 1.000000e+00 : f32
    %233 = vector.broadcast %cst_139 : f32 to vector<2x16xf32>
    %234 = arith.subf %233, %227 : vector<2x16xf32>
    %235 = arith.mulf %234, %232 : vector<2x16xf32>
    %236 = arith.mulf %227, %205 : vector<2x16xf32>
    %237 = arith.addf %235, %236 : vector<2x16xf32>
    %c0_140 = arith.constant 0 : index
    %c0_141 = arith.constant 0 : index
    %238 = vector.load %arg11[%c0_140, %c0_141] : memref<10x8xf32, #tpu.memory_space<vmem>>, vector<10x8xf32>
    %239 = math.tanh %238 : vector<10x8xf32>
    %c0_142 = arith.constant 0 : index
    %c0_143 = arith.constant 0 : index
    %240 = vector.load %arg12[%c0_142, %c0_143] : memref<16x32xf32, #tpu.memory_space<vmem>>, vector<16x32xf32>
    %cst_144 = arith.constant dense<0.000000e+00> : vector<2x32xf32>
    %241 = tpu.matmul %237, %240, %cst_144 {dimension_numbers = #tpu.dot_dimension_numbers<[1], [0], [0], [1], [0, 0, 1, 1], [], []>} : vector<2x16xf32>, vector<16x32xf32>, vector<2x32xf32> -> vector<2x32xf32>
    %c0_145 = arith.constant 0 : index
    %c0_146 = arith.constant 0 : index
    %242 = vector.load %arg13[%c0_145, %c0_146] : memref<8x32xf32, #tpu.memory_space<vmem>>, vector<8x32xf32>
    %cst_147 = arith.constant dense<0.000000e+00> : vector<10x32xf32>
    %243 = tpu.matmul %239, %242, %cst_147 {dimension_numbers = #tpu.dot_dimension_numbers<[1], [0], [0], [1], [0, 0, 1, 1], [], []>} : vector<10x8xf32>, vector<8x32xf32>, vector<10x32xf32> -> vector<10x32xf32>
    %c0_148 = arith.constant 0 : index
    %c0_149 = arith.constant 0 : index
    %244 = vector.load %arg14[%c0_148, %c0_149] : memref<8x32xf32, #tpu.memory_space<vmem>>, vector<8x32xf32>
    %cst_150 = arith.constant dense<0.000000e+00> : vector<10x32xf32>
    %245 = tpu.matmul %239, %244, %cst_150 {dimension_numbers = #tpu.dot_dimension_numbers<[1], [0], [0], [1], [0, 0, 1, 1], [], []>} : vector<10x8xf32>, vector<8x32xf32>, vector<10x32xf32> -> vector<10x32xf32>
    %246 = vector.extract_strided_slice %241 {offsets = [0, 0], sizes = [2, 8], strides = [1, 1]} : vector<2x32xf32> to vector<2x8xf32>
    %247 = vector.extract_strided_slice %243 {offsets = [0, 0], sizes = [10, 8], strides = [1, 1]} : vector<10x32xf32> to vector<10x8xf32>
    %248 = vector.extract_strided_slice %245 {offsets = [0, 0], sizes = [10, 8], strides = [1, 1]} : vector<10x32xf32> to vector<10x8xf32>
    %249 = tpu.transpose %247, [1, 0] : vector<10x8xf32> -> vector<8x10xf32>
    %cst_151 = arith.constant dense<0.000000e+00> : vector<2x10xf32>
    %250 = tpu.matmul %246, %249, %cst_151 {dimension_numbers = #tpu.dot_dimension_numbers<[1], [0], [0], [1], [0, 0, 1, 1], [], []>} : vector<2x8xf32>, vector<8x10xf32>, vector<2x10xf32> -> vector<2x10xf32>
    %cst_152 = arith.constant 0.353553385 : f32
    %251 = vector.broadcast %cst_152 : f32 to vector<2x10xf32>
    %252 = arith.mulf %250, %251 : vector<2x10xf32>
    %cst_153 = arith.constant dense<0xFF800000> : vector<2xf32>
    %253 = vector.multi_reduction <maximumf>, %252, %cst_153 [1] : vector<2x10xf32> to vector<2xf32>
    %254 = vector.shape_cast %253 : vector<2xf32> to vector<2x1xf32>
    %255 = vector.broadcast %254 : vector<2x1xf32> to vector<2x10xf32>
    %256 = arith.subf %252, %255 : vector<2x10xf32>
    %257 = math.exp %256 : vector<2x10xf32>
    %cst_154 = arith.constant dense<0.000000e+00> : vector<2xf32>
    %258 = vector.multi_reduction <add>, %257, %cst_154 [1] : vector<2x10xf32> to vector<2xf32>
    %259 = vector.shape_cast %258 : vector<2xf32> to vector<2x1xf32>
    %260 = tpu.reciprocal %259 {approx = true} : vector<2x1xf32> -> vector<2x1xf32>
    %261 = vector.broadcast %260 : vector<2x1xf32> to vector<2x10xf32>
    %262 = arith.mulf %257, %261 : vector<2x10xf32>
    %cst_155 = arith.constant dense<0.000000e+00> : vector<2x8xf32>
    %263 = tpu.matmul %262, %248, %cst_155 {dimension_numbers = #tpu.dot_dimension_numbers<[1], [0], [0], [1], [0, 0, 1, 1], [], []>} : vector<2x10xf32>, vector<10x8xf32>, vector<2x8xf32> -> vector<2x8xf32>
    %c0_156 = arith.constant 0 : index
    %c0_157 = arith.constant 0 : index
    %c0_158 = arith.constant 0 : index
    %264 = vector.load %arg15[%c0_156, %c0_157, %c0_158] : memref<4x2x8xf32, #tpu.memory_space<vmem>>, vector<1x2x8xf32>
    %265 = vector.shape_cast %264 : vector<1x2x8xf32> to vector<2x8xf32>
    %266 = vector.shape_cast %263 : vector<2x8xf32> to vector<1x2x8xf32>
    tpu.vector_store %arg15[%c0_156, %c0_157, %c0_158], %266 {strides = array<i32>} : memref<4x2x8xf32, #tpu.memory_space<vmem>>, vector<1x2x8xf32>,
    %267 = vector.extract_strided_slice %241 {offsets = [0, 8], sizes = [2, 8], strides = [1, 1]} : vector<2x32xf32> to vector<2x8xf32>
    %268 = vector.extract_strided_slice %243 {offsets = [0, 8], sizes = [10, 8], strides = [1, 1]} : vector<10x32xf32> to vector<10x8xf32>
    %269 = vector.extract_strided_slice %245 {offsets = [0, 8], sizes = [10, 8], strides = [1, 1]} : vector<10x32xf32> to vector<10x8xf32>
    %270 = tpu.transpose %268, [1, 0] : vector<10x8xf32> -> vector<8x10xf32>
    %cst_159 = arith.constant dense<0.000000e+00> : vector<2x10xf32>
    %271 = tpu.matmul %267, %270, %cst_159 {dimension_numbers = #tpu.dot_dimension_numbers<[1], [0], [0], [1], [0, 0, 1, 1], [], []>} : vector<2x8xf32>, vector<8x10xf32>, vector<2x10xf32> -> vector<2x10xf32>
    %cst_160 = arith.constant 0.353553385 : f32
    %272 = vector.broadcast %cst_160 : f32 to vector<2x10xf32>
    %273 = arith.mulf %271, %272 : vector<2x10xf32>
    %cst_161 = arith.constant dense<0xFF800000> : vector<2xf32>
    %274 = vector.multi_reduction <maximumf>, %273, %cst_161 [1] : vector<2x10xf32> to vector<2xf32>
    %275 = vector.shape_cast %274 : vector<2xf32> to vector<2x1xf32>
    %276 = vector.broadcast %275 : vector<2x1xf32> to vector<2x10xf32>
    %277 = arith.subf %273, %276 : vector<2x10xf32>
    %278 = math.exp %277 : vector<2x10xf32>
    %cst_162 = arith.constant dense<0.000000e+00> : vector<2xf32>
    %279 = vector.multi_reduction <add>, %278, %cst_162 [1] : vector<2x10xf32> to vector<2xf32>
    %280 = vector.shape_cast %279 : vector<2xf32> to vector<2x1xf32>
    %281 = tpu.reciprocal %280 {approx = true} : vector<2x1xf32> -> vector<2x1xf32>
    %282 = vector.broadcast %281 : vector<2x1xf32> to vector<2x10xf32>
    %283 = arith.mulf %278, %282 : vector<2x10xf32>
    %cst_163 = arith.constant dense<0.000000e+00> : vector<2x8xf32>
    %284 = tpu.matmul %283, %269, %cst_163 {dimension_numbers = #tpu.dot_dimension_numbers<[1], [0], [0], [1], [0, 0, 1, 1], [], []>} : vector<2x10xf32>, vector<10x8xf32>, vector<2x8xf32> -> vector<2x8xf32>
    %c1_164 = arith.constant 1 : index
    %c0_165 = arith.constant 0 : index
    %c0_166 = arith.constant 0 : index
    %285 = vector.load %arg15[%c1_164, %c0_165, %c0_166] : memref<4x2x8xf32, #tpu.memory_space<vmem>>, vector<1x2x8xf32>
    %286 = vector.shape_cast %285 : vector<1x2x8xf32> to vector<2x8xf32>
    %287 = vector.shape_cast %284 : vector<2x8xf32> to vector<1x2x8xf32>
    tpu.vector_store %arg15[%c1_164, %c0_165, %c0_166], %287 {strides = array<i32>} : memref<4x2x8xf32, #tpu.memory_space<vmem>>, vector<1x2x8xf32>,
    %288 = vector.extract_strided_slice %241 {offsets = [0, 16], sizes = [2, 8], strides = [1, 1]} : vector<2x32xf32> to vector<2x8xf32>
    %289 = vector.extract_strided_slice %243 {offsets = [0, 16], sizes = [10, 8], strides = [1, 1]} : vector<10x32xf32> to vector<10x8xf32>
    %290 = vector.extract_strided_slice %245 {offsets = [0, 16], sizes = [10, 8], strides = [1, 1]} : vector<10x32xf32> to vector<10x8xf32>
    %291 = tpu.transpose %289, [1, 0] : vector<10x8xf32> -> vector<8x10xf32>
    %cst_167 = arith.constant dense<0.000000e+00> : vector<2x10xf32>
    %292 = tpu.matmul %288, %291, %cst_167 {dimension_numbers = #tpu.dot_dimension_numbers<[1], [0], [0], [1], [0, 0, 1, 1], [], []>} : vector<2x8xf32>, vector<8x10xf32>, vector<2x10xf32> -> vector<2x10xf32>
    %cst_168 = arith.constant 0.353553385 : f32
    %293 = vector.broadcast %cst_168 : f32 to vector<2x10xf32>
    %294 = arith.mulf %292, %293 : vector<2x10xf32>
    %cst_169 = arith.constant dense<0xFF800000> : vector<2xf32>
    %295 = vector.multi_reduction <maximumf>, %294, %cst_169 [1] : vector<2x10xf32> to vector<2xf32>
    %296 = vector.shape_cast %295 : vector<2xf32> to vector<2x1xf32>
    %297 = vector.broadcast %296 : vector<2x1xf32> to vector<2x10xf32>
    %298 = arith.subf %294, %297 : vector<2x10xf32>
    %299 = math.exp %298 : vector<2x10xf32>
    %cst_170 = arith.constant dense<0.000000e+00> : vector<2xf32>
    %300 = vector.multi_reduction <add>, %299, %cst_170 [1] : vector<2x10xf32> to vector<2xf32>
    %301 = vector.shape_cast %300 : vector<2xf32> to vector<2x1xf32>
    %302 = tpu.reciprocal %301 {approx = true} : vector<2x1xf32> -> vector<2x1xf32>
    %303 = vector.broadcast %302 : vector<2x1xf32> to vector<2x10xf32>
    %304 = arith.mulf %299, %303 : vector<2x10xf32>
    %cst_171 = arith.constant dense<0.000000e+00> : vector<2x8xf32>
    %305 = tpu.matmul %304, %290, %cst_171 {dimension_numbers = #tpu.dot_dimension_numbers<[1], [0], [0], [1], [0, 0, 1, 1], [], []>} : vector<2x10xf32>, vector<10x8xf32>, vector<2x8xf32> -> vector<2x8xf32>
    %c2_172 = arith.constant 2 : index
    %c0_173 = arith.constant 0 : index
    %c0_174 = arith.constant 0 : index
    %306 = vector.load %arg15[%c2_172, %c0_173, %c0_174] : memref<4x2x8xf32, #tpu.memory_space<vmem>>, vector<1x2x8xf32>
    %307 = vector.shape_cast %306 : vector<1x2x8xf32> to vector<2x8xf32>
    %308 = vector.shape_cast %305 : vector<2x8xf32> to vector<1x2x8xf32>
    tpu.vector_store %arg15[%c2_172, %c0_173, %c0_174], %308 {strides = array<i32>} : memref<4x2x8xf32, #tpu.memory_space<vmem>>, vector<1x2x8xf32>,
    %309 = vector.extract_strided_slice %241 {offsets = [0, 24], sizes = [2, 8], strides = [1, 1]} : vector<2x32xf32> to vector<2x8xf32>
    %310 = vector.extract_strided_slice %243 {offsets = [0, 24], sizes = [10, 8], strides = [1, 1]} : vector<10x32xf32> to vector<10x8xf32>
    %311 = vector.extract_strided_slice %245 {offsets = [0, 24], sizes = [10, 8], strides = [1, 1]} : vector<10x32xf32> to vector<10x8xf32>
    %312 = tpu.transpose %310, [1, 0] : vector<10x8xf32> -> vector<8x10xf32>
    %cst_175 = arith.constant dense<0.000000e+00> : vector<2x10xf32>
    %313 = tpu.matmul %309, %312, %cst_175 {dimension_numbers = #tpu.dot_dimension_numbers<[1], [0], [0], [1], [0, 0, 1, 1], [], []>} : vector<2x8xf32>, vector<8x10xf32>, vector<2x10xf32> -> vector<2x10xf32>
    %cst_176 = arith.constant 0.353553385 : f32
    %314 = vector.broadcast %cst_176 : f32 to vector<2x10xf32>
    %315 = arith.mulf %313, %314 : vector<2x10xf32>
    %cst_177 = arith.constant dense<0xFF800000> : vector<2xf32>
    %316 = vector.multi_reduction <maximumf>, %315, %cst_177 [1] : vector<2x10xf32> to vector<2xf32>
    %317 = vector.shape_cast %316 : vector<2xf32> to vector<2x1xf32>
    %318 = vector.broadcast %317 : vector<2x1xf32> to vector<2x10xf32>
    %319 = arith.subf %315, %318 : vector<2x10xf32>
    %320 = math.exp %319 : vector<2x10xf32>
    %cst_178 = arith.constant dense<0.000000e+00> : vector<2xf32>
    %321 = vector.multi_reduction <add>, %320, %cst_178 [1] : vector<2x10xf32> to vector<2xf32>
    %322 = vector.shape_cast %321 : vector<2xf32> to vector<2x1xf32>
    %323 = tpu.reciprocal %322 {approx = true} : vector<2x1xf32> -> vector<2x1xf32>
    %324 = vector.broadcast %323 : vector<2x1xf32> to vector<2x10xf32>
    %325 = arith.mulf %320, %324 : vector<2x10xf32>
    %cst_179 = arith.constant dense<0.000000e+00> : vector<2x8xf32>
    %326 = tpu.matmul %325, %311, %cst_179 {dimension_numbers = #tpu.dot_dimension_numbers<[1], [0], [0], [1], [0, 0, 1, 1], [], []>} : vector<2x10xf32>, vector<10x8xf32>, vector<2x8xf32> -> vector<2x8xf32>
    %c3_180 = arith.constant 3 : index
    %c0_181 = arith.constant 0 : index
    %c0_182 = arith.constant 0 : index
    %327 = vector.load %arg15[%c3_180, %c0_181, %c0_182] : memref<4x2x8xf32, #tpu.memory_space<vmem>>, vector<1x2x8xf32>
    %328 = vector.shape_cast %327 : vector<1x2x8xf32> to vector<2x8xf32>
    %329 = vector.shape_cast %326 : vector<2x8xf32> to vector<1x2x8xf32>
    tpu.vector_store %arg15[%c3_180, %c0_181, %c0_182], %329 {strides = array<i32>} : memref<4x2x8xf32, #tpu.memory_space<vmem>>, vector<1x2x8xf32>,
    return
  }
}

</mosaic_0001>

<llo_original>
// kernel: gst_forward.1
$region0: #{gst_forward.1}
  #allocation0 [shape = 'u32[]', space=smem, size = 0x4, offset = 0x4, fixed_abs, tag = 'smem constant byte address 0x4 - core index']
  #allocation1 [shape = 'u32[144,128]{1,0:T(1,128)}', space=vmem, size = 0x12000, scoped, tag = 'internal scratch']
  %s0 = inlined_call_operand.vmem [shape: f32[9,128], index: 0, kind: input, shape index: {}]
  %s1 = inlined_call_operand.vmem [shape: f32[4,9], index: 1, kind: input, shape index: {}]
  %s2 = inlined_call_operand.vmem [shape: f32[4,1], index: 2, kind: input, shape index: {}]
  %s3 = inlined_call_operand.vmem [shape: f32[9,128,32], index: 3, kind: input, shape index: {}]
  %s4 = inlined_call_operand.vmem [shape: f32[9,8,4], index: 4, kind: input, shape index: {}]
  %s5 = inlined_call_operand.vmem [shape: f32[8,1], index: 5, kind: input, shape index: {}]
  %s6 = inlined_call_operand.vmem [shape: f32[4,32,8], index: 6, kind: input, shape index: {}]
  %s7 = inlined_call_operand.vmem [shape: f32[4,8,48], index: 7, kind: input, shape index: {}]
  %s8 = inlined_call_operand.vmem [shape: f32[1,48], index: 8, kind: input, shape index: {}]
  %s9 = inlined_call_operand.vmem [shape: f32[16,48], index: 9, kind: input, shape index: {}]
  %s10 = inlined_call_operand.vmem [shape: f32[1,48], index: 10, kind: input, shape index: {}]
  %s11 = inlined_call_operand.vmem [shape: f32[10,8], index: 11, kind: input, shape index: {}]
  %s12 = inlined_call_operand.vmem [shape: f32[16,32], index: 12, kind: input, shape index: {}]
  %s13 = inlined_call_operand.vmem [shape: f32[8,32], index: 13, kind: input, shape index: {}]
  %s14 = inlined_call_operand.vmem [shape: f32[8,32], index: 14, kind: input, shape index: {}]
  %s15 = inlined_call_operand.vmem [shape: f32[4,2,8], index: 15, kind: output, shape index: {}]
  %s16 = sld [smem:[#allocation0]]
  $region70: #{gst_forward.1} parent=0
    _
  %s18 = ssub.s32 1, %s16
  %s19 = scalar_select 0, %s18, %s16
  // Predicated region
  $region2: #{gst_forward.1} parent=0 // pred_check
    _
  $region3: #{gst_forward.1} parent=0 // pred_check_branch
    %21 = sbr.rel (0) target = $region5
  $region4: #{gst_forward.1} parent=0 // pred_region
    _
  $region5: #{gst_forward.1} parent=0 // pred_fallthru
    _
  // Predicated region
  $region6: #{gst_forward.1} parent=0 // pred_check
    _
  $region7: #{gst_forward.1} parent=0 // pred_check_branch
    %23 = sbr.rel (0) target = $region9
  $region8: #{gst_forward.1} parent=0 // pred_region
    _
  $region9: #{gst_forward.1} parent=0 // pred_fallthru
    _
  // Predicated region
  $region10: #{gst_forward.1} parent=0 // pred_check
    _
  $region11: #{gst_forward.1} parent=0 // pred_check_branch
    %25 = sbr.rel (0) target = $region13
  $region12: #{gst_forward.1} parent=0 // pred_region
    _
  $region13: #{gst_forward.1} parent=0 // pred_fallthru
    _
  // Predicated region
  $region14: #{gst_forward.1} parent=0 // pred_check
    _
  $region15: #{gst_forward.1} parent=0 // pred_check_branch
    %27 = sbr.rel (0) target = $region17
  $region16: #{gst_forward.1} parent=0 // pred_region
    _
  $region17: #{gst_forward.1} parent=0 // pred_fallthru
    _
  // Predicated region
  $region18: #{gst_forward.1} parent=0 // pred_check
    _
  $region19: #{gst_forward.1} parent=0 // pred_check_branch
    %29 = sbr.rel (0) target = $region21
  $region20: #{gst_forward.1} parent=0 // pred_region
    _
  $region21: #{gst_forward.1} parent=0 // pred_fallthru
    _
  // Predicated region
  $region22: #{gst_forward.1} parent=0 // pred_check
    _
  $region23: #{gst_forward.1} parent=0 // pred_check_branch
    %31 = sbr.rel (0) target = $region25
  $region24: #{gst_forward.1} parent=0 // pred_region
    _
  $region25: #{gst_forward.1} parent=0 // pred_fallthru
    _
  // Predicated region
  $region26: #{gst_forward.1} parent=0 // pred_check
    _
  $region27: #{gst_forward.1} parent=0 // pred_check_branch
    %33 = sbr.rel (0) target = $region29
  $region28: #{gst_forward.1} parent=0 // pred_region
    _
  $region29: #{gst_forward.1} parent=0 // pred_fallthru
    _
  // Predicated region
  $region30: #{gst_forward.1} parent=0 // pred_check
    _
  $region31: #{gst_forward.1} parent=0 // pred_check_branch
    %35 = sbr.rel (0) target = $region33
  $region32: #{gst_forward.1} parent=0 // pred_region
    _
  $region33: #{gst_forward.1} parent=0 // pred_fallthru
    _
  // Predicated region
  $region34: #{gst_forward.1} parent=0 // pred_check
    _
  $region35: #{gst_forward.1} parent=0 // pred_check_branch
    %37 = sbr.rel (0) target = $region37
  $region36: #{gst_forward.1} parent=0 // pred_region
    _
  $region37: #{gst_forward.1} parent=0 // pred_fallthru
    _
  // Predicated region
  $region38: #{gst_forward.1} parent=0 // pred_check
    _
  $region39: #{gst_forward.1} parent=0 // pred_check_branch
    %39 = sbr.rel (0) target = $region41
  $region40: #{gst_forward.1} parent=0 // pred_region
    _
  $region41: #{gst_forward.1} parent=0 // pred_fallthru
    _
  // Predicated region
  $region42: #{gst_forward.1} parent=0 // pred_check
    _
  $region43: #{gst_forward.1} parent=0 // pred_check_branch
    %41 = sbr.rel (0) target = $region45
  $region44: #{gst_forward.1} parent=0 // pred_region
    _
  $region45: #{gst_forward.1} parent=0 // pred_fallthru
    _
  // Predicated region
  $region46: #{gst_forward.1} parent=0 // pred_check
    _
  $region47: #{gst_forward.1} parent=0 // pred_check_branch
    %43 = sbr.rel (0) target = $region49
  $region48: #{gst_forward.1} parent=0 // pred_region
    _
  $region49: #{gst_forward.1} parent=0 // pred_fallthru
    _
  // Predicated region
  $region50: #{gst_forward.1} parent=0 // pred_check
    _
  $region51: #{gst_forward.1} parent=0 // pred_check_branch
    %45 = sbr.rel (0) target = $region53
  $region52: #{gst_forward.1} parent=0 // pred_region
    _
  $region53: #{gst_forward.1} parent=0 // pred_fallthru
    _
  // Predicated region
  $region54: #{gst_forward.1} parent=0 // pred_check
    _
  $region55: #{gst_forward.1} parent=0 // pred_check_branch
    %47 = sbr.rel (0) target = $region57
  $region56: #{gst_forward.1} parent=0 // pred_region
    _
  $region57: #{gst_forward.1} parent=0 // pred_fallthru
    _
  // Predicated region
  $region58: #{gst_forward.1} parent=0 // pred_check
    _
  $region59: #{gst_forward.1} parent=0 // pred_check_branch
    %49 = sbr.rel (0) target = $region61
  $region60: #{gst_forward.1} parent=0 // pred_region
    _
  $region61: #{gst_forward.1} parent=0 // pred_fallthru
    _
  %v50 = vld [vmem:[%s1] sm:$0xf]
  %v51 = vld [vmem:[%s0] sm:$0xff]
  %v52 = vld [vmem:[%s0 + $0x8] sm:$0x1]
  %v53 = vld [vmem:[%s2] sm:$0xf]
  %55 = vset.pattern.permute.xlu0 0
  %56 = vperm.xlu0 %55, %v53
  %v57 = vpop.permute.xlu0 %56
  %vm59 = vcmask 72704
  %v61 = vsel %vm59, %v50, 0
  %vm63 = vcmask 1040384
  %v65 = vsel %vm63, %v52, 0
  %67 = vmatprep.subr.mxu0 0.0
  %68 = vmatpush1.msra.mxu0 %v51
  %69 = vmatprep.subr.mxu0 0.0
  %70 = vmatpush1.msra.mxu0 %v65
  %71 = vmatprep.subr.mxu0 0.0
  %72 = vmatpush1.msra.mxu0 0.0
  %73 = vmatprep.subr.mxu0 0.0
  %74 = vmatpush1.msra.mxu0 0.0
  %75 = vmatprep.subr.mxu0 0.0
  %76 = vmatpush1.msra.mxu0 0.0
  %77 = vmatprep.subr.mxu0 0.0
  %78 = vmatpush1.msra.mxu0 0.0
  %79 = vmatprep.subr.mxu0 0.0
  %80 = vmatpush1.msra.mxu0 0.0
  %81 = vmatprep.subr.mxu0 0.0
  %82 = vmatpush1.msra.mxu0 0.0
  %83 = vmatprep.subr.mxu0 0.0
  %84 = vmatpush1.msra.mxu0 0.0
  %85 = vmatprep.subr.mxu0 0.0
  %86 = vmatpush1.msra.mxu0 0.0
  %87 = vmatprep.subr.mxu0 0.0
  %88 = vmatpush1.msra.mxu0 0.0
  %89 = vmatprep.subr.mxu0 0.0
  %90 = vmatpush1.msra.mxu0 0.0
  %91 = vmatprep.subr.mxu0 0.0
  %92 = vmatpush1.msra.mxu0 0.0
  %93 = vmatprep.subr.mxu0 0.0
  %94 = vmatpush1.msra.mxu0 0.0
  %95 = vmatprep.subr.mxu0 0.0
  %96 = vmatpush1.msra.mxu0 0.0
  %97 = vmatprep.subr.mxu0 0.0
  %98 = vmatpush1.msra.mxu0 0.0
  %99 = vmatprep.subr.mxu0 0.0
  %100 = vmatpush1.msra.mxu0 0.0
  %101 = vmatprep.subr.mxu0 0.0
  %102 = vmatpush1.msra.mxu0 0.0
  %103 = vmatprep.subr.mxu0 0.0
  %104 = vmatpush1.msra.mxu0 0.0
  %105 = vmatprep.subr.mxu0 0.0
  %106 = vmatpush1.msra.mxu0 0.0
  %107 = vmatprep.subr.mxu0 0.0
  %108 = vmatpush1.msra.mxu0 0.0
  %109 = vmatprep.subr.mxu0 0.0
  %110 = vmatpush1.msra.mxu0 0.0
  %111 = vmatprep.subr.mxu0 0.0
  %112 = vmatpush1.msra.mxu0 0.0
  %113 = vmatprep.subr.mxu0 0.0
  %114 = vmatpush1.msra.mxu0 0.0
  %115 = vmatprep.subr.mxu0 0.0
  %116 = vmatpush1.msra.mxu0 0.0
  %117 = vmatprep.subr.mxu0 0.0
  %118 = vmatpush1.msra.mxu0 0.0
  %119 = vmatprep.subr.mxu0 0.0
  %120 = vmatpush1.msra.mxu0 0.0
  %121 = vmatprep.subr.mxu0 0.0
  %122 = vmatpush1.msra.mxu0 0.0
  %123 = vmatprep.subr.mxu0 0.0
  %124 = vmatpush1.msra.mxu0 0.0
  %125 = vmatprep.subr.mxu0 0.0
  %126 = vmatpush1.msra.mxu0 0.0
  %127 = vmatprep.subr.mxu0 0.0
  %128 = vmatpush1.msra.mxu0 0.0
  %129 = vmatprep.subr.mxu0 0.0
  %130 = vmatpush1.msra.mxu0 0.0
  %131 = vmatprep.mubr.f32.mxu0 0.0
  %132 = vmatmul.mubr.f32.gmra.mrb[0].mxu0 %v61
  %v133 = vpop.f32.mrb[0].mxu0
  %v134 = vadd.f32 %v57, %v133
  %v135 = vpop.f32.mrb[0].mxu0
  %136 = vdwg.mxu0
  %v137 = vmax.f32 %v134, 0.0
  %v138 = vld [vmem:[%s5] sm:$0xff]
  %v139 = vld [vmem:[%s3] sm:$0xff]
  %v140 = vld [vmem:[%s3 + $0x8] sm:$0xff]
  %v141 = vld [vmem:[%s3 + $0x10] sm:$0xff]
  %v142 = vld [vmem:[%s3 + $0x18] sm:$0xff]
  %v143 = vld [vmem:[%s3 + $0x20] sm:$0xff]
  %v144 = vld [vmem:[%s3 + $0x28] sm:$0xff]
  %v145 = vld [vmem:[%s3 + $0x30] sm:$0xff]
  %v146 = vld [vmem:[%s3 + $0x38] sm:$0xff]
  %v147 = vld [vmem:[%s3 + $0x40] sm:$0xff]
  %v148 = vld [vmem:[%s3 + $0x48] sm:$0xff]
  %v149 = vld [vmem:[%s3 + $0x50] sm:$0xff]
  %v150 = vld [vmem:[%s3 + $0x58] sm:$0xff]
  %v151 = vld [vmem:[%s3 + $0x60] sm:$0xff]
  %v152 = vld [vmem:[%s3 + $0x68] sm:$0xff]
  %v153 = vld [vmem:[%s3 + $0x70] sm:$0xff]
  %v154 = vld [vmem:[%s3 + $0x78] sm:$0xff]
  %155 = vmatprep.subr.mxu0 0.0
  %156 = vmatpush1.msra.mxu0 %v139
  %157 = vmatprep.subr.mxu0 0.0
  %158 = vmatpush1.msra.mxu0 %v140
  %159 = vmatprep.subr.mxu0 0.0
  %160 = vmatpush1.msra.mxu0 %v141
  %161 = vmatprep.subr.mxu0 0.0
  %162 = vmatpush1.msra.mxu0 %v142
  %163 = vmatprep.subr.mxu0 0.0
  %164 = vmatpush1.msra.mxu0 %v143
  %165 = vmatprep.subr.mxu0 0.0
  %166 = vmatpush1.msra.mxu0 %v144
  %167 = vmatprep.subr.mxu0 0.0
  %168 = vmatpush1.msra.mxu0 %v145
  %169 = vmatprep.subr.mxu0 0.0
  %170 = vmatpush1.msra.mxu0 %v146
  %171 = vmatprep.subr.mxu0 0.0
  %172 = vmatpush1.msra.mxu0 %v147
  %173 = vmatprep.subr.mxu0 0.0
  %174 = vmatpush1.msra.mxu0 %v148
  %175 = vmatprep.subr.mxu0 0.0
  %176 = vmatpush1.msra.mxu0 %v149
  %177 = vmatprep.subr.mxu0 0.0
  %178 = vmatpush1.msra.mxu0 %v150
  %179 = vmatprep.subr.mxu0 0.0
  %180 = vmatpush1.msra.mxu0 %v151
  %181 = vmatprep.subr.mxu0 0.0
  %182 = vmatpush1.msra.mxu0 %v152
  %183 = vmatprep.subr.mxu0 0.0
  %184 = vmatpush1.msra.mxu0 %v153
  %185 = vmatprep.subr.mxu0 0.0
  %186 = vmatpush1.msra.mxu0 %v154
  %187 = vmatprep.subr.mxu0 0.0
  %188 = vmatpush1.msra.mxu0 0.0
  %189 = vmatprep.subr.mxu0 0.0
  %190 = vmatpush1.msra.mxu0 0.0
  %191 = vmatprep.subr.mxu0 0.0
  %192 = vmatpush1.msra.mxu0 0.0
  %193 = vmatprep.subr.mxu0 0.0
  %194 = vmatpush1.msra.mxu0 0.0
  %195 = vmatprep.subr.mxu0 0.0
  %196 = vmatpush1.msra.mxu0 0.0
  %197 = vmatprep.subr.mxu0 0.0
  %198 = vmatpush1.msra.mxu0 0.0
  %199 = vmatprep.subr.mxu0 0.0
  %200 = vmatpush1.msra.mxu0 0.0
  %201 = vmatprep.subr.mxu0 0.0
  %202 = vmatpush1.msra.mxu0 0.0
  %203 = vmatprep.subr.mxu0 0.0
  %204 = vmatpush1.msra.mxu0 0.0
  %205 = vmatprep.subr.mxu0 0.0
  %206 = vmatpush1.msra.mxu0 0.0
  %207 = vmatprep.subr.mxu0 0.0
  %208 = vmatpush1.msra.mxu0 0.0
  %209 = vmatprep.subr.mxu0 0.0
  %210 = vmatpush1.msra.mxu0 0.0
  %211 = vmatprep.subr.mxu0 0.0
  %212 = vmatpush1.msra.mxu0 0.0
  %213 = vmatprep.subr.mxu0 0.0
  %214 = vmatpush1.msra.mxu0 0.0
  %215 = vmatprep.subr.mxu0 0.0
  %216 = vmatpush1.msra.mxu0 0.0
  %217 = vmatprep.subr.mxu0 0.0
  %218 = vmatpush1.msra.mxu0 0.0
  %219 = vmatprep.mubr.f32.mxu0 0.0
  %220 = vmatmul.mubr.f32.gmra.mrb[0].mxu0 %v137
  %v221 = vpop.f32.mrb[0].mxu0
  %v222 = vadd.f32 0.0, %v221
  %v223 = vpop.f32.mrb[0].mxu0
  %224 = vdwg.mxu0
  %v225 = vld [vmem:[%s4] sm:$0xff]
  %vm226 = vcmask 31744
  %v228 = vsel %vm226, %v225, 0
  %vm230 = vcmask 1043456
  %v232 = vsel %vm230, %v222, 0
  %234 = vmatprep.subr.mxu0 0.0
  %235 = vmatpush1.msra.mxu0 %v232
  %236 = vmatprep.subr.mxu0 0.0
  %237 = vmatpush1.msra.mxu0 0.0
  %238 = vmatprep.subr.mxu0 0.0
  %239 = vmatpush1.msra.mxu0 0.0
  %240 = vmatprep.subr.mxu0 0.0
  %241 = vmatpush1.msra.mxu0 0.0
  %242 = vmatprep.subr.mxu0 0.0
  %243 = vmatpush1.msra.mxu0 0.0
  %244 = vmatprep.subr.mxu0 0.0
  %245 = vmatpush1.msra.mxu0 0.0
  %246 = vmatprep.subr.mxu0 0.0
  %247 = vmatpush1.msra.mxu0 0.0
  %248 = vmatprep.subr.mxu0 0.0
  %249 = vmatpush1.msra.mxu0 0.0
  %250 = vmatprep.subr.mxu0 0.0
  %251 = vmatpush1.msra.mxu0 0.0
  %252 = vmatprep.subr.mxu0 0.0
  %253 = vmatpush1.msra.mxu0 0.0
  %254 = vmatprep.subr.mxu0 0.0
  %255 = vmatpush1.msra.mxu0 0.0
  %256 = vmatprep.subr.mxu0 0.0
  %257 = vmatpush1.msra.mxu0 0.0
  %258 = vmatprep.subr.mxu0 0.0
  %259 = vmatpush1.msra.mxu0 0.0
  %260 = vmatprep.subr.mxu0 0.0
  %261 = vmatpush1.msra.mxu0 0.0
  %262 = vmatprep.subr.mxu0 0.0
  %263 = vmatpush1.msra.mxu0 0.0
  %264 = vmatprep.subr.mxu0 0.0
  %265 = vmatpush1.msra.mxu0 0.0
  %266 = vmatprep.subr.mxu0 0.0
  %267 = vmatpush1.msra.mxu0 0.0
  %268 = vmatprep.subr.mxu0 0.0
  %269 = vmatpush1.msra.mxu0 0.0
  %270 = vmatprep.subr.mxu0 0.0
  %271 = vmatpush1.msra.mxu0 0.0
  %272 = vmatprep.subr.mxu0 0.0
  %273 = vmatpush1.msra.mxu0 0.0
  %274 = vmatprep.subr.mxu0 0.0
  %275 = vmatpush1.msra.mxu0 0.0
  %276 = vmatprep.subr.mxu0 0.0
  %277 = vmatpush1.msra.mxu0 0.0
  %278 = vmatprep.subr.mxu0 0.0
  %279 = vmatpush1.msra.mxu0 0.0
  %280 = vmatprep.subr.mxu0 0.0
  %281 = vmatpush1.msra.mxu0 0.0
  %282 = vmatprep.subr.mxu0 0.0
  %283 = vmatpush1.msra.mxu0 0.0
  %284 = vmatprep.subr.mxu0 0.0
  %285 = vmatpush1.msra.mxu0 0.0
  %286 = vmatprep.subr.mxu0 0.0
  %287 = vmatpush1.msra.mxu0 0.0
  %288 = vmatprep.subr.mxu0 0.0
  %289 = vmatpush1.msra.mxu0 0.0
  %290 = vmatprep.subr.mxu0 0.0
  %291 = vmatpush1.msra.mxu0 0.0
  %292 = vmatprep.subr.mxu0 0.0
  %293 = vmatpush1.msra.mxu0 0.0
  %294 = vmatprep.subr.mxu0 0.0
  %295 = vmatpush1.msra.mxu0 0.0
  %296 = vmatprep.subr.mxu0 0.0
  %297 = vmatpush1.msra.mxu0 0.0
  %298 = vmatprep.mubr.f32.mxu0 0.0
  %299 = vmatmul.mubr.f32.gmra.mrb[0].mxu0 %v228
  %v300 = vpop.f32.mrb[0].mxu0
  %v301 = vadd.f32 0.0, %v300
  %v302 = vpop.f32.mrb[0].mxu0
  %303 = vdwg.mxu0
  %305 = vset.pattern.permute.xlu0 0
  %306 = vperm.xlu0 %305, %v138
  %v307 = vpop.permute.xlu0 %306
  %v309 = vadd.f32 %v307, %v301
  %s310 = scalar_lea.vmem %s3, 128
  %v311 = vld [vmem:[%s310] sm:$0xff]
  %v312 = vld [vmem:[%s310 + $0x8] sm:$0xff]
  %v313 = vld [vmem:[%s310 + $0x10] sm:$0xff]
  %v314 = vld [vmem:[%s310 + $0x18] sm:$0xff]
  %v315 = vld [vmem:[%s310 + $0x20] sm:$0xff]
  %v316 = vld [vmem:[%s310 + $0x28] sm:$0xff]
  %v317 = vld [vmem:[%s310 + $0x30] sm:$0xff]
  %v318 = vld [vmem:[%s310 + $0x38] sm:$0xff]
  %v319 = vld [vmem:[%s310 + $0x40] sm:$0xff]
  %v320 = vld [vmem:[%s310 + $0x48] sm:$0xff]
  %v321 = vld [vmem:[%s310 + $0x50] sm:$0xff]
  %v322 = vld [vmem:[%s310 + $0x58] sm:$0xff]
  %v323 = vld [vmem:[%s310 + $0x60] sm:$0xff]
  %v324 = vld [vmem:[%s310 + $0x68] sm:$0xff]
  %v325 = vld [vmem:[%s310 + $0x70] sm:$0xff]
  %v326 = vld [vmem:[%s310 + $0x78] sm:$0xff]
  %327 = vmatprep.subr.mxu0 0.0
  %328 = vmatpush1.msra.mxu0 %v311
  %329 = vmatprep.subr.mxu0 0.0
  %330 = vmatpush1.msra.mxu0 %v312
  %331 = vmatprep.subr.mxu0 0.0
  %332 = vmatpush1.msra.mxu0 %v313
  %333 = vmatprep.subr.mxu0 0.0
  %334 = vmatpush1.msra.mxu0 %v314
  %335 = vmatprep.subr.mxu0 0.0
  %336 = vmatpush1.msra.mxu0 %v315
  %337 = vmatprep.subr.mxu0 0.0
  %338 = vmatpush1.msra.mxu0 %v316
  %339 = vmatprep.subr.mxu0 0.0
  %340 = vmatpush1.msra.mxu0 %v317
  %341 = vmatprep.subr.mxu0 0.0
  %342 = vmatpush1.msra.mxu0 %v318
  %343 = vmatprep.subr.mxu0 0.0
  %344 = vmatpush1.msra.mxu0 %v319
  %345 = vmatprep.subr.mxu0 0.0
  %346 = vmatpush1.msra.mxu0 %v320
  %347 = vmatprep.subr.mxu0 0.0
  %348 = vmatpush1.msra.mxu0 %v321
  %349 = vmatprep.subr.mxu0 0.0
  %350 = vmatpush1.msra.mxu0 %v322
  %351 = vmatprep.subr.mxu0 0.0
  %352 = vmatpush1.msra.mxu0 %v323
  %353 = vmatprep.subr.mxu0 0.0
  %354 = vmatpush1.msra.mxu0 %v324
  %355 = vmatprep.subr.mxu0 0.0
  %356 = vmatpush1.msra.mxu0 %v325
  %357 = vmatprep.subr.mxu0 0.0
  %358 = vmatpush1.msra.mxu0 %v326
  %359 = vmatprep.subr.mxu0 0.0
  %360 = vmatpush1.msra.mxu0 0.0
  %361 = vmatprep.subr.mxu0 0.0
  %362 = vmatpush1.msra.mxu0 0.0
  %363 = vmatprep.subr.mxu0 0.0
  %364 = vmatpush1.msra.mxu0 0.0
  %365 = vmatprep.subr.mxu0 0.0
  %366 = vmatpush1.msra.mxu0 0.0
  %367 = vmatprep.subr.mxu0 0.0
  %368 = vmatpush1.msra.mxu0 0.0
  %369 = vmatprep.subr.mxu0 0.0
  %370 = vmatpush1.msra.mxu0 0.0
  %371 = vmatprep.subr.mxu0 0.0
  %372 = vmatpush1.msra.mxu0 0.0
  %373 = vmatprep.subr.mxu0 0.0
  %374 = vmatpush1.msra.mxu0 0.0
  %375 = vmatprep.subr.mxu0 0.0
  %376 = vmatpush1.msra.mxu0 0.0
  %377 = vmatprep.subr.mxu0 0.0
  %378 = vmatpush1.msra.mxu0 0.0
  %379 = vmatprep.subr.mxu0 0.0
  %380 = vmatpush1.msra.mxu0 0.0
  %381 = vmatprep.subr.mxu0 0.0
  %382 = vmatpush1.msra.mxu0 0.0
  %383 = vmatprep.subr.mxu0 0.0
  %384 = vmatpush1.msra.mxu0 0.0
  %385 = vmatprep.subr.mxu0 0.0
  %386 = vmatpush1.msra.mxu0 0.0
  %387 = vmatprep.subr.mxu0 0.0
  %388 = vmatpush1.msra.mxu0 0.0
  %389 = vmatprep.subr.mxu0 0.0
  %390 = vmatpush1.msra.mxu0 0.0
  %391 = vmatprep.mubr.f32.mxu0 0.0
  %392 = vmatmul.mubr.f32.gmra.mrb[0].mxu0 %v137
  %v393 = vpop.f32.mrb[0].mxu0
  %v394 = vadd.f32 0.0, %v393
  %v395 = vpop.f32.mrb[0].mxu0
  %396 = vdwg.mxu0
  %s397 = scalar_lea.vmem %s4, 8
  %v398 = vld [vmem:[%s397] sm:$0xff]
  %v400 = vsel %vm226, %v398, 0
  %v403 = vsel %vm230, %v394, 0
  %405 = vmatprep.subr.mxu0 0.0
  %406 = vmatpush1.msra.mxu0 %v403
  %407 = vmatprep.subr.mxu0 0.0
  %408 = vmatpush1.msra.mxu0 0.0
  %409 = vmatprep.subr.mxu0 0.0
  %410 = vmatpush1.msra.mxu0 0.0
  %411 = vmatprep.subr.mxu0 0.0
  %412 = vmatpush1.msra.mxu0 0.0
  %413 = vmatprep.subr.mxu0 0.0
  %414 = vmatpush1.msra.mxu0 0.0
  %415 = vmatprep.subr.mxu0 0.0
  %416 = vmatpush1.msra.mxu0 0.0
  %417 = vmatprep.subr.mxu0 0.0
  %418 = vmatpush1.msra.mxu0 0.0
  %419 = vmatprep.subr.mxu0 0.0
  %420 = vmatpush1.msra.mxu0 0.0
  %421 = vmatprep.subr.mxu0 0.0
  %422 = vmatpush1.msra.mxu0 0.0
  %423 = vmatprep.subr.mxu0 0.0
  %424 = vmatpush1.msra.mxu0 0.0
  %425 = vmatprep.subr.mxu0 0.0
  %426 = vmatpush1.msra.mxu0 0.0
  %427 = vmatprep.subr.mxu0 0.0
  %428 = vmatpush1.msra.mxu0 0.0
  %429 = vmatprep.subr.mxu0 0.0
  %430 = vmatpush1.msra.mxu0 0.0
  %431 = vmatprep.subr.mxu0 0.0
  %432 = vmatpush1.msra.mxu0 0.0
  %433 = vmatprep.subr.mxu0 0.0
  %434 = vmatpush1.msra.mxu0 0.0
  %435 = vmatprep.subr.mxu0 0.0
  %436 = vmatpush1.msra.mxu0 0.0
  %437 = vmatprep.subr.mxu0 0.0
  %438 = vmatpush1.msra.mxu0 0.0
  %439 = vmatprep.subr.mxu0 0.0
  %440 = vmatpush1.msra.mxu0 0.0
  %441 = vmatprep.subr.mxu0 0.0
  %442 = vmatpush1.msra.mxu0 0.0
  %443 = vmatprep.subr.mxu0 0.0
  %444 = vmatpush1.msra.mxu0 0.0
  %445 = vmatprep.subr.mxu0 0.0
  %446 = vmatpush1.msra.mxu0 0.0
  %447 = vmatprep.subr.mxu0 0.0
  %448 = vmatpush1.msra.mxu0 0.0
  %449 = vmatprep.subr.mxu0 0.0
  %450 = vmatpush1.msra.mxu0 0.0
  %451 = vmatprep.subr.mxu0 0.0
  %452 = vmatpush1.msra.mxu0 0.0
  %453 = vmatprep.subr.mxu0 0.0
  %454 = vmatpush1.msra.mxu0 0.0
  %455 = vmatprep.subr.mxu0 0.0
  %456 = vmatpush1.msra.mxu0 0.0
  %457 = vmatprep.subr.mxu0 0.0
  %458 = vmatpush1.msra.mxu0 0.0
  %459 = vmatprep.subr.mxu0 0.0
  %460 = vmatpush1.msra.mxu0 0.0
  %461 = vmatprep.subr.mxu0 0.0
  %462 = vmatpush1.msra.mxu0 0.0
  %463 = vmatprep.subr.mxu0 0.0
  %464 = vmatpush1.msra.mxu0 0.0
  %465 = vmatprep.subr.mxu0 0.0
  %466 = vmatpush1.msra.mxu0 0.0
  %467 = vmatprep.subr.mxu0 0.0
  %468 = vmatpush1.msra.mxu0 0.0
  %469 = vmatprep.mubr.f32.mxu0 0.0
  %470 = vmatmul.mubr.f32.gmra.mrb[0].mxu0 %v400
  %v471 = vpop.f32.mrb[0].mxu0
  %v472 = vadd.f32 0.0, %v471
  %v473 = vpop.f32.mrb[0].mxu0
  %474 = vdwg.mxu0
  %v475 = vadd.f32 %v309, %v472
  %s476 = scalar_lea.vmem %s3, 256
  %v477 = vld [vmem:[%s476] sm:$0xff]
  %v478 = vld [vmem:[%s476 + $0x8] sm:$0xff]
  %v479 = vld [vmem:[%s476 + $0x10] sm:$0xff]
  %v480 = vld [vmem:[%s476 + $0x18] sm:$0xff]
  %v481 = vld [vmem:[%s476 + $0x20] sm:$0xff]
  %v482 = vld [vmem:[%s476 + $0x28] sm:$0xff]
  %v483 = vld [vmem:[%s476 + $0x30] sm:$0xff]
  %v484 = vld [vmem:[%s476 + $0x38] sm:$0xff]
  %v485 = vld [vmem:[%s476 + $0x40] sm:$0xff]
  %v486 = vld [vmem:[%s476 + $0x48] sm:$0xff]
  %v487 = vld [vmem:[%s476 + $0x50] sm:$0xff]
  %v488 = vld [vmem:[%s476 + $0x58] sm:$0xff]
  %v489 = vld [vmem:[%s476 + $0x60] sm:$0xff]
  %v490 = vld [vmem:[%s476 + $0x68] sm:$0xff]
  %v491 = vld [vmem:[%s476 + $0x70] sm:$0xff]
  %v492 = vld [vmem:[%s476 + $0x78] sm:$0xff]
  %493 = vmatprep.subr.mxu0 0.0
  %494 = vmatpush1.msra.mxu0 %v477
  %495 = vmatprep.subr.mxu0 0.0
  %496 = vmatpush1.msra.mxu0 %v478
  %497 = vmatprep.subr.mxu0 0.0
  %498 = vmatpush1.msra.mxu0 %v479
  %499 = vmatprep.subr.mxu0 0.0
  %500 = vmatpush1.msra.mxu0 %v480
  %501 = vmatprep.subr.mxu0 0.0
  %502 = vmatpush1.msra.mxu0 %v481
  %503 = vmatprep.subr.mxu0 0.0
  %504 = vmatpush1.msra.mxu0 %v482
  %505 = vmatprep.subr.mxu0 0.0
  %506 = vmatpush1.msra.mxu0 %v483
  %507 = vmatprep.subr.mxu0 0.0
  %508 = vmatpush1.msra.mxu0 %v484
  %509 = vmatprep.subr.mxu0 0.0
  %510 = vmatpush1.msra.mxu0 %v485
  %511 = vmatprep.subr.mxu0 0.0
  %512 = vmatpush1.msra.mxu0 %v486
  %513 = vmatprep.subr.mxu0 0.0
  %514 = vmatpush1.msra.mxu0 %v487
  %515 = vmatprep.subr.mxu0 0.0
  %516 = vmatpush1.msra.mxu0 %v488
  %517 = vmatprep.subr.mxu0 0.0
  %518 = vmatpush1.msra.mxu0 %v489
  %519 = vmatprep.subr.mxu0 0.0
  %520 = vmatpush1.msra.mxu0 %v490
  %521 = vmatprep.subr.mxu0 0.0
  %522 = vmatpush1.msra.mxu0 %v491
  %523 = vmatprep.subr.mxu0 0.0
  %524 = vmatpush1.msra.mxu0 %v492
  %525 = vmatprep.subr.mxu0 0.0
  %526 = vmatpush1.msra.mxu0 0.0
  %527 = vmatprep.subr.mxu0 0.0
  %528 = vmatpush1.msra.mxu0 0.0
  %529 = vmatprep.subr.mxu0 0.0
  %530 = vmatpush1.msra.mxu0 0.0
  %531 = vmatprep.subr.mxu0 0.0
  %532 = vmatpush1.msra.mxu0 0.0
  %533 = vmatprep.subr.mxu0 0.0
  %534 = vmatpush1.msra.mxu0 0.0
  %535 = vmatprep.subr.mxu0 0.0
  %536 = vmatpush1.msra.mxu0 0.0
  %537 = vmatprep.subr.mxu0 0.0
  %538 = vmatpush1.msra.mxu0 0.0
  %539 = vmatprep.subr.mxu0 0.0
  %540 = vmatpush1.msra.mxu0 0.0
  %541 = vmatprep.subr.mxu0 0.0
  %542 = vmatpush1.msra.mxu0 0.0
  %543 = vmatprep.subr.mxu0 0.0
  %544 = vmatpush1.msra.mxu0 0.0
  %545 = vmatprep.subr.mxu0 0.0
  %546 = vmatpush1.msra.mxu0 0.0
  %547 = vmatprep.subr.mxu0 0.0
  %548 = vmatpush1.msra.mxu0 0.0
  %549 = vmatprep.subr.mxu0 0.0
  %550 = vmatpush1.msra.mxu0 0.0
  %551 = vmatprep.subr.mxu0 0.0
  %552 = vmatpush1.msra.mxu0 0.0
  %553 = vmatprep.subr.mxu0 0.0
  %554 = vmatpush1.msra.mxu0 0.0
  %555 = vmatprep.subr.mxu0 0.0
  %556 = vmatpush1.msra.mxu0 0.0
  %557 = vmatprep.mubr.f32.mxu0 0.0
  %558 = vmatmul.mubr.f32.gmra.mrb[0].mxu0 %v137
  %v559 = vpop.f32.mrb[0].mxu0
  %v560 = vadd.f32 0.0, %v559
  %v561 = vpop.f32.mrb[0].mxu0
  %562 = vdwg.mxu0
  %s563 = scalar_lea.vmem %s4, 16
  %v564 = vld [vmem:[%s563] sm:$0xff]
  %v566 = vsel %vm226, %v564, 0
  %v569 = vsel %vm230, %v560, 0
  %571 = vmatprep.subr.mxu0 0.0
  %572 = vmatpush1.msra.mxu0 %v569
  %573 = vmatprep.subr.mxu0 0.0
  %574 = vmatpush1.msra.mxu0 0.0
  %575 = vmatprep.subr.mxu0 0.0
  %576 = vmatpush1.msra.mxu0 0.0
  %577 = vmatprep.subr.mxu0 0.0
  %578 = vmatpush1.msra.mxu0 0.0
  %579 = vmatprep.subr.mxu0 0.0
  %580 = vmatpush1.msra.mxu0 0.0
  %581 = vmatprep.subr.mxu0 0.0
  %582 = vmatpush1.msra.mxu0 0.0
  %583 = vmatprep.subr.mxu0 0.0
  %584 = vmatpush1.msra.mxu0 0.0
  %585 = vmatprep.subr.mxu0 0.0
  %586 = vmatpush1.msra.mxu0 0.0
  %587 = vmatprep.subr.mxu0 0.0
  %588 = vmatpush1.msra.mxu0 0.0
  %589 = vmatprep.subr.mxu0 0.0
  %590 = vmatpush1.msra.mxu0 0.0
  %591 = vmatprep.subr.mxu0 0.0
  %592 = vmatpush1.msra.mxu0 0.0
  %593 = vmatprep.subr.mxu0 0.0
  %594 = vmatpush1.msra.mxu0 0.0
  %595 = vmatprep.subr.mxu0 0.0
  %596 = vmatpush1.msra.mxu0 0.0
  %597 = vmatprep.subr.mxu0 0.0
  %598 = vmatpush1.msra.mxu0 0.0
  %599 = vmatprep.subr.mxu0 0.0
  %600 = vmatpush1.msra.mxu0 0.0
  %601 = vmatprep.subr.mxu0 0.0
  %602 = vmatpush1.msra.mxu0 0.0
  %603 = vmatprep.subr.mxu0 0.0
  %604 = vmatpush1.msra.mxu0 0.0
  %605 = vmatprep.subr.mxu0 0.0
  %606 = vmatpush1.msra.mxu0 0.0
  %607 = vmatprep.subr.mxu0 0.0
  %608 = vmatpush1.msra.mxu0 0.0
  %609 = vmatprep.subr.mxu0 0.0
  %610 = vmatpush1.msra.mxu0 0.0
  %611 = vmatprep.subr.mxu0 0.0
  %612 = vmatpush1.msra.mxu0 0.0
  %613 = vmatprep.subr.mxu0 0.0
  %614 = vmatpush1.msra.mxu0 0.0
  %615 = vmatprep.subr.mxu0 0.0
  %616 = vmatpush1.msra.mxu0 0.0
  %617 = vmatprep.subr.mxu0 0.0
  %618 = vmatpush1.msra.mxu0 0.0
  %619 = vmatprep.subr.mxu0 0.0
  %620 = vmatpush1.msra.mxu0 0.0
  %621 = vmatprep.subr.mxu0 0.0
  %622 = vmatpush1.msra.mxu0 0.0
  %623 = vmatprep.subr.mxu0 0.0
  %624 = vmatpush1.msra.mxu0 0.0
  %625 = vmatprep.subr.mxu0 0.0
  %626 = vmatpush1.msra.mxu0 0.0
  %627 = vmatprep.subr.mxu0 0.0
  %628 = vmatpush1.msra.mxu0 0.0
  %629 = vmatprep.subr.mxu0 0.0
  %630 = vmatpush1.msra.mxu0 0.0
  %631 = vmatprep.subr.mxu0 0.0
  %632 = vmatpush1.msra.mxu0 0.0
  %633 = vmatprep.subr.mxu0 0.0
  %634 = vmatpush1.msra.mxu0 0.0
  %635 = vmatprep.mubr.f32.mxu0 0.0
  %636 = vmatmul.mubr.f32.gmra.mrb[0].mxu0 %v566
  %v637 = vpop.f32.mrb[0].mxu0
  %v638 = vadd.f32 0.0, %v637
  %v639 = vpop.f32.mrb[0].mxu0
  %640 = vdwg.mxu0
  %v641 = vadd.f32 %v475, %v638
  %s642 = scalar_lea.vmem %s3, 384
  %v643 = vld [vmem:[%s642] sm:$0xff]
  %v644 = vld [vmem:[%s642 + $0x8] sm:$0xff]
  %v645 = vld [vmem:[%s642 + $0x10] sm:$0xff]
  %v646 = vld [vmem:[%s642 + $0x18] sm:$0xff]
  %v647 = vld [vmem:[%s642 + $0x20] sm:$0xff]
  %v648 = vld [vmem:[%s642 + $0x28] sm:$0xff]
  %v649 = vld [vmem:[%s642 + $0x30] sm:$0xff]
  %v650 = vld [vmem:[%s642 + $0x38] sm:$0xff]
  %v651 = vld [vmem:[%s642 + $0x40] sm:$0xff]
  %v652 = vld [vmem:[%s642 + $0x48] sm:$0xff]
  %v653 = vld [vmem:[%s642 + $0x50] sm:$0xff]
  %v654 = vld [vmem:[%s642 + $0x58] sm:$0xff]
  %v655 = vld [vmem:[%s642 + $0x60] sm:$0xff]
  %v656 = vld [vmem:[%s642 + $0x68] sm:$0xff]
  %v657 = vld [vmem:[%s642 + $0x70] sm:$0xff]
  %v658 = vld [vmem:[%s642 + $0x78] sm:$0xff]
  %659 = vmatprep.subr.mxu0 0.0
  %660 = vmatpush1.msra.mxu0 %v643
  %661 = vmatprep.subr.mxu0 0.0
  %662 = vmatpush1.msra.mxu0 %v644
  %663 = vmatprep.subr.mxu0 0.0
  %664 = vmatpush1.msra.mxu0 %v645
  %665 = vmatprep.subr.mxu0 0.0
  %666 = vmatpush1.msra.mxu0 %v646
  %667 = vmatprep.subr.mxu0 0.0
  %668 = vmatpush1.msra.mxu0 %v647
  %669 = vmatprep.subr.mxu0 0.0
  %670 = vmatpush1.msra.mxu0 %v648
  %671 = vmatprep.subr.mxu0 0.0
  %672 = vmatpush1.msra.mxu0 %v649
  %673 = vmatprep.subr.mxu0 0.0
  %674 = vmatpush1.msra.mxu0 %v650
  %675 = vmatprep.subr.mxu0 0.0
  %676 = vmatpush1.msra.mxu0 %v651
  %677 = vmatprep.subr.mxu0 0.0
  %678 = vmatpush1.msra.mxu0 %v652
  %679 = vmatprep.subr.mxu0 0.0
  %680 = vmatpush1.msra.mxu0 %v653
  %681 = vmatprep.subr.mxu0 0.0
  %682 = vmatpush1.msra.mxu0 %v654
  %683 = vmatprep.subr.mxu0 0.0
  %684 = vmatpush1.msra.mxu0 %v655
  %685 = vmatprep.subr.mxu0 0.0
  %686 = vmatpush1.msra.mxu0 %v656
  %687 = vmatprep.subr.mxu0 0.0
  %688 = vmatpush1.msra.mxu0 %v657
  %689 = vmatprep.subr.mxu0 0.0
  %690 = vmatpush1.msra.mxu0 %v658
  %691 = vmatprep.subr.mxu0 0.0
  %692 = vmatpush1.msra.mxu0 0.0
  %693 = vmatprep.subr.mxu0 0.0
  %694 = vmatpush1.msra.mxu0 0.0
  %695 = vmatprep.subr.mxu0 0.0
  %696 = vmatpush1.msra.mxu0 0.0
  %697 = vmatprep.subr.mxu0 0.0
  %698 = vmatpush1.msra.mxu0 0.0
  %699 = vmatprep.subr.mxu0 0.0
  %700 = vmatpush1.msra.mxu0 0.0
  %701 = vmatprep.subr.mxu0 0.0
  %702 = vmatpush1.msra.mxu0 0.0
  %703 = vmatprep.subr.mxu0 0.0
  %704 = vmatpush1.msra.mxu0 0.0
  %705 = vmatprep.subr.mxu0 0.0
  %706 = vmatpush1.msra.mxu0 0.0
  %707 = vmatprep.subr.mxu0 0.0
  %708 = vmatpush1.msra.mxu0 0.0
  %709 = vmatprep.subr.mxu0 0.0
  %710 = vmatpush1.msra.mxu0 0.0
  %711 = vmatprep.subr.mxu0 0.0
  %712 = vmatpush1.msra.mxu0 0.0
  %713 = vmatprep.subr.mxu0 0.0
  %714 = vmatpush1.msra.mxu0 0.0
  %715 = vmatprep.subr.mxu0 0.0
  %716 = vmatpush1.msra.mxu0 0.0
  %717 = vmatprep.subr.mxu0 0.0
  %718 = vmatpush1.msra.mxu0 0.0
  %719 = vmatprep.subr.mxu0 0.0
  %720 = vmatpush1.msra.mxu0 0.0
  %721 = vmatprep.subr.mxu0 0.0
  %722 = vmatpush1.msra.mxu0 0.0
  %723 = vmatprep.mubr.f32.mxu0 0.0
  %724 = vmatmul.mubr.f32.gmra.mrb[0].mxu0 %v137
  %v725 = vpop.f32.mrb[0].mxu0
  %v726 = vadd.f32 0.0, %v725
  %v727 = vpop.f32.mrb[0].mxu0
  %728 = vdwg.mxu0
  %s729 = scalar_lea.vmem %s4, 24
  %v730 = vld [vmem:[%s729] sm:$0xff]
  %v732 = vsel %vm226, %v730, 0
  %v735 = vsel %vm230, %v726, 0
  %737 = vmatprep.subr.mxu0 0.0
  %738 = vmatpush1.msra.mxu0 %v735
  %739 = vmatprep.subr.mxu0 0.0
  %740 = vmatpush1.msra.mxu0 0.0
  %741 = vmatprep.subr.mxu0 0.0
  %742 = vmatpush1.msra.mxu0 0.0
  %743 = vmatprep.subr.mxu0 0.0
  %744 = vmatpush1.msra.mxu0 0.0
  %745 = vmatprep.subr.mxu0 0.0
  %746 = vmatpush1.msra.mxu0 0.0
  %747 = vmatprep.subr.mxu0 0.0
  %748 = vmatpush1.msra.mxu0 0.0
  %749 = vmatprep.subr.mxu0 0.0
  %750 = vmatpush1.msra.mxu0 0.0
  %751 = vmatprep.subr.mxu0 0.0
  %752 = vmatpush1.msra.mxu0 0.0
  %753 = vmatprep.subr.mxu0 0.0
  %754 = vmatpush1.msra.mxu0 0.0
  %755 = vmatprep.subr.mxu0 0.0
  %756 = vmatpush1.msra.mxu0 0.0
  %757 = vmatprep.subr.mxu0 0.0
  %758 = vmatpush1.msra.mxu0 0.0
  %759 = vmatprep.subr.mxu0 0.0
  %760 = vmatpush1.msra.mxu0 0.0
  %761 = vmatprep.subr.mxu0 0.0
  %762 = vmatpush1.msra.mxu0 0.0
  %763 = vmatprep.subr.mxu0 0.0
  %764 = vmatpush1.msra.mxu0 0.0
  %765 = vmatprep.subr.mxu0 0.0
  %766 = vmatpush1.msra.mxu0 0.0
  %767 = vmatprep.subr.mxu0 0.0
  %768 = vmatpush1.msra.mxu0 0.0
  %769 = vmatprep.subr.mxu0 0.0
  %770 = vmatpush1.msra.mxu0 0.0
  %771 = vmatprep.subr.mxu0 0.0
  %772 = vmatpush1.msra.mxu0 0.0
  %773 = vmatprep.subr.mxu0 0.0
  %774 = vmatpush1.msra.mxu0 0.0
  %775 = vmatprep.subr.mxu0 0.0
  %776 = vmatpush1.msra.mxu0 0.0
  %777 = vmatprep.subr.mxu0 0.0
  %778 = vmatpush1.msra.mxu0 0.0
  %779 = vmatprep.subr.mxu0 0.0
  %780 = vmatpush1.msra.mxu0 0.0
  %781 = vmatprep.subr.mxu0 0.0
  %782 = vmatpush1.msra.mxu0 0.0
  %783 = vmatprep.subr.mxu0 0.0
  %784 = vmatpush1.msra.mxu0 0.0
  %785 = vmatprep.subr.mxu0 0.0
  %786 = vmatpush1.msra.mxu0 0.0
  %787 = vmatprep.subr.mxu0 0.0
  %788 = vmatpush1.msra.mxu0 0.0
  %789 = vmatprep.subr.mxu0 0.0
  %790 = vmatpush1.msra.mxu0 0.0
  %791 = vmatprep.subr.mxu0 0.0
  %792 = vmatpush1.msra.mxu0 0.0
  %793 = vmatprep.subr.mxu0 0.0
  %794 = vmatpush1.msra.mxu0 0.0
  %795 = vmatprep.subr.mxu0 0.0
  %796 = vmatpush1.msra.mxu0 0.0
  %797 = vmatprep.subr.mxu0 0.0
  %798 = vmatpush1.msra.mxu0 0.0
  %799 = vmatprep.subr.mxu0 0.0
  %800 = vmatpush1.msra.mxu0 0.0
  %801 = vmatprep.mubr.f32.mxu0 0.0
  %802 = vmatmul.mubr.f32.gmra.mrb[0].mxu0 %v732
  %v803 = vpop.f32.mrb[0].mxu0
  %v804 = vadd.f32 0.0, %v803
  %v805 = vpop.f32.mrb[0].mxu0
  %806 = vdwg.mxu0
  %v807 = vadd.f32 %v641, %v804
  %s808 = scalar_lea.vmem %s3, 512
  %v809 = vld [vmem:[%s808] sm:$0xff]
  %v810 = vld [vmem:[%s808 + $0x8] sm:$0xff]
  %v811 = vld [vmem:[%s808 + $0x10] sm:$0xff]
  %v812 = vld [vmem:[%s808 + $0x18] sm:$0xff]
  %v813 = vld [vmem:[%s808 + $0x20] sm:$0xff]
  %v814 = vld [vmem:[%s808 + $0x28] sm:$0xff]
  %v815 = vld [vmem:[%s808 + $0x30] sm:$0xff]
  %v816 = vld [vmem:[%s808 + $0x38] sm:$0xff]
  %v817 = vld [vmem:[%s808 + $0x40] sm:$0xff]
  %v818 = vld [vmem:[%s808 + $0x48] sm:$0xff]
  %v819 = vld [vmem:[%s808 + $0x50] sm:$0xff]
  %v820 = vld [vmem:[%s808 + $0x58] sm:$0xff]
  %v821 = vld [vmem:[%s808 + $0x60] sm:$0xff]
  %v822 = vld [vmem:[%s808 + $0x68] sm:$0xff]
  %v823 = vld [vmem:[%s808 + $0x70] sm:$0xff]
  %v824 = vld [vmem:[%s808 + $0x78] sm:$0xff]
  %825 = vmatprep.subr.mxu0 0.0
  %826 = vmatpush1.msra.mxu0 %v809
  %827 = vmatprep.subr.mxu0 0.0
  %828 = vmatpush1.msra.mxu0 %v810
  %829 = vmatprep.subr.mxu0 0.0
  %830 = vmatpush1.msra.mxu0 %v811
  %831 = vmatprep.subr.mxu0 0.0
  %832 = vmatpush1.msra.mxu0 %v812
  %833 = vmatprep.subr.mxu0 0.0
  %834 = vmatpush1.msra.mxu0 %v813
  %835 = vmatprep.subr.mxu0 0.0
  %836 = vmatpush1.msra.mxu0 %v814
  %837 = vmatprep.subr.mxu0 0.0
  %838 = vmatpush1.msra.mxu0 %v815
  %839 = vmatprep.subr.mxu0 0.0
  %840 = vmatpush1.msra.mxu0 %v816
  %841 = vmatprep.subr.mxu0 0.0
  %842 = vmatpush1.msra.mxu0 %v817
  %843 = vmatprep.subr.mxu0 0.0
  %844 = vmatpush1.msra.mxu0 %v818
  %845 = vmatprep.subr.mxu0 0.0
  %846 = vmatpush1.msra.mxu0 %v819
  %847 = vmatprep.subr.mxu0 0.0
  %848 = vmatpush1.msra.mxu0 %v820
  %849 = vmatprep.subr.mxu0 0.0
  %850 = vmatpush1.msra.mxu0 %v821
  %851 = vmatprep.subr.mxu0 0.0
  %852 = vmatpush1.msra.mxu0 %v822
  %853 = vmatprep.subr.mxu0 0.0
  %854 = vmatpush1.msra.mxu0 %v823
  %855 = vmatprep.subr.mxu0 0.0
  %856 = vmatpush1.msra.mxu0 %v824
  %857 = vmatprep.subr.mxu0 0.0
  %858 = vmatpush1.msra.mxu0 0.0
  %859 = vmatprep.subr.mxu0 0.0
  %860 = vmatpush1.msra.mxu0 0.0
  %861 = vmatprep.subr.mxu0 0.0
  %862 = vmatpush1.msra.mxu0 0.0
  %863 = vmatprep.subr.mxu0 0.0
  %864 = vmatpush1.msra.mxu0 0.0
  %865 = vmatprep.subr.mxu0 0.0
  %866 = vmatpush1.msra.mxu0 0.0
  %867 = vmatprep.subr.mxu0 0.0
  %868 = vmatpush1.msra.mxu0 0.0
  %869 = vmatprep.subr.mxu0 0.0
  %870 = vmatpush1.msra.mxu0 0.0
  %871 = vmatprep.subr.mxu0 0.0
  %872 = vmatpush1.msra.mxu0 0.0
  %873 = vmatprep.subr.mxu0 0.0
  %874 = vmatpush1.msra.mxu0 0.0
  %875 = vmatprep.subr.mxu0 0.0
  %876 = vmatpush1.msra.mxu0 0.0
  %877 = vmatprep.subr.mxu0 0.0
  %878 = vmatpush1.msra.mxu0 0.0
  %879 = vmatprep.subr.mxu0 0.0
  %880 = vmatpush1.msra.mxu0 0.0
  %881 = vmatprep.subr.mxu0 0.0
  %882 = vmatpush1.msra.mxu0 0.0
  %883 = vmatprep.subr.mxu0 0.0
  %884 = vmatpush1.msra.mxu0 0.0
  %885 = vmatprep.subr.mxu0 0.0
  %886 = vmatpush1.msra.mxu0 0.0
  %887 = vmatprep.subr.mxu0 0.0
  %888 = vmatpush1.msra.mxu0 0.0
  %889 = vmatprep.mubr.f32.mxu0 0.0
  %890 = vmatmul.mubr.f32.gmra.mrb[0].mxu0 %v137
  %v891 = vpop.f32.mrb[0].mxu0
  %v892 = vadd.f32 0.0, %v891
  %v893 = vpop.f32.mrb[0].mxu0
  %894 = vdwg.mxu0
  %s895 = scalar_lea.vmem %s4, 32
  %v896 = vld [vmem:[%s895] sm:$0xff]
  %v898 = vsel %vm226, %v896, 0
  %v901 = vsel %vm230, %v892, 0
  %903 = vmatprep.subr.mxu0 0.0
  %904 = vmatpush1.msra.mxu0 %v901
  %905 = vmatprep.subr.mxu0 0.0
  %906 = vmatpush1.msra.mxu0 0.0
  %907 = vmatprep.subr.mxu0 0.0
  %908 = vmatpush1.msra.mxu0 0.0
  %909 = vmatprep.subr.mxu0 0.0
  %910 = vmatpush1.msra.mxu0 0.0
  %911 = vmatprep.subr.mxu0 0.0
  %912 = vmatpush1.msra.mxu0 0.0
  %913 = vmatprep.subr.mxu0 0.0
  %914 = vmatpush1.msra.mxu0 0.0
  %915 = vmatprep.subr.mxu0 0.0
  %916 = vmatpush1.msra.mxu0 0.0
  %917 = vmatprep.subr.mxu0 0.0
  %918 = vmatpush1.msra.mxu0 0.0
  %919 = vmatprep.subr.mxu0 0.0
  %920 = vmatpush1.msra.mxu0 0.0
  %921 = vmatprep.subr.mxu0 0.0
  %922 = vmatpush1.msra.mxu0 0.0
  %923 = vmatprep.subr.mxu0 0.0
  %924 = vmatpush1.msra.mxu0 0.0
  %925 = vmatprep.subr.mxu0 0.0
  %926 = vmatpush1.msra.mxu0 0.0
  %927 = vmatprep.subr.mxu0 0.0
  %928 = vmatpush1.msra.mxu0 0.0
  %929 = vmatprep.subr.mxu0 0.0
  %930 = vmatpush1.msra.mxu0 0.0
  %931 = vmatprep.subr.mxu0 0.0
  %932 = vmatpush1.msra.mxu0 0.0
  %933 = vmatprep.subr.mxu0 0.0
  %934 = vmatpush1.msra.mxu0 0.0
  %935 = vmatprep.subr.mxu0 0.0
  %936 = vmatpush1.msra.mxu0 0.0
  %937 = vmatprep.subr.mxu0 0.0
  %938 = vmatpush1.msra.mxu0 0.0
  %939 = vmatprep.subr.mxu0 0.0
  %940 = vmatpush1.msra.mxu0 0.0
  %941 = vmatprep.subr.mxu0 0.0
  %942 = vmatpush1.msra.mxu0 0.0
  %943 = vmatprep.subr.mxu0 0.0
  %944 = vmatpush1.msra.mxu0 0.0
  %945 = vmatprep.subr.mxu0 0.0
  %946 = vmatpush1.msra.mxu0 0.0
  %947 = vmatprep.subr.mxu0 0.0
  %948 = vmatpush1.msra.mxu0 0.0
  %949 = vmatprep.subr.mxu0 0.0
  %950 = vmatpush1.msra.mxu0 0.0
  %951 = vmatprep.subr.mxu0 0.0
  %952 = vmatpush1.msra.mxu0 0.0
  %953 = vmatprep.subr.mxu0 0.0
  %954 = vmatpush1.msra.mxu0 0.0
  %955 = vmatprep.subr.mxu0 0.0
  %956 = vmatpush1.msra.mxu0 0.0
  %957 = vmatprep.subr.mxu0 0.0
  %958 = vmatpush1.msra.mxu0 0.0
  %959 = vmatprep.subr.mxu0 0.0
  %960 = vmatpush1.msra.mxu0 0.0
  %961 = vmatprep.subr.mxu0 0.0
  %962 = vmatpush1.msra.mxu0 0.0
  %963 = vmatprep.subr.mxu0 0.0
  %964 = vmatpush1.msra.mxu0 0.0
  %965 = vmatprep.subr.mxu0 0.0
  %966 = vmatpush1.msra.mxu0 0.0
  %967 = vmatprep.mubr.f32.mxu0 0.0
  %968 = vmatmul.mubr.f32.gmra.mrb[0].mxu0 %v898
  %v969 = vpop.f32.mrb[0].mxu0
  %v970 = vadd.f32 0.0, %v969
  %v971 = vpop.f32.mrb[0].mxu0
  %972 = vdwg.mxu0
  %v973 = vadd.f32 %v807, %v970
  %s974 = scalar_lea.vmem %s3, 640
  %v975 = vld [vmem:[%s974] sm:$0xff]
  %v976 = vld [vmem:[%s974 + $0x8] sm:$0xff]
  %v977 = vld [vmem:[%s974 + $0x10] sm:$0xff]
  %v978 = vld [vmem:[%s974 + $0x18] sm:$0xff]
  %v979 = vld [vmem:[%s974 + $0x20] sm:$0xff]
  %v980 = vld [vmem:[%s974 + $0x28] sm:$0xff]
  %v981 = vld [vmem:[%s974 + $0x30] sm:$0xff]
  %v982 = vld [vmem:[%s974 + $0x38] sm:$0xff]
  %v983 = vld [vmem:[%s974 + $0x40] sm:$0xff]
  %v984 = vld [vmem:[%s974 + $0x48] sm:$0xff]
  %v985 = vld [vmem:[%s974 + $0x50] sm:$0xff]
  %v986 = vld [vmem:[%s974 + $0x58] sm:$0xff]
  %v987 = vld [vmem:[%s974 + $0x60] sm:$0xff]
  %v988 = vld [vmem:[%s974 + $0x68] sm:$0xff]
  %v989 = vld [vmem:[%s974 + $0x70] sm:$0xff]
  %v990 = vld [vmem:[%s974 + $0x78] sm:$0xff]
  %991 = vmatprep.subr.mxu0 0.0
  %992 = vmatpush1.msra.mxu0 %v975
  %993 = vmatprep.subr.mxu0 0.0
  %994 = vmatpush1.msra.mxu0 %v976
  %995 = vmatprep.subr.mxu0 0.0
  %996 = vmatpush1.msra.mxu0 %v977
  %997 = vmatprep.subr.mxu0 0.0
  %998 = vmatpush1.msra.mxu0 %v978
  %999 = vmatprep.subr.mxu0 0.0
  %1000 = vmatpush1.msra.mxu0 %v979
  %1001 = vmatprep.subr.mxu0 0.0
  %1002 = vmatpush1.msra.mxu0 %v980
  %1003 = vmatprep.subr.mxu0 0.0
  %1004 = vmatpush1.msra.mxu0 %v981
  %1005 = vmatprep.subr.mxu0 0.0
  %1006 = vmatpush1.msra.mxu0 %v982
  %1007 = vmatprep.subr.mxu0 0.0
  %1008 = vmatpush1.msra.mxu0 %v983
  %1009 = vmatprep.subr.mxu0 0.0
  %1010 = vmatpush1.msra.mxu0 %v984
  %1011 = vmatprep.subr.mxu0 0.0
  %1012 = vmatpush1.msra.mxu0 %v985
  %1013 = vmatprep.subr.mxu0 0.0
  %1014 = vmatpush1.msra.mxu0 %v986
  %1015 = vmatprep.subr.mxu0 0.0
  %1016 = vmatpush1.msra.mxu0 %v987
  %1017 = vmatprep.subr.mxu0 0.0
  %1018 = vmatpush1.msra.mxu0 %v988
  %1019 = vmatprep.subr.mxu0 0.0
  %1020 = vmatpush1.msra.mxu0 %v989
  %1021 = vmatprep.subr.mxu0 0.0
  %1022 = vmatpush1.msra.mxu0 %v990
  %1023 = vmatprep.subr.mxu0 0.0
  %1024 = vmatpush1.msra.mxu0 0.0
  %1025 = vmatprep.subr.mxu0 0.0
  %1026 = vmatpush1.msra.mxu0 0.0
  %1027 = vmatprep.subr.mxu0 0.0
  %1028 = vmatpush1.msra.mxu0 0.0
  %1029 = vmatprep.subr.mxu0 0.0
  %1030 = vmatpush1.msra.mxu0 0.0
  %1031 = vmatprep.subr.mxu0 0.0
  %1032 = vmatpush1.msra.mxu0 0.0
  %1033 = vmatprep.subr.mxu0 0.0
  %1034 = vmatpush1.msra.mxu0 0.0
  %1035 = vmatprep.subr.mxu0 0.0
  %1036 = vmatpush1.msra.mxu0 0.0
  %1037 = vmatprep.subr.mxu0 0.0
  %1038 = vmatpush1.msra.mxu0 0.0
  %1039 = vmatprep.subr.mxu0 0.0
  %1040 = vmatpush1.msra.mxu0 0.0
  %1041 = vmatprep.subr.mxu0 0.0
  %1042 = vmatpush1.msra.mxu0 0.0
  %1043 = vmatprep.subr.mxu0 0.0
  %1044 = vmatpush1.msra.mxu0 0.0
  %1045 = vmatprep.subr.mxu0 0.0
  %1046 = vmatpush1.msra.mxu0 0.0
  %1047 = vmatprep.subr.mxu0 0.0
  %1048 = vmatpush1.msra.mxu0 0.0
  %1049 = vmatprep.subr.mxu0 0.0
  %1050 = vmatpush1.msra.mxu0 0.0
  %1051 = vmatprep.subr.mxu0 0.0
  %1052 = vmatpush1.msra.mxu0 0.0
  %1053 = vmatprep.subr.mxu0 0.0
  %1054 = vmatpush1.msra.mxu0 0.0
  %1055 = vmatprep.mubr.f32.mxu0 0.0
  %1056 = vmatmul.mubr.f32.gmra.mrb[0].mxu0 %v137
  %v1057 = vpop.f32.mrb[0].mxu0
  %v1058 = vadd.f32 0.0, %v1057
  %v1059 = vpop.f32.mrb[0].mxu0
  %1060 = vdwg.mxu0
  %s1061 = scalar_lea.vmem %s4, 40
  %v1062 = vld [vmem:[%s1061] sm:$0xff]
  %v1064 = vsel %vm226, %v1062, 0
  %v1067 = vsel %vm230, %v1058, 0
  %1069 = vmatprep.subr.mxu0 0.0
  %1070 = vmatpush1.msra.mxu0 %v1067
  %1071 = vmatprep.subr.mxu0 0.0
  %1072 = vmatpush1.msra.mxu0 0.0
  %1073 = vmatprep.subr.mxu0 0.0
  %1074 = vmatpush1.msra.mxu0 0.0
  %1075 = vmatprep.subr.mxu0 0.0
  %1076 = vmatpush1.msra.mxu0 0.0
  %1077 = vmatprep.subr.mxu0 0.0
  %1078 = vmatpush1.msra.mxu0 0.0
  %1079 = vmatprep.subr.mxu0 0.0
  %1080 = vmatpush1.msra.mxu0 0.0
  %1081 = vmatprep.subr.mxu0 0.0
  %1082 = vmatpush1.msra.mxu0 0.0
  %1083 = vmatprep.subr.mxu0 0.0
  %1084 = vmatpush1.msra.mxu0 0.0
  %1085 = vmatprep.subr.mxu0 0.0
  %1086 = vmatpush1.msra.mxu0 0.0
  %1087 = vmatprep.subr.mxu0 0.0
  %1088 = vmatpush1.msra.mxu0 0.0
  %1089 = vmatprep.subr.mxu0 0.0
  %1090 = vmatpush1.msra.mxu0 0.0
  %1091 = vmatprep.subr.mxu0 0.0
  %1092 = vmatpush1.msra.mxu0 0.0
  %1093 = vmatprep.subr.mxu0 0.0
  %1094 = vmatpush1.msra.mxu0 0.0
  %1095 = vmatprep.subr.mxu0 0.0
  %1096 = vmatpush1.msra.mxu0 0.0
  %1097 = vmatprep.subr.mxu0 0.0
  %1098 = vmatpush1.msra.mxu0 0.0
  %1099 = vmatprep.subr.mxu0 0.0
  %1100 = vmatpush1.msra.mxu0 0.0
  %1101 = vmatprep.subr.mxu0 0.0
  %1102 = vmatpush1.msra.mxu0 0.0
  %1103 = vmatprep.subr.mxu0 0.0
  %1104 = vmatpush1.msra.mxu0 0.0
  %1105 = vmatprep.subr.mxu0 0.0
  %1106 = vmatpush1.msra.mxu0 0.0
  %1107 = vmatprep.subr.mxu0 0.0
  %1108 = vmatpush1.msra.mxu0 0.0
  %1109 = vmatprep.subr.mxu0 0.0
  %1110 = vmatpush1.msra.mxu0 0.0
  %1111 = vmatprep.subr.mxu0 0.0
  %1112 = vmatpush1.msra.mxu0 0.0
  %1113 = vmatprep.subr.mxu0 0.0
  %1114 = vmatpush1.msra.mxu0 0.0
  %1115 = vmatprep.subr.mxu0 0.0
  %1116 = vmatpush1.msra.mxu0 0.0
  %1117 = vmatprep.subr.mxu0 0.0
  %1118 = vmatpush1.msra.mxu0 0.0
  %1119 = vmatprep.subr.mxu0 0.0
  %1120 = vmatpush1.msra.mxu0 0.0
  %1121 = vmatprep.subr.mxu0 0.0
  %1122 = vmatpush1.msra.mxu0 0.0
  %1123 = vmatprep.subr.mxu0 0.0
  %1124 = vmatpush1.msra.mxu0 0.0
  %1125 = vmatprep.subr.mxu0 0.0
  %1126 = vmatpush1.msra.mxu0 0.0
  %1127 = vmatprep.subr.mxu0 0.0
  %1128 = vmatpush1.msra.mxu0 0.0
  %1129 = vmatprep.subr.mxu0 0.0
  %1130 = vmatpush1.msra.mxu0 0.0
  %1131 = vmatprep.subr.mxu0 0.0
  %1132 = vmatpush1.msra.mxu0 0.0
  %1133 = vmatprep.mubr.f32.mxu0 0.0
  %1134 = vmatmul.mubr.f32.gmra.mrb[0].mxu0 %v1064
  %v1135 = vpop.f32.mrb[0].mxu0
  %v1136 = vadd.f32 0.0, %v1135
  %v1137 = vpop.f32.mrb[0].mxu0
  %1138 = vdwg.mxu0
  %v1139 = vadd.f32 %v973, %v1136
  %s1140 = scalar_lea.vmem %s3, 768
  %v1141 = vld [vmem:[%s1140] sm:$0xff]
  %v1142 = vld [vmem:[%s1140 + $0x8] sm:$0xff]
  %v1143 = vld [vmem:[%s1140 + $0x10] sm:$0xff]
  %v1144 = vld [vmem:[%s1140 + $0x18] sm:$0xff]
  %v1145 = vld [vmem:[%s1140 + $0x20] sm:$0xff]
  %v1146 = vld [vmem:[%s1140 + $0x28] sm:$0xff]
  %v1147 = vld [vmem:[%s1140 + $0x30] sm:$0xff]
  %v1148 = vld [vmem:[%s1140 + $0x38] sm:$0xff]
  %v1149 = vld [vmem:[%s1140 + $0x40] sm:$0xff]
  %v1150 = vld [vmem:[%s1140 + $0x48] sm:$0xff]
  %v1151 = vld [vmem:[%s1140 + $0x50] sm:$0xff]
  %v1152 = vld [vmem:[%s1140 + $0x58] sm:$0xff]
  %v1153 = vld [vmem:[%s1140 + $0x60] sm:$0xff]
  %v1154 = vld [vmem:[%s1140 + $0x68] sm:$0xff]
  %v1155 = vld [vmem:[%s1140 + $0x70] sm:$0xff]
  %v1156 = vld [vmem:[%s1140 + $0x78] sm:$0xff]
  %1157 = vmatprep.subr.mxu0 0.0
  %1158 = vmatpush1.msra.mxu0 %v1141
  %1159 = vmatprep.subr.mxu0 0.0
  %1160 = vmatpush1.msra.mxu0 %v1142
  %1161 = vmatprep.subr.mxu0 0.0
  %1162 = vmatpush1.msra.mxu0 %v1143
  %1163 = vmatprep.subr.mxu0 0.0
  %1164 = vmatpush1.msra.mxu0 %v1144
  %1165 = vmatprep.subr.mxu0 0.0
  %1166 = vmatpush1.msra.mxu0 %v1145
  %1167 = vmatprep.subr.mxu0 0.0
  %1168 = vmatpush1.msra.mxu0 %v1146
  %1169 = vmatprep.subr.mxu0 0.0
  %1170 = vmatpush1.msra.mxu0 %v1147
  %1171 = vmatprep.subr.mxu0 0.0
  %1172 = vmatpush1.msra.mxu0 %v1148
  %1173 = vmatprep.subr.mxu0 0.0
  %1174 = vmatpush1.msra.mxu0 %v1149
  %1175 = vmatprep.subr.mxu0 0.0
  %1176 = vmatpush1.msra.mxu0 %v1150
  %1177 = vmatprep.subr.mxu0 0.0
  %1178 = vmatpush1.msra.mxu0 %v1151
  %1179 = vmatprep.subr.mxu0 0.0
  %1180 = vmatpush1.msra.mxu0 %v1152
  %1181 = vmatprep.subr.mxu0 0.0
  %1182 = vmatpush1.msra.mxu0 %v1153
  %1183 = vmatprep.subr.mxu0 0.0
  %1184 = vmatpush1.msra.mxu0 %v1154
  %1185 = vmatprep.subr.mxu0 0.0
  %1186 = vmatpush1.msra.mxu0 %v1155
  %1187 = vmatprep.subr.mxu0 0.0
  %1188 = vmatpush1.msra.mxu0 %v1156
  %1189 = vmatprep.subr.mxu0 0.0
  %1190 = vmatpush1.msra.mxu0 0.0
  %1191 = vmatprep.subr.mxu0 0.0
  %1192 = vmatpush1.msra.mxu0 0.0
  %1193 = vmatprep.subr.mxu0 0.0
  %1194 = vmatpush1.msra.mxu0 0.0
  %1195 = vmatprep.subr.mxu0 0.0
  %1196 = vmatpush1.msra.mxu0 0.0
  %1197 = vmatprep.subr.mxu0 0.0
  %1198 = vmatpush1.msra.mxu0 0.0
  %1199 = vmatprep.subr.mxu0 0.0
  %1200 = vmatpush1.msra.mxu0 0.0
  %1201 = vmatprep.subr.mxu0 0.0
  %1202 = vmatpush1.msra.mxu0 0.0
  %1203 = vmatprep.subr.mxu0 0.0
  %1204 = vmatpush1.msra.mxu0 0.0
  %1205 = vmatprep.subr.mxu0 0.0
  %1206 = vmatpush1.msra.mxu0 0.0
  %1207 = vmatprep.subr.mxu0 0.0
  %1208 = vmatpush1.msra.mxu0 0.0
  %1209 = vmatprep.subr.mxu0 0.0
  %1210 = vmatpush1.msra.mxu0 0.0
  %1211 = vmatprep.subr.mxu0 0.0
  %1212 = vmatpush1.msra.mxu0 0.0
  %1213 = vmatprep.subr.mxu0 0.0
  %1214 = vmatpush1.msra.mxu0 0.0
  %1215 = vmatprep.subr.mxu0 0.0
  %1216 = vmatpush1.msra.mxu0 0.0
  %1217 = vmatprep.subr.mxu0 0.0
  %1218 = vmatpush1.msra.mxu0 0.0
  %1219 = vmatprep.subr.mxu0 0.0
  %1220 = vmatpush1.msra.mxu0 0.0
  %1221 = vmatprep.mubr.f32.mxu0 0.0
  %1222 = vmatmul.mubr.f32.gmra.mrb[0].mxu0 %v137
  %v1223 = vpop.f32.mrb[0].mxu0
  %v1224 = vadd.f32 0.0, %v1223
  %v1225 = vpop.f32.mrb[0].mxu0
  %1226 = vdwg.mxu0
  %s1227 = scalar_lea.vmem %s4, 48
  %v1228 = vld [vmem:[%s1227] sm:$0xff]
  %v1230 = vsel %vm226, %v1228, 0
  %v1233 = vsel %vm230, %v1224, 0
  %1235 = vmatprep.subr.mxu0 0.0
  %1236 = vmatpush1.msra.mxu0 %v1233
  %1237 = vmatprep.subr.mxu0 0.0
  %1238 = vmatpush1.msra.mxu0 0.0
  %1239 = vmatprep.subr.mxu0 0.0
  %1240 = vmatpush1.msra.mxu0 0.0
  %1241 = vmatprep.subr.mxu0 0.0
  %1242 = vmatpush1.msra.mxu0 0.0
  %1243 = vmatprep.subr.mxu0 0.0
  %1244 = vmatpush1.msra.mxu0 0.0
  %1245 = vmatprep.subr.mxu0 0.0
  %1246 = vmatpush1.msra.mxu0 0.0
  %1247 = vmatprep.subr.mxu0 0.0
  %1248 = vmatpush1.msra.mxu0 0.0
  %1249 = vmatprep.subr.mxu0 0.0
  %1250 = vmatpush1.msra.mxu0 0.0
  %1251 = vmatprep.subr.mxu0 0.0
  %1252 = vmatpush1.msra.mxu0 0.0
  %1253 = vmatprep.subr.mxu0 0.0
  %1254 = vmatpush1.msra.mxu0 0.0
  %1255 = vmatprep.subr.mxu0 0.0
  %1256 = vmatpush1.msra.mxu0 0.0
  %1257 = vmatprep.subr.mxu0 0.0
  %1258 = vmatpush1.msra.mxu0 0.0
  %1259 = vmatprep.subr.mxu0 0.0
  %1260 = vmatpush1.msra.mxu0 0.0
  %1261 = vmatprep.subr.mxu0 0.0
  %1262 = vmatpush1.msra.mxu0 0.0
  %1263 = vmatprep.subr.mxu0 0.0
  %1264 = vmatpush1.msra.mxu0 0.0
  %1265 = vmatprep.subr.mxu0 0.0
  %1266 = vmatpush1.msra.mxu0 0.0
  %1267 = vmatprep.subr.mxu0 0.0
  %1268 = vmatpush1.msra.mxu0 0.0
  %1269 = vmatprep.subr.mxu0 0.0
  %1270 = vmatpush1.msra.mxu0 0.0
  %1271 = vmatprep.subr.mxu0 0.0
  %1272 = vmatpush1.msra.mxu0 0.0
  %1273 = vmatprep.subr.mxu0 0.0
  %1274 = vmatpush1.msra.mxu0 0.0
  %1275 = vmatprep.subr.mxu0 0.0
  %1276 = vmatpush1.msra.mxu0 0.0
  %1277 = vmatprep.subr.mxu0 0.0
  %1278 = vmatpush1.msra.mxu0 0.0
  %1279 = vmatprep.subr.mxu0 0.0
  %1280 = vmatpush1.msra.mxu0 0.0
  %1281 = vmatprep.subr.mxu0 0.0
  %1282 = vmatpush1.msra.mxu0 0.0
  %1283 = vmatprep.subr.mxu0 0.0
  %1284 = vmatpush1.msra.mxu0 0.0
  %1285 = vmatprep.subr.mxu0 0.0
  %1286 = vmatpush1.msra.mxu0 0.0
  %1287 = vmatprep.subr.mxu0 0.0
  %1288 = vmatpush1.msra.mxu0 0.0
  %1289 = vmatprep.subr.mxu0 0.0
  %1290 = vmatpush1.msra.mxu0 0.0
  %1291 = vmatprep.subr.mxu0 0.0
  %1292 = vmatpush1.msra.mxu0 0.0
  %1293 = vmatprep.subr.mxu0 0.0
  %1294 = vmatpush1.msra.mxu0 0.0
  %1295 = vmatprep.subr.mxu0 0.0
  %1296 = vmatpush1.msra.mxu0 0.0
  %1297 = vmatprep.subr.mxu0 0.0
  %1298 = vmatpush1.msra.mxu0 0.0
  %1299 = vmatprep.mubr.f32.mxu0 0.0
  %1300 = vmatmul.mubr.f32.gmra.mrb[0].mxu0 %v1230
  %v1301 = vpop.f32.mrb[0].mxu0
  %v1302 = vadd.f32 0.0, %v1301
  %v1303 = vpop.f32.mrb[0].mxu0
  %1304 = vdwg.mxu0
  %v1305 = vadd.f32 %v1139, %v1302
  %s1306 = scalar_lea.vmem %s3, 896
  %v1307 = vld [vmem:[%s1306] sm:$0xff]
  %v1308 = vld [vmem:[%s1306 + $0x8] sm:$0xff]
  %v1309 = vld [vmem:[%s1306 + $0x10] sm:$0xff]
  %v1310 = vld [vmem:[%s1306 + $0x18] sm:$0xff]
  %v1311 = vld [vmem:[%s1306 + $0x20] sm:$0xff]
  %v1312 = vld [vmem:[%s1306 + $0x28] sm:$0xff]
  %v1313 = vld [vmem:[%s1306 + $0x30] sm:$0xff]
  %v1314 = vld [vmem:[%s1306 + $0x38] sm:$0xff]
  %v1315 = vld [vmem:[%s1306 + $0x40] sm:$0xff]
  %v1316 = vld [vmem:[%s1306 + $0x48] sm:$0xff]
  %v1317 = vld [vmem:[%s1306 + $0x50] sm:$0xff]
  %v1318 = vld [vmem:[%s1306 + $0x58] sm:$0xff]
  %v1319 = vld [vmem:[%s1306 + $0x60] sm:$0xff]
  %v1320 = vld [vmem:[%s1306 + $0x68] sm:$0xff]
  %v1321 = vld [vmem:[%s1306 + $0x70] sm:$0xff]
  %v1322 = vld [vmem:[%s1306 + $0x78] sm:$0xff]
  %1323 = vmatprep.subr.mxu0 0.0
  %1324 = vmatpush1.msra.mxu0 %v1307
  %1325 = vmatprep.subr.mxu0 0.0
  %1326 = vmatpush1.msra.mxu0 %v1308
  %1327 = vmatprep.subr.mxu0 0.0
  %1328 = vmatpush1.msra.mxu0 %v1309
  %1329 = vmatprep.subr.mxu0 0.0
  %1330 = vmatpush1.msra.mxu0 %v1310
  %1331 = vmatprep.subr.mxu0 0.0
  %1332 = vmatpush1.msra.mxu0 %v1311
  %1333 = vmatprep.subr.mxu0 0.0
  %1334 = vmatpush1.msra.mxu0 %v1312
  %1335 = vmatprep.subr.mxu0 0.0
  %1336 = vmatpush1.msra.mxu0 %v1313
  %1337 = vmatprep.subr.mxu0 0.0
  %1338 = vmatpush1.msra.mxu0 %v1314
  %1339 = vmatprep.subr.mxu0 0.0
  %1340 = vmatpush1.msra.mxu0 %v1315
  %1341 = vmatprep.subr.mxu0 0.0
  %1342 = vmatpush1.msra.mxu0 %v1316
  %1343 = vmatprep.subr.mxu0 0.0
  %1344 = vmatpush1.msra.mxu0 %v1317
  %1345 = vmatprep.subr.mxu0 0.0
  %1346 = vmatpush1.msra.mxu0 %v1318
  %1347 = vmatprep.subr.mxu0 0.0
  %1348 = vmatpush1.msra.mxu0 %v1319
  %1349 = vmatprep.subr.mxu0 0.0
  %1350 = vmatpush1.msra.mxu0 %v1320
  %1351 = vmatprep.subr.mxu0 0.0
  %1352 = vmatpush1.msra.mxu0 %v1321
  %1353 = vmatprep.subr.mxu0 0.0
  %1354 = vmatpush1.msra.mxu0 %v1322
  %1355 = vmatprep.subr.mxu0 0.0
  %1356 = vmatpush1.msra.mxu0 0.0
  %1357 = vmatprep.subr.mxu0 0.0
  %1358 = vmatpush1.msra.mxu0 0.0
  %1359 = vmatprep.subr.mxu0 0.0
  %1360 = vmatpush1.msra.mxu0 0.0
  %1361 = vmatprep.subr.mxu0 0.0
  %1362 = vmatpush1.msra.mxu0 0.0
  %1363 = vmatprep.subr.mxu0 0.0
  %1364 = vmatpush1.msra.mxu0 0.0
  %1365 = vmatprep.subr.mxu0 0.0
  %1366 = vmatpush1.msra.mxu0 0.0
  %1367 = vmatprep.subr.mxu0 0.0
  %1368 = vmatpush1.msra.mxu0 0.0
  %1369 = vmatprep.subr.mxu0 0.0
  %1370 = vmatpush1.msra.mxu0 0.0
  %1371 = vmatprep.subr.mxu0 0.0
  %1372 = vmatpush1.msra.mxu0 0.0
  %1373 = vmatprep.subr.mxu0 0.0
  %1374 = vmatpush1.msra.mxu0 0.0
  %1375 = vmatprep.subr.mxu0 0.0
  %1376 = vmatpush1.msra.mxu0 0.0
  %1377 = vmatprep.subr.mxu0 0.0
  %1378 = vmatpush1.msra.mxu0 0.0
  %1379 = vmatprep.subr.mxu0 0.0
  %1380 = vmatpush1.msra.mxu0 0.0
  %1381 = vmatprep.subr.mxu0 0.0
  %1382 = vmatpush1.msra.mxu0 0.0
  %1383 = vmatprep.subr.mxu0 0.0
  %1384 = vmatpush1.msra.mxu0 0.0
  %1385 = vmatprep.subr.mxu0 0.0
  %1386 = vmatpush1.msra.mxu0 0.0
  %1387 = vmatprep.mubr.f32.mxu0 0.0
  %1388 = vmatmul.mubr.f32.gmra.mrb[0].mxu0 %v137
  %v1389 = vpop.f32.mrb[0].mxu0
  %v1390 = vadd.f32 0.0, %v1389
  %v1391 = vpop.f32.mrb[0].mxu0
  %1392 = vdwg.mxu0
  %s1393 = scalar_lea.vmem %s4, 56
  %v1394 = vld [vmem:[%s1393] sm:$0xff]
  %v1396 = vsel %vm226, %v1394, 0
  %v1399 = vsel %vm230, %v1390, 0
  %1401 = vmatprep.subr.mxu0 0.0
  %1402 = vmatpush1.msra.mxu0 %v1399
  %1403 = vmatprep.subr.mxu0 0.0
  %1404 = vmatpush1.msra.mxu0 0.0
  %1405 = vmatprep.subr.mxu0 0.0
  %1406 = vmatpush1.msra.mxu0 0.0
  %1407 = vmatprep.subr.mxu0 0.0
  %1408 = vmatpush1.msra.mxu0 0.0
  %1409 = vmatprep.subr.mxu0 0.0
  %1410 = vmatpush1.msra.mxu0 0.0
  %1411 = vmatprep.subr.mxu0 0.0
  %1412 = vmatpush1.msra.mxu0 0.0
  %1413 = vmatprep.subr.mxu0 0.0
  %1414 = vmatpush1.msra.mxu0 0.0
  %1415 = vmatprep.subr.mxu0 0.0
  %1416 = vmatpush1.msra.mxu0 0.0
  %1417 = vmatprep.subr.mxu0 0.0
  %1418 = vmatpush1.msra.mxu0 0.0
  %1419 = vmatprep.subr.mxu0 0.0
  %1420 = vmatpush1.msra.mxu0 0.0
  %1421 = vmatprep.subr.mxu0 0.0
  %1422 = vmatpush1.msra.mxu0 0.0
  %1423 = vmatprep.subr.mxu0 0.0
  %1424 = vmatpush1.msra.mxu0 0.0
  %1425 = vmatprep.subr.mxu0 0.0
  %1426 = vmatpush1.msra.mxu0 0.0
  %1427 = vmatprep.subr.mxu0 0.0
  %1428 = vmatpush1.msra.mxu0 0.0
  %1429 = vmatprep.subr.mxu0 0.0
  %1430 = vmatpush1.msra.mxu0 0.0
  %1431 = vmatprep.subr.mxu0 0.0
  %1432 = vmatpush1.msra.mxu0 0.0
  %1433 = vmatprep.subr.mxu0 0.0
  %1434 = vmatpush1.msra.mxu0 0.0
  %1435 = vmatprep.subr.mxu0 0.0
  %1436 = vmatpush1.msra.mxu0 0.0
  %1437 = vmatprep.subr.mxu0 0.0
  %1438 = vmatpush1.msra.mxu0 0.0
  %1439 = vmatprep.subr.mxu0 0.0
  %1440 = vmatpush1.msra.mxu0 0.0
  %1441 = vmatprep.subr.mxu0 0.0
  %1442 = vmatpush1.msra.mxu0 0.0
  %1443 = vmatprep.subr.mxu0 0.0
  %1444 = vmatpush1.msra.mxu0 0.0
  %1445 = vmatprep.subr.mxu0 0.0
  %1446 = vmatpush1.msra.mxu0 0.0
  %1447 = vmatprep.subr.mxu0 0.0
  %1448 = vmatpush1.msra.mxu0 0.0
  %1449 = vmatprep.subr.mxu0 0.0
  %1450 = vmatpush1.msra.mxu0 0.0
  %1451 = vmatprep.subr.mxu0 0.0
  %1452 = vmatpush1.msra.mxu0 0.0
  %1453 = vmatprep.subr.mxu0 0.0
  %1454 = vmatpush1.msra.mxu0 0.0
  %1455 = vmatprep.subr.mxu0 0.0
  %1456 = vmatpush1.msra.mxu0 0.0
  %1457 = vmatprep.subr.mxu0 0.0
  %1458 = vmatpush1.msra.mxu0 0.0
  %1459 = vmatprep.subr.mxu0 0.0
  %1460 = vmatpush1.msra.mxu0 0.0
  %1461 = vmatprep.subr.mxu0 0.0
  %1462 = vmatpush1.msra.mxu0 0.0
  %1463 = vmatprep.subr.mxu0 0.0
  %1464 = vmatpush1.msra.mxu0 0.0
  %1465 = vmatprep.mubr.f32.mxu0 0.0
  %1466 = vmatmul.mubr.f32.gmra.mrb[0].mxu0 %v1396
  %v1467 = vpop.f32.mrb[0].mxu0
  %v1468 = vadd.f32 0.0, %v1467
  %v1469 = vpop.f32.mrb[0].mxu0
  %1470 = vdwg.mxu0
  %v1471 = vadd.f32 %v1305, %v1468
  %s1472 = scalar_lea.vmem %s3, 1024
  %v1473 = vld [vmem:[%s1472] sm:$0xff]
  %v1474 = vld [vmem:[%s1472 + $0x8] sm:$0xff]
  %v1475 = vld [vmem:[%s1472 + $0x10] sm:$0xff]
  %v1476 = vld [vmem:[%s1472 + $0x18] sm:$0xff]
  %v1477 = vld [vmem:[%s1472 + $0x20] sm:$0xff]
  %v1478 = vld [vmem:[%s1472 + $0x28] sm:$0xff]
  %v1479 = vld [vmem:[%s1472 + $0x30] sm:$0xff]
  %v1480 = vld [vmem:[%s1472 + $0x38] sm:$0xff]
  %v1481 = vld [vmem:[%s1472 + $0x40] sm:$0xff]
  %v1482 = vld [vmem:[%s1472 + $0x48] sm:$0xff]
  %v1483 = vld [vmem:[%s1472 + $0x50] sm:$0xff]
  %v1484 = vld [vmem:[%s1472 + $0x58] sm:$0xff]
  %v1485 = vld [vmem:[%s1472 + $0x60] sm:$0xff]
  %v1486 = vld [vmem:[%s1472 + $0x68] sm:$0xff]
  %v1487 = vld [vmem:[%s1472 + $0x70] sm:$0xff]
  %v1488 = vld [vmem:[%s1472 + $0x78] sm:$0xff]
  %1489 = vmatprep.subr.mxu0 0.0
  %1490 = vmatpush1.msra.mxu0 %v1473
  %1491 = vmatprep.subr.mxu0 0.0
  %1492 = vmatpush1.msra.mxu0 %v1474
  %1493 = vmatprep.subr.mxu0 0.0
  %1494 = vmatpush1.msra.mxu0 %v1475
  %1495 = vmatprep.subr.mxu0 0.0
  %1496 = vmatpush1.msra.mxu0 %v1476
  %1497 = vmatprep.subr.mxu0 0.0
  %1498 = vmatpush1.msra.mxu0 %v1477
  %1499 = vmatprep.subr.mxu0 0.0
  %1500 = vmatpush1.msra.mxu0 %v1478
  %1501 = vmatprep.subr.mxu0 0.0
  %1502 = vmatpush1.msra.mxu0 %v1479
  %1503 = vmatprep.subr.mxu0 0.0
  %1504 = vmatpush1.msra.mxu0 %v1480
  %1505 = vmatprep.subr.mxu0 0.0
  %1506 = vmatpush1.msra.mxu0 %v1481
  %1507 = vmatprep.subr.mxu0 0.0
  %1508 = vmatpush1.msra.mxu0 %v1482
  %1509 = vmatprep.subr.mxu0 0.0
  %1510 = vmatpush1.msra.mxu0 %v1483
  %1511 = vmatprep.subr.mxu0 0.0
  %1512 = vmatpush1.msra.mxu0 %v1484
  %1513 = vmatprep.subr.mxu0 0.0
  %1514 = vmatpush1.msra.mxu0 %v1485
  %1515 = vmatprep.subr.mxu0 0.0
  %1516 = vmatpush1.msra.mxu0 %v1486
  %1517 = vmatprep.subr.mxu0 0.0
  %1518 = vmatpush1.msra.mxu0 %v1487
  %1519 = vmatprep.subr.mxu0 0.0
  %1520 = vmatpush1.msra.mxu0 %v1488
  %1521 = vmatprep.subr.mxu0 0.0
  %1522 = vmatpush1.msra.mxu0 0.0
  %1523 = vmatprep.subr.mxu0 0.0
  %1524 = vmatpush1.msra.mxu0 0.0
  %1525 = vmatprep.subr.mxu0 0.0
  %1526 = vmatpush1.msra.mxu0 0.0
  %1527 = vmatprep.subr.mxu0 0.0
  %1528 = vmatpush1.msra.mxu0 0.0
  %1529 = vmatprep.subr.mxu0 0.0
  %1530 = vmatpush1.msra.mxu0 0.0
  %1531 = vmatprep.subr.mxu0 0.0
  %1532 = vmatpush1.msra.mxu0 0.0
  %1533 = vmatprep.subr.mxu0 0.0
  %1534 = vmatpush1.msra.mxu0 0.0
  %1535 = vmatprep.subr.mxu0 0.0
  %1536 = vmatpush1.msra.mxu0 0.0
  %1537 = vmatprep.subr.mxu0 0.0
  %1538 = vmatpush1.msra.mxu0 0.0
  %1539 = vmatprep.subr.mxu0 0.0
  %1540 = vmatpush1.msra.mxu0 0.0
  %1541 = vmatprep.subr.mxu0 0.0
  %1542 = vmatpush1.msra.mxu0 0.0
  %1543 = vmatprep.subr.mxu0 0.0
  %1544 = vmatpush1.msra.mxu0 0.0
  %1545 = vmatprep.subr.mxu0 0.0
  %1546 = vmatpush1.msra.mxu0 0.0
  %1547 = vmatprep.subr.mxu0 0.0
  %1548 = vmatpush1.msra.mxu0 0.0
  %1549 = vmatprep.subr.mxu0 0.0
  %1550 = vmatpush1.msra.mxu0 0.0
  %1551 = vmatprep.subr.mxu0 0.0
  %1552 = vmatpush1.msra.mxu0 0.0
  %1553 = vmatprep.mubr.f32.mxu0 0.0
  %1554 = vmatmul.mubr.f32.gmra.mrb[0].mxu0 %v137
  %v1555 = vpop.f32.mrb[0].mxu0
  %v1556 = vadd.f32 0.0, %v1555
  %v1557 = vpop.f32.mrb[0].mxu0
  %1558 = vdwg.mxu0
  %s1559 = scalar_lea.vmem %s4, 64
  %v1560 = vld [vmem:[%s1559] sm:$0xff]
  %v1562 = vsel %vm226, %v1560, 0
  %v1565 = vsel %vm230, %v1556, 0
  %1567 = vmatprep.subr.mxu0 0.0
  %1568 = vmatpush1.msra.mxu0 %v1565
  %1569 = vmatprep.subr.mxu0 0.0
  %1570 = vmatpush1.msra.mxu0 0.0
  %1571 = vmatprep.subr.mxu0 0.0
  %1572 = vmatpush1.msra.mxu0 0.0
  %1573 = vmatprep.subr.mxu0 0.0
  %1574 = vmatpush1.msra.mxu0 0.0
  %1575 = vmatprep.subr.mxu0 0.0
  %1576 = vmatpush1.msra.mxu0 0.0
  %1577 = vmatprep.subr.mxu0 0.0
  %1578 = vmatpush1.msra.mxu0 0.0
  %1579 = vmatprep.subr.mxu0 0.0
  %1580 = vmatpush1.msra.mxu0 0.0
  %1581 = vmatprep.subr.mxu0 0.0
  %1582 = vmatpush1.msra.mxu0 0.0
  %1583 = vmatprep.subr.mxu0 0.0
  %1584 = vmatpush1.msra.mxu0 0.0
  %1585 = vmatprep.subr.mxu0 0.0
  %1586 = vmatpush1.msra.mxu0 0.0
  %1587 = vmatprep.subr.mxu0 0.0
  %1588 = vmatpush1.msra.mxu0 0.0
  %1589 = vmatprep.subr.mxu0 0.0
  %1590 = vmatpush1.msra.mxu0 0.0
  %1591 = vmatprep.subr.mxu0 0.0
  %1592 = vmatpush1.msra.mxu0 0.0
  %1593 = vmatprep.subr.mxu0 0.0
  %1594 = vmatpush1.msra.mxu0 0.0
  %1595 = vmatprep.subr.mxu0 0.0
  %1596 = vmatpush1.msra.mxu0 0.0
  %1597 = vmatprep.subr.mxu0 0.0
  %1598 = vmatpush1.msra.mxu0 0.0
  %1599 = vmatprep.subr.mxu0 0.0
  %1600 = vmatpush1.msra.mxu0 0.0
  %1601 = vmatprep.subr.mxu0 0.0
  %1602 = vmatpush1.msra.mxu0 0.0
  %1603 = vmatprep.subr.mxu0 0.0
  %1604 = vmatpush1.msra.mxu0 0.0
  %1605 = vmatprep.subr.mxu0 0.0
  %1606 = vmatpush1.msra.mxu0 0.0
  %1607 = vmatprep.subr.mxu0 0.0
  %1608 = vmatpush1.msra.mxu0 0.0
  %1609 = vmatprep.subr.mxu0 0.0
  %1610 = vmatpush1.msra.mxu0 0.0
  %1611 = vmatprep.subr.mxu0 0.0
  %1612 = vmatpush1.msra.mxu0 0.0
  %1613 = vmatprep.subr.mxu0 0.0
  %1614 = vmatpush1.msra.mxu0 0.0
  %1615 = vmatprep.subr.mxu0 0.0
  %1616 = vmatpush1.msra.mxu0 0.0
  %1617 = vmatprep.subr.mxu0 0.0
  %1618 = vmatpush1.msra.mxu0 0.0
  %1619 = vmatprep.subr.mxu0 0.0
  %1620 = vmatpush1.msra.mxu0 0.0
  %1621 = vmatprep.subr.mxu0 0.0
  %1622 = vmatpush1.msra.mxu0 0.0
  %1623 = vmatprep.subr.mxu0 0.0
  %1624 = vmatpush1.msra.mxu0 0.0
  %1625 = vmatprep.subr.mxu0 0.0
  %1626 = vmatpush1.msra.mxu0 0.0
  %1627 = vmatprep.subr.mxu0 0.0
  %1628 = vmatpush1.msra.mxu0 0.0
  %1629 = vmatprep.subr.mxu0 0.0
  %1630 = vmatpush1.msra.mxu0 0.0
  %1631 = vmatprep.mubr.f32.mxu0 0.0
  %1632 = vmatmul.mubr.f32.gmra.mrb[0].mxu0 %v1562
  %v1633 = vpop.f32.mrb[0].mxu0
  %v1634 = vadd.f32 0.0, %v1633
  %v1635 = vpop.f32.mrb[0].mxu0
  %1636 = vdwg.mxu0
  %v1637 = vadd.f32 %v1471, %v1634
  %v1638 = vmax.f32 %v1637, 0.0
  %v1639 = vld [vmem:[%s8] sm:$0x1]
  %v1640 = vld [vmem:[%s6] sm:$0xff]
  %v1641 = vld [vmem:[%s6 + $0x8] sm:$0xff]
  %v1642 = vld [vmem:[%s6 + $0x10] sm:$0xff]
  %v1643 = vld [vmem:[%s6 + $0x18] sm:$0xff]
  %vm1644 = vcmask 261120
  %v1646 = vsel %vm1644, %v1638, 0
  %1648 = vmatprep.subr.mxu0 0.0
  %1649 = vmatpush1.msra.mxu0 %v1640
  %1650 = vmatprep.subr.mxu0 0.0
  %1651 = vmatpush1.msra.mxu0 %v1641
  %1652 = vmatprep.subr.mxu0 0.0
  %1653 = vmatpush1.msra.mxu0 %v1642
  %1654 = vmatprep.subr.mxu0 0.0
  %1655 = vmatpush1.msra.mxu0 %v1643
  %1656 = vmatprep.subr.mxu0 0.0
  %1657 = vmatpush1.msra.mxu0 0.0
  %1658 = vmatprep.subr.mxu0 0.0
  %1659 = vmatpush1.msra.mxu0 0.0
  %1660 = vmatprep.subr.mxu0 0.0
  %1661 = vmatpush1.msra.mxu0 0.0
  %1662 = vmatprep.subr.mxu0 0.0
  %1663 = vmatpush1.msra.mxu0 0.0
  %1664 = vmatprep.subr.mxu0 0.0
  %1665 = vmatpush1.msra.mxu0 0.0
  %1666 = vmatprep.subr.mxu0 0.0
  %1667 = vmatpush1.msra.mxu0 0.0
  %1668 = vmatprep.subr.mxu0 0.0
  %1669 = vmatpush1.msra.mxu0 0.0
  %1670 = vmatprep.subr.mxu0 0.0
  %1671 = vmatpush1.msra.mxu0 0.0
  %1672 = vmatprep.subr.mxu0 0.0
  %1673 = vmatpush1.msra.mxu0 0.0
  %1674 = vmatprep.subr.mxu0 0.0
  %1675 = vmatpush1.msra.mxu0 0.0
  %1676 = vmatprep.subr.mxu0 0.0
  %1677 = vmatpush1.msra.mxu0 0.0
  %1678 = vmatprep.subr.mxu0 0.0
  %1679 = vmatpush1.msra.mxu0 0.0
  %1680 = vmatprep.subr.mxu0 0.0
  %1681 = vmatpush1.msra.mxu0 0.0
  %1682 = vmatprep.subr.mxu0 0.0
  %1683 = vmatpush1.msra.mxu0 0.0
  %1684 = vmatprep.subr.mxu0 0.0
  %1685 = vmatpush1.msra.mxu0 0.0
  %1686 = vmatprep.subr.mxu0 0.0
  %1687 = vmatpush1.msra.mxu0 0.0
  %1688 = vmatprep.subr.mxu0 0.0
  %1689 = vmatpush1.msra.mxu0 0.0
  %1690 = vmatprep.subr.mxu0 0.0
  %1691 = vmatpush1.msra.mxu0 0.0
  %1692 = vmatprep.subr.mxu0 0.0
  %1693 = vmatpush1.msra.mxu0 0.0
  %1694 = vmatprep.subr.mxu0 0.0
  %1695 = vmatpush1.msra.mxu0 0.0
  %1696 = vmatprep.subr.mxu0 0.0
  %1697 = vmatpush1.msra.mxu0 0.0
  %1698 = vmatprep.subr.mxu0 0.0
  %1699 = vmatpush1.msra.mxu0 0.0
  %1700 = vmatprep.subr.mxu0 0.0
  %1701 = vmatpush1.msra.mxu0 0.0
  %1702 = vmatprep.subr.mxu0 0.0
  %1703 = vmatpush1.msra.mxu0 0.0
  %1704 = vmatprep.subr.mxu0 0.0
  %1705 = vmatpush1.msra.mxu0 0.0
  %1706 = vmatprep.subr.mxu0 0.0
  %1707 = vmatpush1.msra.mxu0 0.0
  %1708 = vmatprep.subr.mxu0 0.0
  %1709 = vmatpush1.msra.mxu0 0.0
  %1710 = vmatprep.subr.mxu0 0.0
  %1711 = vmatpush1.msra.mxu0 0.0
  %1712 = vmatprep.mubr.f32.mxu0 0.0
  %1713 = vmatmul.mubr.f32.gmra.mrb[0].mxu0 %v1646
  %v1714 = vpop.f32.mrb[0].mxu0
  %v1715 = vadd.f32 0.0, %v1714
  %v1716 = vpop.f32.mrb[0].mxu0
  %1717 = vdwg.mxu0
  %1718 = vxpose.xlu0.b32.start [1/16] %v1715, 128
  %1719 = vxpose.xlu0.b32.cont [2/16] 0.0, 128
  %1720 = vxpose.xlu0.b32.cont [3/16] 0.0, 128
  %1721 = vxpose.xlu0.b32.cont [4/16] 0.0, 128
  %1722 = vxpose.xlu0.b32.cont [5/16] 0.0, 128
  %1723 = vxpose.xlu0.b32.cont [6/16] 0.0, 128
  %1724 = vxpose.xlu0.b32.cont [7/16] 0.0, 128
  %1725 = vxpose.xlu0.b32.cont [8/16] 0.0, 128
  %1726 = vxpose.xlu0.b32.cont [9/16] 0.0, 128
  %1727 = vxpose.xlu0.b32.cont [10/16] 0.0, 128
  %1728 = vxpose.xlu0.b32.cont [11/16] 0.0, 128
  %1729 = vxpose.xlu0.b32.cont [12/16] 0.0, 128
  %1730 = vxpose.xlu0.b32.cont [13/16] 0.0, 128
  %1731 = vxpose.xlu0.b32.cont [14/16] 0.0, 128
  %1732 = vxpose.xlu0.b32.cont [15/16] 0.0, 128
  %1733 = vxpose.xlu0.b32.end [16/16] 0.0, 128
  %v1734 = vpop.trf.xlu0
  %v1735 = vpop.trf.xlu0
  %v1736 = vpop.trf.xlu0
  %v1737 = vpop.trf.xlu0
  %v1738 = vpop.trf.xlu0
  %v1739 = vpop.trf.xlu0
  %v1740 = vpop.trf.xlu0
  %v1741 = vpop.trf.xlu0
  %v1742 = vpop.trf.xlu0
  %v1743 = vpop.trf.xlu0
  %v1744 = vpop.trf.xlu0
  %v1745 = vpop.trf.xlu0
  %v1746 = vpop.trf.xlu0
  %v1747 = vpop.trf.xlu0
  %v1748 = vpop.trf.xlu0
  %v1749 = vpop.trf.xlu0
  %v1750 = vld [vmem:[%s7] sm:$0xff]
  %vm1751 = vcmask 64512
  %v1753 = vsel %vm1751, %v1734, 0
  %1755 = vmatprep.subr.mxu0 0.0
  %1756 = vmatpush1.msra.mxu0 %v1750
  %1757 = vmatprep.subr.mxu0 0.0
  %1758 = vmatpush1.msra.mxu0 0.0
  %1759 = vmatprep.subr.mxu0 0.0
  %1760 = vmatpush1.msra.mxu0 0.0
  %1761 = vmatprep.subr.mxu0 0.0
  %1762 = vmatpush1.msra.mxu0 0.0
  %1763 = vmatprep.subr.mxu0 0.0
  %1764 = vmatpush1.msra.mxu0 0.0
  %1765 = vmatprep.subr.mxu0 0.0
  %1766 = vmatpush1.msra.mxu0 0.0
  %1767 = vmatprep.subr.mxu0 0.0
  %1768 = vmatpush1.msra.mxu0 0.0
  %1769 = vmatprep.subr.mxu0 0.0
  %1770 = vmatpush1.msra.mxu0 0.0
  %1771 = vmatprep.subr.mxu0 0.0
  %1772 = vmatpush1.msra.mxu0 0.0
  %1773 = vmatprep.subr.mxu0 0.0
  %1774 = vmatpush1.msra.mxu0 0.0
  %1775 = vmatprep.subr.mxu0 0.0
  %1776 = vmatpush1.msra.mxu0 0.0
  %1777 = vmatprep.subr.mxu0 0.0
  %1778 = vmatpush1.msra.mxu0 0.0
  %1779 = vmatprep.subr.mxu0 0.0
  %1780 = vmatpush1.msra.mxu0 0.0
  %1781 = vmatprep.subr.mxu0 0.0
  %1782 = vmatpush1.msra.mxu0 0.0
  %1783 = vmatprep.subr.mxu0 0.0
  %1784 = vmatpush1.msra.mxu0 0.0
  %1785 = vmatprep.subr.mxu0 0.0
  %1786 = vmatpush1.msra.mxu0 0.0
  %1787 = vmatprep.subr.mxu0 0.0
  %1788 = vmatpush1.msra.mxu0 0.0
  %1789 = vmatprep.subr.mxu0 0.0
  %1790 = vmatpush1.msra.mxu0 0.0
  %1791 = vmatprep.subr.mxu0 0.0
  %1792 = vmatpush1.msra.mxu0 0.0
  %1793 = vmatprep.subr.mxu0 0.0
  %1794 = vmatpush1.msra.mxu0 0.0
  %1795 = vmatprep.subr.mxu0 0.0
  %1796 = vmatpush1.msra.mxu0 0.0
  %1797 = vmatprep.subr.mxu0 0.0
  %1798 = vmatpush1.msra.mxu0 0.0
  %1799 = vmatprep.subr.mxu0 0.0
  %1800 = vmatpush1.msra.mxu0 0.0
  %1801 = vmatprep.subr.mxu0 0.0
  %1802 = vmatpush1.msra.mxu0 0.0
  %1803 = vmatprep.subr.mxu0 0.0
  %1804 = vmatpush1.msra.mxu0 0.0
  %1805 = vmatprep.subr.mxu0 0.0
  %1806 = vmatpush1.msra.mxu0 0.0
  %1807 = vmatprep.subr.mxu0 0.0
  %1808 = vmatpush1.msra.mxu0 0.0
  %1809 = vmatprep.subr.mxu0 0.0
  %1810 = vmatpush1.msra.mxu0 0.0
  %1811 = vmatprep.subr.mxu0 0.0
  %1812 = vmatpush1.msra.mxu0 0.0
  %1813 = vmatprep.subr.mxu0 0.0
  %1814 = vmatpush1.msra.mxu0 0.0
  %1815 = vmatprep.subr.mxu0 0.0
  %1816 = vmatpush1.msra.mxu0 0.0
  %1817 = vmatprep.subr.mxu0 0.0
  %1818 = vmatpush1.msra.mxu0 0.0
  %1819 = vmatprep.mubr.f32.mxu0 0.0
  %1820 = vmatmul.mubr.f32.gmra.mrb[0].mxu0 %v1753
  %v1821 = vpop.f32.mrb[0].mxu0
  %v1822 = vadd.f32 0.0, %v1821
  %v1823 = vpop.f32.mrb[0].mxu0
  %1824 = vdwg.mxu0
  %v1826 = vlaneseq
  %v1827 = vshrl.u32 %v1826, 7
  %v1828 = vsub.s32 0, %v1827
  %v1829 = vrot.slane %v1639, %v1828
  %v1831 = vadd.f32 %v1829, %v1822
  %s1832 = scalar_lea.vmem %s6, 32
  %v1833 = vld [vmem:[%s1832] sm:$0xff]
  %v1834 = vld [vmem:[%s1832 + $0x8] sm:$0xff]
  %v1835 = vld [vmem:[%s1832 + $0x10] sm:$0xff]
  %v1836 = vld [vmem:[%s1832 + $0x18] sm:$0xff]
  %1837 = vmatprep.subr.mxu0 0.0
  %1838 = vmatpush1.msra.mxu0 %v1833
  %1839 = vmatprep.subr.mxu0 0.0
  %1840 = vmatpush1.msra.mxu0 %v1834
  %1841 = vmatprep.subr.mxu0 0.0
  %1842 = vmatpush1.msra.mxu0 %v1835
  %1843 = vmatprep.subr.mxu0 0.0
  %1844 = vmatpush1.msra.mxu0 %v1836
  %1845 = vmatprep.subr.mxu0 0.0
  %1846 = vmatpush1.msra.mxu0 0.0
  %1847 = vmatprep.subr.mxu0 0.0
  %1848 = vmatpush1.msra.mxu0 0.0
  %1849 = vmatprep.subr.mxu0 0.0
  %1850 = vmatpush1.msra.mxu0 0.0
  %1851 = vmatprep.subr.mxu0 0.0
  %1852 = vmatpush1.msra.mxu0 0.0
  %1853 = vmatprep.subr.mxu0 0.0
  %1854 = vmatpush1.msra.mxu0 0.0
  %1855 = vmatprep.subr.mxu0 0.0
  %1856 = vmatpush1.msra.mxu0 0.0
  %1857 = vmatprep.subr.mxu0 0.0
  %1858 = vmatpush1.msra.mxu0 0.0
  %1859 = vmatprep.subr.mxu0 0.0
  %1860 = vmatpush1.msra.mxu0 0.0
  %1861 = vmatprep.subr.mxu0 0.0
  %1862 = vmatpush1.msra.mxu0 0.0
  %1863 = vmatprep.subr.mxu0 0.0
  %1864 = vmatpush1.msra.mxu0 0.0
  %1865 = vmatprep.subr.mxu0 0.0
  %1866 = vmatpush1.msra.mxu0 0.0
  %1867 = vmatprep.subr.mxu0 0.0
  %1868 = vmatpush1.msra.mxu0 0.0
  %1869 = vmatprep.subr.mxu0 0.0
  %1870 = vmatpush1.msra.mxu0 0.0
  %1871 = vmatprep.subr.mxu0 0.0
  %1872 = vmatpush1.msra.mxu0 0.0
  %1873 = vmatprep.subr.mxu0 0.0
  %1874 = vmatpush1.msra.mxu0 0.0
  %1875 = vmatprep.subr.mxu0 0.0
  %1876 = vmatpush1.msra.mxu0 0.0
  %1877 = vmatprep.subr.mxu0 0.0
  %1878 = vmatpush1.msra.mxu0 0.0
  %1879 = vmatprep.subr.mxu0 0.0
  %1880 = vmatpush1.msra.mxu0 0.0
  %1881 = vmatprep.subr.mxu0 0.0
  %1882 = vmatpush1.msra.mxu0 0.0
  %1883 = vmatprep.subr.mxu0 0.0
  %1884 = vmatpush1.msra.mxu0 0.0
  %1885 = vmatprep.subr.mxu0 0.0
  %1886 = vmatpush1.msra.mxu0 0.0
  %1887 = vmatprep.subr.mxu0 0.0
  %1888 = vmatpush1.msra.mxu0 0.0
  %1889 = vmatprep.subr.mxu0 0.0
  %1890 = vmatpush1.msra.mxu0 0.0
  %1891 = vmatprep.subr.mxu0 0.0
  %1892 = vmatpush1.msra.mxu0 0.0
  %1893 = vmatprep.subr.mxu0 0.0
  %1894 = vmatpush1.msra.mxu0 0.0
  %1895 = vmatprep.subr.mxu0 0.0
  %1896 = vmatpush1.msra.mxu0 0.0
  %1897 = vmatprep.subr.mxu0 0.0
  %1898 = vmatpush1.msra.mxu0 0.0
  %1899 = vmatprep.subr.mxu0 0.0
  %1900 = vmatpush1.msra.mxu0 0.0
  %1901 = vmatprep.mubr.f32.mxu0 0.0
  %1902 = vmatmul.mubr.f32.gmra.mrb[0].mxu0 %v1646
  %v1903 = vpop.f32.mrb[0].mxu0
  %v1904 = vadd.f32 0.0, %v1903
  %v1905 = vpop.f32.mrb[0].mxu0
  %1906 = vdwg.mxu0
  %1907 = vxpose.xlu0.b32.start [1/16] %v1904, 128
  %1908 = vxpose.xlu0.b32.cont [2/16] 0.0, 128
  %1909 = vxpose.xlu0.b32.cont [3/16] 0.0, 128
  %1910 = vxpose.xlu0.b32.cont [4/16] 0.0, 128
  %1911 = vxpose.xlu0.b32.cont [5/16] 0.0, 128
  %1912 = vxpose.xlu0.b32.cont [6/16] 0.0, 128
  %1913 = vxpose.xlu0.b32.cont [7/16] 0.0, 128
  %1914 = vxpose.xlu0.b32.cont [8/16] 0.0, 128
  %1915 = vxpose.xlu0.b32.cont [9/16] 0.0, 128
  %1916 = vxpose.xlu0.b32.cont [10/16] 0.0, 128
  %1917 = vxpose.xlu0.b32.cont [11/16] 0.0, 128
  %1918 = vxpose.xlu0.b32.cont [12/16] 0.0, 128
  %1919 = vxpose.xlu0.b32.cont [13/16] 0.0, 128
  %1920 = vxpose.xlu0.b32.cont [14/16] 0.0, 128
  %1921 = vxpose.xlu0.b32.cont [15/16] 0.0, 128
  %1922 = vxpose.xlu0.b32.end [16/16] 0.0, 128
  %v1923 = vpop.trf.xlu0
  %v1924 = vpop.trf.xlu0
  %v1925 = vpop.trf.xlu0
  %v1926 = vpop.trf.xlu0
  %v1927 = vpop.trf.xlu0
  %v1928 = vpop.trf.xlu0
  %v1929 = vpop.trf.xlu0
  %v1930 = vpop.trf.xlu0
  %v1931 = vpop.trf.xlu0
  %v1932 = vpop.trf.xlu0
  %v1933 = vpop.trf.xlu0
  %v1934 = vpop.trf.xlu0
  %v1935 = vpop.trf.xlu0
  %v1936 = vpop.trf.xlu0
  %v1937 = vpop.trf.xlu0
  %v1938 = vpop.trf.xlu0
  %s1939 = scalar_lea.vmem %s7, 8
  %v1940 = vld [vmem:[%s1939] sm:$0xff]
  %v1942 = vsel %vm1751, %v1923, 0
  %1944 = vmatprep.subr.mxu0 0.0
  %1945 = vmatpush1.msra.mxu0 %v1940
  %1946 = vmatprep.subr.mxu0 0.0
  %1947 = vmatpush1.msra.mxu0 0.0
  %1948 = vmatprep.subr.mxu0 0.0
  %1949 = vmatpush1.msra.mxu0 0.0
  %1950 = vmatprep.subr.mxu0 0.0
  %1951 = vmatpush1.msra.mxu0 0.0
  %1952 = vmatprep.subr.mxu0 0.0
  %1953 = vmatpush1.msra.mxu0 0.0
  %1954 = vmatprep.subr.mxu0 0.0
  %1955 = vmatpush1.msra.mxu0 0.0
  %1956 = vmatprep.subr.mxu0 0.0
  %1957 = vmatpush1.msra.mxu0 0.0
  %1958 = vmatprep.subr.mxu0 0.0
  %1959 = vmatpush1.msra.mxu0 0.0
  %1960 = vmatprep.subr.mxu0 0.0
  %1961 = vmatpush1.msra.mxu0 0.0
  %1962 = vmatprep.subr.mxu0 0.0
  %1963 = vmatpush1.msra.mxu0 0.0
  %1964 = vmatprep.subr.mxu0 0.0
  %1965 = vmatpush1.msra.mxu0 0.0
  %1966 = vmatprep.subr.mxu0 0.0
  %1967 = vmatpush1.msra.mxu0 0.0
  %1968 = vmatprep.subr.mxu0 0.0
  %1969 = vmatpush1.msra.mxu0 0.0
  %1970 = vmatprep.subr.mxu0 0.0
  %1971 = vmatpush1.msra.mxu0 0.0
  %1972 = vmatprep.subr.mxu0 0.0
  %1973 = vmatpush1.msra.mxu0 0.0
  %1974 = vmatprep.subr.mxu0 0.0
  %1975 = vmatpush1.msra.mxu0 0.0
  %1976 = vmatprep.subr.mxu0 0.0
  %1977 = vmatpush1.msra.mxu0 0.0
  %1978 = vmatprep.subr.mxu0 0.0
  %1979 = vmatpush1.msra.mxu0 0.0
  %1980 = vmatprep.subr.mxu0 0.0
  %1981 = vmatpush1.msra.mxu0 0.0
  %1982 = vmatprep.subr.mxu0 0.0
  %1983 = vmatpush1.msra.mxu0 0.0
  %1984 = vmatprep.subr.mxu0 0.0
  %1985 = vmatpush1.msra.mxu0 0.0
  %1986 = vmatprep.subr.mxu0 0.0
  %1987 = vmatpush1.msra.mxu0 0.0
  %1988 = vmatprep.subr.mxu0 0.0
  %1989 = vmatpush1.msra.mxu0 0.0
  %1990 = vmatprep.subr.mxu0 0.0
  %1991 = vmatpush1.msra.mxu0 0.0
  %1992 = vmatprep.subr.mxu0 0.0
  %1993 = vmatpush1.msra.mxu0 0.0
  %1994 = vmatprep.subr.mxu0 0.0
  %1995 = vmatpush1.msra.mxu0 0.0
  %1996 = vmatprep.subr.mxu0 0.0
  %1997 = vmatpush1.msra.mxu0 0.0
  %1998 = vmatprep.subr.mxu0 0.0
  %1999 = vmatpush1.msra.mxu0 0.0
  %2000 = vmatprep.subr.mxu0 0.0
  %2001 = vmatpush1.msra.mxu0 0.0
  %2002 = vmatprep.subr.mxu0 0.0
  %2003 = vmatpush1.msra.mxu0 0.0
  %2004 = vmatprep.subr.mxu0 0.0
  %2005 = vmatpush1.msra.mxu0 0.0
  %2006 = vmatprep.subr.mxu0 0.0
  %2007 = vmatpush1.msra.mxu0 0.0
  %2008 = vmatprep.mubr.f32.mxu0 0.0
  %2009 = vmatmul.mubr.f32.gmra.mrb[0].mxu0 %v1942
  %v2010 = vpop.f32.mrb[0].mxu0
  %v2011 = vadd.f32 0.0, %v2010
  %v2012 = vpop.f32.mrb[0].mxu0
  %2013 = vdwg.mxu0
  %v2014 = vadd.f32 %v1831, %v2011
  %s2015 = scalar_lea.vmem %s6, 64
  %v2016 = vld [vmem:[%s2015] sm:$0xff]
  %v2017 = vld [vmem:[%s2015 + $0x8] sm:$0xff]
  %v2018 = vld [vmem:[%s2015 + $0x10] sm:$0xff]
  %v2019 = vld [vmem:[%s2015 + $0x18] sm:$0xff]
  %2020 = vmatprep.subr.mxu0 0.0
  %2021 = vmatpush1.msra.mxu0 %v2016
  %2022 = vmatprep.subr.mxu0 0.0
  %2023 = vmatpush1.msra.mxu0 %v2017
  %2024 = vmatprep.subr.mxu0 0.0
  %2025 = vmatpush1.msra.mxu0 %v2018
  %2026 = vmatprep.subr.mxu0 0.0
  %2027 = vmatpush1.msra.mxu0 %v2019
  %2028 = vmatprep.subr.mxu0 0.0
  %2029 = vmatpush1.msra.mxu0 0.0
  %2030 = vmatprep.subr.mxu0 0.0
  %2031 = vmatpush1.msra.mxu0 0.0
  %2032 = vmatprep.subr.mxu0 0.0
  %2033 = vmatpush1.msra.mxu0 0.0
  %2034 = vmatprep.subr.mxu0 0.0
  %2035 = vmatpush1.msra.mxu0 0.0
  %2036 = vmatprep.subr.mxu0 0.0
  %2037 = vmatpush1.msra.mxu0 0.0
  %2038 = vmatprep.subr.mxu0 0.0
  %2039 = vmatpush1.msra.mxu0 0.0
  %2040 = vmatprep.subr.mxu0 0.0
  %2041 = vmatpush1.msra.mxu0 0.0
  %2042 = vmatprep.subr.mxu0 0.0
  %2043 = vmatpush1.msra.mxu0 0.0
  %2044 = vmatprep.subr.mxu0 0.0
  %2045 = vmatpush1.msra.mxu0 0.0
  %2046 = vmatprep.subr.mxu0 0.0
  %2047 = vmatpush1.msra.mxu0 0.0
  %2048 = vmatprep.subr.mxu0 0.0
  %2049 = vmatpush1.msra.mxu0 0.0
  %2050 = vmatprep.subr.mxu0 0.0
  %2051 = vmatpush1.msra.mxu0 0.0
  %2052 = vmatprep.subr.mxu0 0.0
  %2053 = vmatpush1.msra.mxu0 0.0
  %2054 = vmatprep.subr.mxu0 0.0
  %2055 = vmatpush1.msra.mxu0 0.0
  %2056 = vmatprep.subr.mxu0 0.0
  %2057 = vmatpush1.msra.mxu0 0.0
  %2058 = vmatprep.subr.mxu0 0.0
  %2059 = vmatpush1.msra.mxu0 0.0
  %2060 = vmatprep.subr.mxu0 0.0
  %2061 = vmatpush1.msra.mxu0 0.0
  %2062 = vmatprep.subr.mxu0 0.0
  %2063 = vmatpush1.msra.mxu0 0.0
  %2064 = vmatprep.subr.mxu0 0.0
  %2065 = vmatpush1.msra.mxu0 0.0
  %2066 = vmatprep.subr.mxu0 0.0
  %2067 = vmatpush1.msra.mxu0 0.0
  %2068 = vmatprep.subr.mxu0 0.0
  %2069 = vmatpush1.msra.mxu0 0.0
  %2070 = vmatprep.subr.mxu0 0.0
  %2071 = vmatpush1.msra.mxu0 0.0
  %2072 = vmatprep.subr.mxu0 0.0
  %2073 = vmatpush1.msra.mxu0 0.0
  %2074 = vmatprep.subr.mxu0 0.0
  %2075 = vmatpush1.msra.mxu0 0.0
  %2076 = vmatprep.subr.mxu0 0.0
  %2077 = vmatpush1.msra.mxu0 0.0
  %2078 = vmatprep.subr.mxu0 0.0
  %2079 = vmatpush1.msra.mxu0 0.0
  %2080 = vmatprep.subr.mxu0 0.0
  %2081 = vmatpush1.msra.mxu0 0.0
  %2082 = vmatprep.subr.mxu0 0.0
  %2083 = vmatpush1.msra.mxu0 0.0
  %2084 = vmatprep.mubr.f32.mxu0 0.0
  %2085 = vmatmul.mubr.f32.gmra.mrb[0].mxu0 %v1646
  %v2086 = vpop.f32.mrb[0].mxu0
  %v2087 = vadd.f32 0.0, %v2086
  %v2088 = vpop.f32.mrb[0].mxu0
  %2089 = vdwg.mxu0
  %2090 = vxpose.xlu0.b32.start [1/16] %v2087, 128
  %2091 = vxpose.xlu0.b32.cont [2/16] 0.0, 128
  %2092 = vxpose.xlu0.b32.cont [3/16] 0.0, 128
  %2093 = vxpose.xlu0.b32.cont [4/16] 0.0, 128
  %2094 = vxpose.xlu0.b32.cont [5/16] 0.0, 128
  %2095 = vxpose.xlu0.b32.cont [6/16] 0.0, 128
  %2096 = vxpose.xlu0.b32.cont [7/16] 0.0, 128
  %2097 = vxpose.xlu0.b32.cont [8/16] 0.0, 128
  %2098 = vxpose.xlu0.b32.cont [9/16] 0.0, 128
  %2099 = vxpose.xlu0.b32.cont [10/16] 0.0, 128
  %2100 = vxpose.xlu0.b32.cont [11/16] 0.0, 128
  %2101 = vxpose.xlu0.b32.cont [12/16] 0.0, 128
  %2102 = vxpose.xlu0.b32.cont [13/16] 0.0, 128
  %2103 = vxpose.xlu0.b32.cont [14/16] 0.0, 128
  %2104 = vxpose.xlu0.b32.cont [15/16] 0.0, 128
  %2105 = vxpose.xlu0.b32.end [16/16] 0.0, 128
  %v2106 = vpop.trf.xlu0
  %v2107 = vpop.trf.xlu0
  %v2108 = vpop.trf.xlu0
  %v2109 = vpop.trf.xlu0
  %v2110 = vpop.trf.xlu0
  %v2111 = vpop.trf.xlu0
  %v2112 = vpop.trf.xlu0
  %v2113 = vpop.trf.xlu0
  %v2114 = vpop.trf.xlu0
  %v2115 = vpop.trf.xlu0
  %v2116 = vpop.trf.xlu0
  %v2117 = vpop.trf.xlu0
  %v2118 = vpop.trf.xlu0
  %v2119 = vpop.trf.xlu0
  %v2120 = vpop.trf.xlu0
  %v2121 = vpop.trf.xlu0
  %s2122 = scalar_lea.vmem %s7, 16
  %v2123 = vld [vmem:[%s2122] sm:$0xff]
  %v2125 = vsel %vm1751, %v2106, 0
  %2127 = vmatprep.subr.mxu0 0.0
  %2128 = vmatpush1.msra.mxu0 %v2123
  %2129 = vmatprep.subr.mxu0 0.0
  %2130 = vmatpush1.msra.mxu0 0.0
  %2131 = vmatprep.subr.mxu0 0.0
  %2132 = vmatpush1.msra.mxu0 0.0
  %2133 = vmatprep.subr.mxu0 0.0
  %2134 = vmatpush1.msra.mxu0 0.0
  %2135 = vmatprep.subr.mxu0 0.0
  %2136 = vmatpush1.msra.mxu0 0.0
  %2137 = vmatprep.subr.mxu0 0.0
  %2138 = vmatpush1.msra.mxu0 0.0
  %2139 = vmatprep.subr.mxu0 0.0
  %2140 = vmatpush1.msra.mxu0 0.0
  %2141 = vmatprep.subr.mxu0 0.0
  %2142 = vmatpush1.msra.mxu0 0.0
  %2143 = vmatprep.subr.mxu0 0.0
  %2144 = vmatpush1.msra.mxu0 0.0
  %2145 = vmatprep.subr.mxu0 0.0
  %2146 = vmatpush1.msra.mxu0 0.0
  %2147 = vmatprep.subr.mxu0 0.0
  %2148 = vmatpush1.msra.mxu0 0.0
  %2149 = vmatprep.subr.mxu0 0.0
  %2150 = vmatpush1.msra.mxu0 0.0
  %2151 = vmatprep.subr.mxu0 0.0
  %2152 = vmatpush1.msra.mxu0 0.0
  %2153 = vmatprep.subr.mxu0 0.0
  %2154 = vmatpush1.msra.mxu0 0.0
  %2155 = vmatprep.subr.mxu0 0.0
  %2156 = vmatpush1.msra.mxu0 0.0
  %2157 = vmatprep.subr.mxu0 0.0
  %2158 = vmatpush1.msra.mxu0 0.0
  %2159 = vmatprep.subr.mxu0 0.0
  %2160 = vmatpush1.msra.mxu0 0.0
  %2161 = vmatprep.subr.mxu0 0.0
  %2162 = vmatpush1.msra.mxu0 0.0
  %2163 = vmatprep.subr.mxu0 0.0
  %2164 = vmatpush1.msra.mxu0 0.0
  %2165 = vmatprep.subr.mxu0 0.0
  %2166 = vmatpush1.msra.mxu0 0.0
  %2167 = vmatprep.subr.mxu0 0.0
  %2168 = vmatpush1.msra.mxu0 0.0
  %2169 = vmatprep.subr.mxu0 0.0
  %2170 = vmatpush1.msra.mxu0 0.0
  %2171 = vmatprep.subr.mxu0 0.0
  %2172 = vmatpush1.msra.mxu0 0.0
  %2173 = vmatprep.subr.mxu0 0.0
  %2174 = vmatpush1.msra.mxu0 0.0
  %2175 = vmatprep.subr.mxu0 0.0
  %2176 = vmatpush1.msra.mxu0 0.0
  %2177 = vmatprep.subr.mxu0 0.0
  %2178 = vmatpush1.msra.mxu0 0.0
  %2179 = vmatprep.subr.mxu0 0.0
  %2180 = vmatpush1.msra.mxu0 0.0
  %2181 = vmatprep.subr.mxu0 0.0
  %2182 = vmatpush1.msra.mxu0 0.0
  %2183 = vmatprep.subr.mxu0 0.0
  %2184 = vmatpush1.msra.mxu0 0.0
  %2185 = vmatprep.subr.mxu0 0.0
  %2186 = vmatpush1.msra.mxu0 0.0
  %2187 = vmatprep.subr.mxu0 0.0
  %2188 = vmatpush1.msra.mxu0 0.0
  %2189 = vmatprep.subr.mxu0 0.0
  %2190 = vmatpush1.msra.mxu0 0.0
  %2191 = vmatprep.mubr.f32.mxu0 0.0
  %2192 = vmatmul.mubr.f32.gmra.mrb[0].mxu0 %v2125
  %v2193 = vpop.f32.mrb[0].mxu0
  %v2194 = vadd.f32 0.0, %v2193
  %v2195 = vpop.f32.mrb[0].mxu0
  %2196 = vdwg.mxu0
  %v2197 = vadd.f32 %v2014, %v2194
  %s2198 = scalar_lea.vmem %s6, 96
  %v2199 = vld [vmem:[%s2198] sm:$0xff]
  %v2200 = vld [vmem:[%s2198 + $0x8] sm:$0xff]
  %v2201 = vld [vmem:[%s2198 + $0x10] sm:$0xff]
  %v2202 = vld [vmem:[%s2198 + $0x18] sm:$0xff]
  %2203 = vmatprep.subr.mxu0 0.0
  %2204 = vmatpush1.msra.mxu0 %v2199
  %2205 = vmatprep.subr.mxu0 0.0
  %2206 = vmatpush1.msra.mxu0 %v2200
  %2207 = vmatprep.subr.mxu0 0.0
  %2208 = vmatpush1.msra.mxu0 %v2201
  %2209 = vmatprep.subr.mxu0 0.0
  %2210 = vmatpush1.msra.mxu0 %v2202
  %2211 = vmatprep.subr.mxu0 0.0
  %2212 = vmatpush1.msra.mxu0 0.0
  %2213 = vmatprep.subr.mxu0 0.0
  %2214 = vmatpush1.msra.mxu0 0.0
  %2215 = vmatprep.subr.mxu0 0.0
  %2216 = vmatpush1.msra.mxu0 0.0
  %2217 = vmatprep.subr.mxu0 0.0
  %2218 = vmatpush1.msra.mxu0 0.0
  %2219 = vmatprep.subr.mxu0 0.0
  %2220 = vmatpush1.msra.mxu0 0.0
  %2221 = vmatprep.subr.mxu0 0.0
  %2222 = vmatpush1.msra.mxu0 0.0
  %2223 = vmatprep.subr.mxu0 0.0
  %2224 = vmatpush1.msra.mxu0 0.0
  %2225 = vmatprep.subr.mxu0 0.0
  %2226 = vmatpush1.msra.mxu0 0.0
  %2227 = vmatprep.subr.mxu0 0.0
  %2228 = vmatpush1.msra.mxu0 0.0
  %2229 = vmatprep.subr.mxu0 0.0
  %2230 = vmatpush1.msra.mxu0 0.0
  %2231 = vmatprep.subr.mxu0 0.0
  %2232 = vmatpush1.msra.mxu0 0.0
  %2233 = vmatprep.subr.mxu0 0.0
  %2234 = vmatpush1.msra.mxu0 0.0
  %2235 = vmatprep.subr.mxu0 0.0
  %2236 = vmatpush1.msra.mxu0 0.0
  %2237 = vmatprep.subr.mxu0 0.0
  %2238 = vmatpush1.msra.mxu0 0.0
  %2239 = vmatprep.subr.mxu0 0.0
  %2240 = vmatpush1.msra.mxu0 0.0
  %2241 = vmatprep.subr.mxu0 0.0
  %2242 = vmatpush1.msra.mxu0 0.0
  %2243 = vmatprep.subr.mxu0 0.0
  %2244 = vmatpush1.msra.mxu0 0.0
  %2245 = vmatprep.subr.mxu0 0.0
  %2246 = vmatpush1.msra.mxu0 0.0
  %2247 = vmatprep.subr.mxu0 0.0
  %2248 = vmatpush1.msra.mxu0 0.0
  %2249 = vmatprep.subr.mxu0 0.0
  %2250 = vmatpush1.msra.mxu0 0.0
  %2251 = vmatprep.subr.mxu0 0.0
  %2252 = vmatpush1.msra.mxu0 0.0
  %2253 = vmatprep.subr.mxu0 0.0
  %2254 = vmatpush1.msra.mxu0 0.0
  %2255 = vmatprep.subr.mxu0 0.0
  %2256 = vmatpush1.msra.mxu0 0.0
  %2257 = vmatprep.subr.mxu0 0.0
  %2258 = vmatpush1.msra.mxu0 0.0
  %2259 = vmatprep.subr.mxu0 0.0
  %2260 = vmatpush1.msra.mxu0 0.0
  %2261 = vmatprep.subr.mxu0 0.0
  %2262 = vmatpush1.msra.mxu0 0.0
  %2263 = vmatprep.subr.mxu0 0.0
  %2264 = vmatpush1.msra.mxu0 0.0
  %2265 = vmatprep.subr.mxu0 0.0
  %2266 = vmatpush1.msra.mxu0 0.0
  %2267 = vmatprep.mubr.f32.mxu0 0.0
  %2268 = vmatmul.mubr.f32.gmra.mrb[0].mxu0 %v1646
  %v2269 = vpop.f32.mrb[0].mxu0
  %v2270 = vadd.f32 0.0, %v2269
  %v2271 = vpop.f32.mrb[0].mxu0
  %2272 = vdwg.mxu0
  %2273 = vxpose.xlu0.b32.start [1/16] %v2270, 128
  %2274 = vxpose.xlu0.b32.cont [2/16] 0.0, 128
  %2275 = vxpose.xlu0.b32.cont [3/16] 0.0, 128
  %2276 = vxpose.xlu0.b32.cont [4/16] 0.0, 128
  %2277 = vxpose.xlu0.b32.cont [5/16] 0.0, 128
  %2278 = vxpose.xlu0.b32.cont [6/16] 0.0, 128
  %2279 = vxpose.xlu0.b32.cont [7/16] 0.0, 128
  %2280 = vxpose.xlu0.b32.cont [8/16] 0.0, 128
  %2281 = vxpose.xlu0.b32.cont [9/16] 0.0, 128
  %2282 = vxpose.xlu0.b32.cont [10/16] 0.0, 128
  %2283 = vxpose.xlu0.b32.cont [11/16] 0.0, 128
  %2284 = vxpose.xlu0.b32.cont [12/16] 0.0, 128
  %2285 = vxpose.xlu0.b32.cont [13/16] 0.0, 128
  %2286 = vxpose.xlu0.b32.cont [14/16] 0.0, 128
  %2287 = vxpose.xlu0.b32.cont [15/16] 0.0, 128
  %2288 = vxpose.xlu0.b32.end [16/16] 0.0, 128
  %v2289 = vpop.trf.xlu0
  %v2290 = vpop.trf.xlu0
  %v2291 = vpop.trf.xlu0
  %v2292 = vpop.trf.xlu0
  %v2293 = vpop.trf.xlu0
  %v2294 = vpop.trf.xlu0
  %v2295 = vpop.trf.xlu0
  %v2296 = vpop.trf.xlu0
  %v2297 = vpop.trf.xlu0
  %v2298 = vpop.trf.xlu0
  %v2299 = vpop.trf.xlu0
  %v2300 = vpop.trf.xlu0
  %v2301 = vpop.trf.xlu0
  %v2302 = vpop.trf.xlu0
  %v2303 = vpop.trf.xlu0
  %v2304 = vpop.trf.xlu0
  %s2305 = scalar_lea.vmem %s7, 24
  %v2306 = vld [vmem:[%s2305] sm:$0xff]
  %v2308 = vsel %vm1751, %v2289, 0
  %2310 = vmatprep.subr.mxu0 0.0
  %2311 = vmatpush1.msra.mxu0 %v2306
  %2312 = vmatprep.subr.mxu0 0.0
  %2313 = vmatpush1.msra.mxu0 0.0
  %2314 = vmatprep.subr.mxu0 0.0
  %2315 = vmatpush1.msra.mxu0 0.0
  %2316 = vmatprep.subr.mxu0 0.0
  %2317 = vmatpush1.msra.mxu0 0.0
  %2318 = vmatprep.subr.mxu0 0.0
  %2319 = vmatpush1.msra.mxu0 0.0
  %2320 = vmatprep.subr.mxu0 0.0
  %2321 = vmatpush1.msra.mxu0 0.0
  %2322 = vmatprep.subr.mxu0 0.0
  %2323 = vmatpush1.msra.mxu0 0.0
  %2324 = vmatprep.subr.mxu0 0.0
  %2325 = vmatpush1.msra.mxu0 0.0
  %2326 = vmatprep.subr.mxu0 0.0
  %2327 = vmatpush1.msra.mxu0 0.0
  %2328 = vmatprep.subr.mxu0 0.0
  %2329 = vmatpush1.msra.mxu0 0.0
  %2330 = vmatprep.subr.mxu0 0.0
  %2331 = vmatpush1.msra.mxu0 0.0
  %2332 = vmatprep.subr.mxu0 0.0
  %2333 = vmatpush1.msra.mxu0 0.0
  %2334 = vmatprep.subr.mxu0 0.0
  %2335 = vmatpush1.msra.mxu0 0.0
  %2336 = vmatprep.subr.mxu0 0.0
  %2337 = vmatpush1.msra.mxu0 0.0
  %2338 = vmatprep.subr.mxu0 0.0
  %2339 = vmatpush1.msra.mxu0 0.0
  %2340 = vmatprep.subr.mxu0 0.0
  %2341 = vmatpush1.msra.mxu0 0.0
  %2342 = vmatprep.subr.mxu0 0.0
  %2343 = vmatpush1.msra.mxu0 0.0
  %2344 = vmatprep.subr.mxu0 0.0
  %2345 = vmatpush1.msra.mxu0 0.0
  %2346 = vmatprep.subr.mxu0 0.0
  %2347 = vmatpush1.msra.mxu0 0.0
  %2348 = vmatprep.subr.mxu0 0.0
  %2349 = vmatpush1.msra.mxu0 0.0
  %2350 = vmatprep.subr.mxu0 0.0
  %2351 = vmatpush1.msra.mxu0 0.0
  %2352 = vmatprep.subr.mxu0 0.0
  %2353 = vmatpush1.msra.mxu0 0.0
  %2354 = vmatprep.subr.mxu0 0.0
  %2355 = vmatpush1.msra.mxu0 0.0
  %2356 = vmatprep.subr.mxu0 0.0
  %2357 = vmatpush1.msra.mxu0 0.0
  %2358 = vmatprep.subr.mxu0 0.0
  %2359 = vmatpush1.msra.mxu0 0.0
  %2360 = vmatprep.subr.mxu0 0.0
  %2361 = vmatpush1.msra.mxu0 0.0
  %2362 = vmatprep.subr.mxu0 0.0
  %2363 = vmatpush1.msra.mxu0 0.0
  %2364 = vmatprep.subr.mxu0 0.0
  %2365 = vmatpush1.msra.mxu0 0.0
  %2366 = vmatprep.subr.mxu0 0.0
  %2367 = vmatpush1.msra.mxu0 0.0
  %2368 = vmatprep.subr.mxu0 0.0
  %2369 = vmatpush1.msra.mxu0 0.0
  %2370 = vmatprep.subr.mxu0 0.0
  %2371 = vmatpush1.msra.mxu0 0.0
  %2372 = vmatprep.subr.mxu0 0.0
  %2373 = vmatpush1.msra.mxu0 0.0
  %2374 = vmatprep.mubr.f32.mxu0 0.0
  %2375 = vmatmul.mubr.f32.gmra.mrb[0].mxu0 %v2308
  %v2376 = vpop.f32.mrb[0].mxu0
  %v2377 = vadd.f32 0.0, %v2376
  %v2378 = vpop.f32.mrb[0].mxu0
  %2379 = vdwg.mxu0
  %v2380 = vadd.f32 %v2197, %v2377
  %v2381 = vld [vmem:[%s9] sm:$0xff]
  %v2382 = vld [vmem:[%s9 + $0x8] sm:$0xff]
  %v2383 = vld [vmem:[%s10] sm:$0x1]
  %v2385 = vlaneseq
  %v2386 = vshrl.u32 %v2385, 7
  %v2387 = vsub.s32 0, %v2386
  %v2388 = vrot.slane %v2383, %v2387
  %vm2390 = vcmask 130048
  %v2392 = vsel %vm2390, 0.0, 0
  %2394 = vmatprep.subr.mxu0 0.0
  %2395 = vmatpush1.msra.mxu0 %v2381
  %2396 = vmatprep.subr.mxu0 0.0
  %2397 = vmatpush1.msra.mxu0 %v2382
  %2398 = vmatprep.subr.mxu0 0.0
  %2399 = vmatpush1.msra.mxu0 0.0
  %2400 = vmatprep.subr.mxu0 0.0
  %2401 = vmatpush1.msra.mxu0 0.0
  %2402 = vmatprep.subr.mxu0 0.0
  %2403 = vmatpush1.msra.mxu0 0.0
  %2404 = vmatprep.subr.mxu0 0.0
  %2405 = vmatpush1.msra.mxu0 0.0
  %2406 = vmatprep.subr.mxu0 0.0
  %2407 = vmatpush1.msra.mxu0 0.0
  %2408 = vmatprep.subr.mxu0 0.0
  %2409 = vmatpush1.msra.mxu0 0.0
  %2410 = vmatprep.subr.mxu0 0.0
  %2411 = vmatpush1.msra.mxu0 0.0
  %2412 = vmatprep.subr.mxu0 0.0
  %2413 = vmatpush1.msra.mxu0 0.0
  %2414 = vmatprep.subr.mxu0 0.0
  %2415 = vmatpush1.msra.mxu0 0.0
  %2416 = vmatprep.subr.mxu0 0.0
  %2417 = vmatpush1.msra.mxu0 0.0
  %2418 = vmatprep.subr.mxu0 0.0
  %2419 = vmatpush1.msra.mxu0 0.0
  %2420 = vmatprep.subr.mxu0 0.0
  %2421 = vmatpush1.msra.mxu0 0.0
  %2422 = vmatprep.subr.mxu0 0.0
  %2423 = vmatpush1.msra.mxu0 0.0
  %2424 = vmatprep.subr.mxu0 0.0
  %2425 = vmatpush1.msra.mxu0 0.0
  %2426 = vmatprep.subr.mxu0 0.0
  %2427 = vmatpush1.msra.mxu0 0.0
  %2428 = vmatprep.subr.mxu0 0.0
  %2429 = vmatpush1.msra.mxu0 0.0
  %2430 = vmatprep.subr.mxu0 0.0
  %2431 = vmatpush1.msra.mxu0 0.0
  %2432 = vmatprep.subr.mxu0 0.0
  %2433 = vmatpush1.msra.mxu0 0.0
  %2434 = vmatprep.subr.mxu0 0.0
  %2435 = vmatpush1.msra.mxu0 0.0
  %2436 = vmatprep.subr.mxu0 0.0
  %2437 = vmatpush1.msra.mxu0 0.0
  %2438 = vmatprep.subr.mxu0 0.0
  %2439 = vmatpush1.msra.mxu0 0.0
  %2440 = vmatprep.subr.mxu0 0.0
  %2441 = vmatpush1.msra.mxu0 0.0
  %2442 = vmatprep.subr.mxu0 0.0
  %2443 = vmatpush1.msra.mxu0 0.0
  %2444 = vmatprep.subr.mxu0 0.0
  %2445 = vmatpush1.msra.mxu0 0.0
  %2446 = vmatprep.subr.mxu0 0.0
  %2447 = vmatpush1.msra.mxu0 0.0
  %2448 = vmatprep.subr.mxu0 0.0
  %2449 = vmatpush1.msra.mxu0 0.0
  %2450 = vmatprep.subr.mxu0 0.0
  %2451 = vmatpush1.msra.mxu0 0.0
  %2452 = vmatprep.subr.mxu0 0.0
  %2453 = vmatpush1.msra.mxu0 0.0
  %2454 = vmatprep.subr.mxu0 0.0
  %2455 = vmatpush1.msra.mxu0 0.0
  %2456 = vmatprep.subr.mxu0 0.0
  %2457 = vmatpush1.msra.mxu0 0.0
  %2458 = vmatprep.mubr.f32.mxu0 0.0
  %2459 = vmatmul.mubr.f32.gmra.mrb[0].mxu0 %v2392
  %v2460 = vpop.f32.mrb[0].mxu0
  %v2461 = vadd.f32 %v2388, %v2460
  %v2462 = vpop.f32.mrb[0].mxu0
  %2463 = vdwg.mxu0
  %v2464 = vadd.f32 %v2380, %v2461
  %v2465 = vxor.u32 %v2464, 2147483648
  %v2466 = vmul.f32 %v2465, 1.442695
  %v2467 = vpow.pop %v2466
  %v2468 = vadd.f32 %v2467, 1.0
  %v2469 = vrcp.pop %v2468
  %v2470 = vmul.f32 1.0, %v2469
  %2472 = vrot.lane.b32.xlu0 %v2461, 96
  %v2473 = vpop.permute.xlu0 %2472
  %v2475 = vmul.f32 %v2470, %v2473
  %2477 = vrot.lane.b32.xlu0 %v2475, 32
  %v2478 = vpop.permute.xlu0 %2477
  %v2480 = vadd.f32 %v2380, %v2478
  %v2481 = vtanh.pop %v2480
  %v2482 = vsub.f32 1.0, %v2470
  %2484 = vrot.lane.b32.xlu0 %v2481, 112
  %v2485 = vpop.permute.xlu0 %2484
  %v2487 = vmul.f32 %v2482, %v2485
  %v2488 = vmul.f32 %v2470, 0.0
  %v2489 = vadd.f32 %v2487, %v2488
  %2491 = vrot.lane.b32.xlu0 %v2489, 112
  %v2492 = vpop.permute.xlu0 %2491
  %v2493 = vsel %vm2390, %v2492, 0
  %2495 = vmatprep.subr.mxu0 0.0
  %2496 = vmatpush1.msra.mxu0 %v2381
  %2497 = vmatprep.subr.mxu0 0.0
  %2498 = vmatpush1.msra.mxu0 %v2382
  %2499 = vmatprep.subr.mxu0 0.0
  %2500 = vmatpush1.msra.mxu0 0.0
  %2501 = vmatprep.subr.mxu0 0.0
  %2502 = vmatpush1.msra.mxu0 0.0
  %2503 = vmatprep.subr.mxu0 0.0
  %2504 = vmatpush1.msra.mxu0 0.0
  %2505 = vmatprep.subr.mxu0 0.0
  %2506 = vmatpush1.msra.mxu0 0.0
  %2507 = vmatprep.subr.mxu0 0.0
  %2508 = vmatpush1.msra.mxu0 0.0
  %2509 = vmatprep.subr.mxu0 0.0
  %2510 = vmatpush1.msra.mxu0 0.0
  %2511 = vmatprep.subr.mxu0 0.0
  %2512 = vmatpush1.msra.mxu0 0.0
  %2513 = vmatprep.subr.mxu0 0.0
  %2514 = vmatpush1.msra.mxu0 0.0
  %2515 = vmatprep.subr.mxu0 0.0
  %2516 = vmatpush1.msra.mxu0 0.0
  %2517 = vmatprep.subr.mxu0 0.0
  %2518 = vmatpush1.msra.mxu0 0.0
  %2519 = vmatprep.subr.mxu0 0.0
  %2520 = vmatpush1.msra.mxu0 0.0
  %2521 = vmatprep.subr.mxu0 0.0
  %2522 = vmatpush1.msra.mxu0 0.0
  %2523 = vmatprep.subr.mxu0 0.0
  %2524 = vmatpush1.msra.mxu0 0.0
  %2525 = vmatprep.subr.mxu0 0.0
  %2526 = vmatpush1.msra.mxu0 0.0
  %2527 = vmatprep.subr.mxu0 0.0
  %2528 = vmatpush1.msra.mxu0 0.0
  %2529 = vmatprep.subr.mxu0 0.0
  %2530 = vmatpush1.msra.mxu0 0.0
  %2531 = vmatprep.subr.mxu0 0.0
  %2532 = vmatpush1.msra.mxu0 0.0
  %2533 = vmatprep.subr.mxu0 0.0
  %2534 = vmatpush1.msra.mxu0 0.0
  %2535 = vmatprep.subr.mxu0 0.0
  %2536 = vmatpush1.msra.mxu0 0.0
  %2537 = vmatprep.subr.mxu0 0.0
  %2538 = vmatpush1.msra.mxu0 0.0
  %2539 = vmatprep.subr.mxu0 0.0
  %2540 = vmatpush1.msra.mxu0 0.0
  %2541 = vmatprep.subr.mxu0 0.0
  %2542 = vmatpush1.msra.mxu0 0.0
  %2543 = vmatprep.subr.mxu0 0.0
  %2544 = vmatpush1.msra.mxu0 0.0
  %2545 = vmatprep.subr.mxu0 0.0
  %2546 = vmatpush1.msra.mxu0 0.0
  %2547 = vmatprep.subr.mxu0 0.0
  %2548 = vmatpush1.msra.mxu0 0.0
  %2549 = vmatprep.subr.mxu0 0.0
  %2550 = vmatpush1.msra.mxu0 0.0
  %2551 = vmatprep.subr.mxu0 0.0
  %2552 = vmatpush1.msra.mxu0 0.0
  %2553 = vmatprep.subr.mxu0 0.0
  %2554 = vmatpush1.msra.mxu0 0.0
  %2555 = vmatprep.subr.mxu0 0.0
  %2556 = vmatpush1.msra.mxu0 0.0
  %2557 = vmatprep.subr.mxu0 0.0
  %2558 = vmatpush1.msra.mxu0 0.0
  %2559 = vmatprep.mubr.f32.mxu0 0.0
  %2560 = vmatmul.mubr.f32.gmra.mrb[0].mxu0 %v2493
  %v2561 = vpop.f32.mrb[0].mxu0
  %v2562 = vadd.f32 %v2388, %v2561
  %v2563 = vpop.f32.mrb[0].mxu0
  %2564 = vdwg.mxu0
  %v2566 = vrot.slane %v2562, 6
  %v2568 = vadd.f32 %v2380, %v2566
  %v2569 = vxor.u32 %v2568, 2147483648
  %v2570 = vmul.f32 %v2569, 1.442695
  %v2571 = vpow.pop %v2570
  %v2572 = vadd.f32 %v2571, 1.0
  %v2573 = vrcp.pop %v2572
  %v2574 = vmul.f32 1.0, %v2573
  %2575 = vrot.lane.b32.xlu0 %v2566, 96
  %v2576 = vpop.permute.xlu0 %2575
  %v2578 = vmul.f32 %v2574, %v2576
  %2580 = vrot.lane.b32.xlu0 %v2578, 32
  %v2581 = vpop.permute.xlu0 %2580
  %v2583 = vadd.f32 %v2380, %v2581
  %v2584 = vtanh.pop %v2583
  %v2585 = vsub.f32 1.0, %v2574
  %2587 = vrot.lane.b32.xlu0 %v2584, 112
  %v2588 = vpop.permute.xlu0 %2587
  %v2590 = vmul.f32 %v2585, %v2588
  %v2591 = vrot.slane %v2489, 6
  %v2593 = vmul.f32 %v2574, %v2591
  %v2594 = vadd.f32 %v2590, %v2593
  %v2596 = vrot.slane %v2594, 2
  %2597 = vrot.lane.b32.xlu0 %v2596, 112
  %v2598 = vpop.permute.xlu0 %2597
  %v2599 = vsel %vm2390, %v2598, 0
  %2601 = vmatprep.subr.mxu0 0.0
  %2602 = vmatpush1.msra.mxu0 %v2381
  %2603 = vmatprep.subr.mxu0 0.0
  %2604 = vmatpush1.msra.mxu0 %v2382
  %2605 = vmatprep.subr.mxu0 0.0
  %2606 = vmatpush1.msra.mxu0 0.0
  %2607 = vmatprep.subr.mxu0 0.0
  %2608 = vmatpush1.msra.mxu0 0.0
  %2609 = vmatprep.subr.mxu0 0.0
  %2610 = vmatpush1.msra.mxu0 0.0
  %2611 = vmatprep.subr.mxu0 0.0
  %2612 = vmatpush1.msra.mxu0 0.0
  %2613 = vmatprep.subr.mxu0 0.0
  %2614 = vmatpush1.msra.mxu0 0.0
  %2615 = vmatprep.subr.mxu0 0.0
  %2616 = vmatpush1.msra.mxu0 0.0
  %2617 = vmatprep.subr.mxu0 0.0
  %2618 = vmatpush1.msra.mxu0 0.0
  %2619 = vmatprep.subr.mxu0 0.0
  %2620 = vmatpush1.msra.mxu0 0.0
  %2621 = vmatprep.subr.mxu0 0.0
  %2622 = vmatpush1.msra.mxu0 0.0
  %2623 = vmatprep.subr.mxu0 0.0
  %2624 = vmatpush1.msra.mxu0 0.0
  %2625 = vmatprep.subr.mxu0 0.0
  %2626 = vmatpush1.msra.mxu0 0.0
  %2627 = vmatprep.subr.mxu0 0.0
  %2628 = vmatpush1.msra.mxu0 0.0
  %2629 = vmatprep.subr.mxu0 0.0
  %2630 = vmatpush1.msra.mxu0 0.0
  %2631 = vmatprep.subr.mxu0 0.0
  %2632 = vmatpush1.msra.mxu0 0.0
  %2633 = vmatprep.subr.mxu0 0.0
  %2634 = vmatpush1.msra.mxu0 0.0
  %2635 = vmatprep.subr.mxu0 0.0
  %2636 = vmatpush1.msra.mxu0 0.0
  %2637 = vmatprep.subr.mxu0 0.0
  %2638 = vmatpush1.msra.mxu0 0.0
  %2639 = vmatprep.subr.mxu0 0.0
  %2640 = vmatpush1.msra.mxu0 0.0
  %2641 = vmatprep.subr.mxu0 0.0
  %2642 = vmatpush1.msra.mxu0 0.0
  %2643 = vmatprep.subr.mxu0 0.0
  %2644 = vmatpush1.msra.mxu0 0.0
  %2645 = vmatprep.subr.mxu0 0.0
  %2646 = vmatpush1.msra.mxu0 0.0
  %2647 = vmatprep.subr.mxu0 0.0
  %2648 = vmatpush1.msra.mxu0 0.0
  %2649 = vmatprep.subr.mxu0 0.0
  %2650 = vmatpush1.msra.mxu0 0.0
  %2651 = vmatprep.subr.mxu0 0.0
  %2652 = vmatpush1.msra.mxu0 0.0
  %2653 = vmatprep.subr.mxu0 0.0
  %2654 = vmatpush1.msra.mxu0 0.0
  %2655 = vmatprep.subr.mxu0 0.0
  %2656 = vmatpush1.msra.mxu0 0.0
  %2657 = vmatprep.subr.mxu0 0.0
  %2658 = vmatpush1.msra.mxu0 0.0
  %2659 = vmatprep.subr.mxu0 0.0
  %2660 = vmatpush1.msra.mxu0 0.0
  %2661 = vmatprep.subr.mxu0 0.0
  %2662 = vmatpush1.msra.mxu0 0.0
  %2663 = vmatprep.subr.mxu0 0.0
  %2664 = vmatpush1.msra.mxu0 0.0
  %2665 = vmatprep.mubr.f32.mxu0 0.0
  %2666 = vmatmul.mubr.f32.gmra.mrb[0].mxu0 %v2599
  %v2667 = vpop.f32.mrb[0].mxu0
  %v2668 = vadd.f32 %v2388, %v2667
  %v2669 = vpop.f32.mrb[0].mxu0
  %2670 = vdwg.mxu0
  %v2672 = vrot.slane %v2668, 4
  %v2674 = vadd.f32 %v2380, %v2672
  %v2675 = vxor.u32 %v2674, 2147483648
  %v2676 = vmul.f32 %v2675, 1.442695
  %v2677 = vpow.pop %v2676
  %v2678 = vadd.f32 %v2677, 1.0
  %v2679 = vrcp.pop %v2678
  %v2680 = vmul.f32 1.0, %v2679
  %2681 = vrot.lane.b32.xlu0 %v2672, 96
  %v2682 = vpop.permute.xlu0 %2681
  %v2684 = vmul.f32 %v2680, %v2682
  %2686 = vrot.lane.b32.xlu0 %v2684, 32
  %v2687 = vpop.permute.xlu0 %2686
  %v2689 = vadd.f32 %v2380, %v2687
  %v2690 = vtanh.pop %v2689
  %v2691 = vsub.f32 1.0, %v2680
  %2693 = vrot.lane.b32.xlu0 %v2690, 112
  %v2694 = vpop.permute.xlu0 %2693
  %v2696 = vmul.f32 %v2691, %v2694
  %v2697 = vrot.slane %v2594, 6
  %v2699 = vmul.f32 %v2680, %v2697
  %v2700 = vadd.f32 %v2696, %v2699
  %v2702 = vrot.slane %v2700, 4
  %2703 = vrot.lane.b32.xlu0 %v2702, 112
  %v2704 = vpop.permute.xlu0 %2703
  %v2705 = vsel %vm2390, %v2704, 0
  %2707 = vmatprep.subr.mxu0 0.0
  %2708 = vmatpush1.msra.mxu0 %v2381
  %2709 = vmatprep.subr.mxu0 0.0
  %2710 = vmatpush1.msra.mxu0 %v2382
  %2711 = vmatprep.subr.mxu0 0.0
  %2712 = vmatpush1.msra.mxu0 0.0
  %2713 = vmatprep.subr.mxu0 0.0
  %2714 = vmatpush1.msra.mxu0 0.0
  %2715 = vmatprep.subr.mxu0 0.0
  %2716 = vmatpush1.msra.mxu0 0.0
  %2717 = vmatprep.subr.mxu0 0.0
  %2718 = vmatpush1.msra.mxu0 0.0
  %2719 = vmatprep.subr.mxu0 0.0
  %2720 = vmatpush1.msra.mxu0 0.0
  %2721 = vmatprep.subr.mxu0 0.0
  %2722 = vmatpush1.msra.mxu0 0.0
  %2723 = vmatprep.subr.mxu0 0.0
  %2724 = vmatpush1.msra.mxu0 0.0
  %2725 = vmatprep.subr.mxu0 0.0
  %2726 = vmatpush1.msra.mxu0 0.0
  %2727 = vmatprep.subr.mxu0 0.0
  %2728 = vmatpush1.msra.mxu0 0.0
  %2729 = vmatprep.subr.mxu0 0.0
  %2730 = vmatpush1.msra.mxu0 0.0
  %2731 = vmatprep.subr.mxu0 0.0
  %2732 = vmatpush1.msra.mxu0 0.0
  %2733 = vmatprep.subr.mxu0 0.0
  %2734 = vmatpush1.msra.mxu0 0.0
  %2735 = vmatprep.subr.mxu0 0.0
  %2736 = vmatpush1.msra.mxu0 0.0
  %2737 = vmatprep.subr.mxu0 0.0
  %2738 = vmatpush1.msra.mxu0 0.0
  %2739 = vmatprep.subr.mxu0 0.0
  %2740 = vmatpush1.msra.mxu0 0.0
  %2741 = vmatprep.subr.mxu0 0.0
  %2742 = vmatpush1.msra.mxu0 0.0
  %2743 = vmatprep.subr.mxu0 0.0
  %2744 = vmatpush1.msra.mxu0 0.0
  %2745 = vmatprep.subr.mxu0 0.0
  %2746 = vmatpush1.msra.mxu0 0.0
  %2747 = vmatprep.subr.mxu0 0.0
  %2748 = vmatpush1.msra.mxu0 0.0
  %2749 = vmatprep.subr.mxu0 0.0
  %2750 = vmatpush1.msra.mxu0 0.0
  %2751 = vmatprep.subr.mxu0 0.0
  %2752 = vmatpush1.msra.mxu0 0.0
  %2753 = vmatprep.subr.mxu0 0.0
  %2754 = vmatpush1.msra.mxu0 0.0
  %2755 = vmatprep.subr.mxu0 0.0
  %2756 = vmatpush1.msra.mxu0 0.0
  %2757 = vmatprep.subr.mxu0 0.0
  %2758 = vmatpush1.msra.mxu0 0.0
  %2759 = vmatprep.subr.mxu0 0.0
  %2760 = vmatpush1.msra.mxu0 0.0
  %2761 = vmatprep.subr.mxu0 0.0
  %2762 = vmatpush1.msra.mxu0 0.0
  %2763 = vmatprep.subr.mxu0 0.0
  %2764 = vmatpush1.msra.mxu0 0.0
  %2765 = vmatprep.subr.mxu0 0.0
  %2766 = vmatpush1.msra.mxu0 0.0
  %2767 = vmatprep.subr.mxu0 0.0
  %2768 = vmatpush1.msra.mxu0 0.0
  %2769 = vmatprep.subr.mxu0 0.0
  %2770 = vmatpush1.msra.mxu0 0.0
  %2771 = vmatprep.mubr.f32.mxu0 0.0
  %2772 = vmatmul.mubr.f32.gmra.mrb[0].mxu0 %v2705
  %v2773 = vpop.f32.mrb[0].mxu0
  %v2774 = vadd.f32 %v2388, %v2773
  %v2775 = vpop.f32.mrb[0].mxu0
  %2776 = vdwg.mxu0
  %v2778 = vrot.slane %v2774, 2
  %v2780 = vadd.f32 %v2380, %v2778
  %v2781 = vxor.u32 %v2780, 2147483648
  %v2782 = vmul.f32 %v2781, 1.442695
  %v2783 = vpow.pop %v2782
  %v2784 = vadd.f32 %v2783, 1.0
  %v2785 = vrcp.pop %v2784
  %v2786 = vmul.f32 1.0, %v2785
  %2787 = vrot.lane.b32.xlu0 %v2778, 96
  %v2788 = vpop.permute.xlu0 %2787
  %v2790 = vmul.f32 %v2786, %v2788
  %2792 = vrot.lane.b32.xlu0 %v2790, 32
  %v2793 = vpop.permute.xlu0 %2792
  %v2795 = vadd.f32 %v2380, %v2793
  %v2796 = vtanh.pop %v2795
  %v2797 = vsub.f32 1.0, %v2786
  %2799 = vrot.lane.b32.xlu0 %v2796, 112
  %v2800 = vpop.permute.xlu0 %2799
  %v2802 = vmul.f32 %v2797, %v2800
  %v2803 = vrot.slane %v2700, 6
  %v2805 = vmul.f32 %v2786, %v2803
  %v2806 = vadd.f32 %v2802, %v2805
  %v2807 = vld [vmem:[%s11] sm:$0xff]
  %v2808 = vld [vmem:[%s11 + $0x8] sm:$0x3]
  %v2809 = vtanh.pop %v2807
  %v2810 = vtanh.pop %v2808
  %v2811 = vld [vmem:[%s12] sm:$0xff]
  %v2812 = vld [vmem:[%s12 + $0x8] sm:$0xff]
  %v2814 = vrot.slane %v2806, 6
  %2815 = vrot.lane.b32.xlu0 %v2814, 112
  %v2816 = vpop.permute.xlu0 %2815
  %v2817 = vsel %vm2390, %v2816, 0
  %2819 = vmatprep.subr.mxu0 0.0
  %2820 = vmatpush1.msra.mxu0 %v2811
  %2821 = vmatprep.subr.mxu0 0.0
  %2822 = vmatpush1.msra.mxu0 %v2812
  %2823 = vmatprep.subr.mxu0 0.0
  %2824 = vmatpush1.msra.mxu0 0.0
  %2825 = vmatprep.subr.mxu0 0.0
  %2826 = vmatpush1.msra.mxu0 0.0
  %2827 = vmatprep.subr.mxu0 0.0
  %2828 = vmatpush1.msra.mxu0 0.0
  %2829 = vmatprep.subr.mxu0 0.0
  %2830 = vmatpush1.msra.mxu0 0.0
  %2831 = vmatprep.subr.mxu0 0.0
  %2832 = vmatpush1.msra.mxu0 0.0
  %2833 = vmatprep.subr.mxu0 0.0
  %2834 = vmatpush1.msra.mxu0 0.0
  %2835 = vmatprep.subr.mxu0 0.0
  %2836 = vmatpush1.msra.mxu0 0.0
  %2837 = vmatprep.subr.mxu0 0.0
  %2838 = vmatpush1.msra.mxu0 0.0
  %2839 = vmatprep.subr.mxu0 0.0
  %2840 = vmatpush1.msra.mxu0 0.0
  %2841 = vmatprep.subr.mxu0 0.0
  %2842 = vmatpush1.msra.mxu0 0.0
  %2843 = vmatprep.subr.mxu0 0.0
  %2844 = vmatpush1.msra.mxu0 0.0
  %2845 = vmatprep.subr.mxu0 0.0
  %2846 = vmatpush1.msra.mxu0 0.0
  %2847 = vmatprep.subr.mxu0 0.0
  %2848 = vmatpush1.msra.mxu0 0.0
  %2849 = vmatprep.subr.mxu0 0.0
  %2850 = vmatpush1.msra.mxu0 0.0
  %2851 = vmatprep.subr.mxu0 0.0
  %2852 = vmatpush1.msra.mxu0 0.0
  %2853 = vmatprep.subr.mxu0 0.0
  %2854 = vmatpush1.msra.mxu0 0.0
  %2855 = vmatprep.subr.mxu0 0.0
  %2856 = vmatpush1.msra.mxu0 0.0
  %2857 = vmatprep.subr.mxu0 0.0
  %2858 = vmatpush1.msra.mxu0 0.0
  %2859 = vmatprep.subr.mxu0 0.0
  %2860 = vmatpush1.msra.mxu0 0.0
  %2861 = vmatprep.subr.mxu0 0.0
  %2862 = vmatpush1.msra.mxu0 0.0
  %2863 = vmatprep.subr.mxu0 0.0
  %2864 = vmatpush1.msra.mxu0 0.0
  %2865 = vmatprep.subr.mxu0 0.0
  %2866 = vmatpush1.msra.mxu0 0.0
  %2867 = vmatprep.subr.mxu0 0.0
  %2868 = vmatpush1.msra.mxu0 0.0
  %2869 = vmatprep.subr.mxu0 0.0
  %2870 = vmatpush1.msra.mxu0 0.0
  %2871 = vmatprep.subr.mxu0 0.0
  %2872 = vmatpush1.msra.mxu0 0.0
  %2873 = vmatprep.subr.mxu0 0.0
  %2874 = vmatpush1.msra.mxu0 0.0
  %2875 = vmatprep.subr.mxu0 0.0
  %2876 = vmatpush1.msra.mxu0 0.0
  %2877 = vmatprep.subr.mxu0 0.0
  %2878 = vmatpush1.msra.mxu0 0.0
  %2879 = vmatprep.subr.mxu0 0.0
  %2880 = vmatpush1.msra.mxu0 0.0
  %2881 = vmatprep.subr.mxu0 0.0
  %2882 = vmatpush1.msra.mxu0 0.0
  %2883 = vmatprep.mubr.f32.mxu0 0.0
  %2884 = vmatmul.mubr.f32.gmra.mrb[0].mxu0 %v2817
  %v2885 = vpop.f32.mrb[0].mxu0
  %v2886 = vadd.f32 0.0, %v2885
  %v2887 = vpop.f32.mrb[0].mxu0
  %2888 = vdwg.mxu0
  %v2889 = vld [vmem:[%s13] sm:$0xff]
  %v2891 = vsel %vm1751, %v2809, 0
  %v2894 = vsel %vm1751, %v2810, 0
  %2896 = vmatprep.subr.mxu0 0.0
  %2897 = vmatpush1.msra.mxu0 %v2889
  %2898 = vmatprep.subr.mxu0 0.0
  %2899 = vmatpush1.msra.mxu0 0.0
  %2900 = vmatprep.subr.mxu0 0.0
  %2901 = vmatpush1.msra.mxu0 0.0
  %2902 = vmatprep.subr.mxu0 0.0
  %2903 = vmatpush1.msra.mxu0 0.0
  %2904 = vmatprep.subr.mxu0 0.0
  %2905 = vmatpush1.msra.mxu0 0.0
  %2906 = vmatprep.subr.mxu0 0.0
  %2907 = vmatpush1.msra.mxu0 0.0
  %2908 = vmatprep.subr.mxu0 0.0
  %2909 = vmatpush1.msra.mxu0 0.0
  %2910 = vmatprep.subr.mxu0 0.0
  %2911 = vmatpush1.msra.mxu0 0.0
  %2912 = vmatprep.subr.mxu0 0.0
  %2913 = vmatpush1.msra.mxu0 0.0
  %2914 = vmatprep.subr.mxu0 0.0
  %2915 = vmatpush1.msra.mxu0 0.0
  %2916 = vmatprep.subr.mxu0 0.0
  %2917 = vmatpush1.msra.mxu0 0.0
  %2918 = vmatprep.subr.mxu0 0.0
  %2919 = vmatpush1.msra.mxu0 0.0
  %2920 = vmatprep.subr.mxu0 0.0
  %2921 = vmatpush1.msra.mxu0 0.0
  %2922 = vmatprep.subr.mxu0 0.0
  %2923 = vmatpush1.msra.mxu0 0.0
  %2924 = vmatprep.subr.mxu0 0.0
  %2925 = vmatpush1.msra.mxu0 0.0
  %2926 = vmatprep.subr.mxu0 0.0
  %2927 = vmatpush1.msra.mxu0 0.0
  %2928 = vmatprep.subr.mxu0 0.0
  %2929 = vmatpush1.msra.mxu0 0.0
  %2930 = vmatprep.subr.mxu0 0.0
  %2931 = vmatpush1.msra.mxu0 0.0
  %2932 = vmatprep.subr.mxu0 0.0
  %2933 = vmatpush1.msra.mxu0 0.0
  %2934 = vmatprep.subr.mxu0 0.0
  %2935 = vmatpush1.msra.mxu0 0.0
  %2936 = vmatprep.subr.mxu0 0.0
  %2937 = vmatpush1.msra.mxu0 0.0
  %2938 = vmatprep.subr.mxu0 0.0
  %2939 = vmatpush1.msra.mxu0 0.0
  %2940 = vmatprep.subr.mxu0 0.0
  %2941 = vmatpush1.msra.mxu0 0.0
  %2942 = vmatprep.subr.mxu0 0.0
  %2943 = vmatpush1.msra.mxu0 0.0
  %2944 = vmatprep.subr.mxu0 0.0
  %2945 = vmatpush1.msra.mxu0 0.0
  %2946 = vmatprep.subr.mxu0 0.0
  %2947 = vmatpush1.msra.mxu0 0.0
  %2948 = vmatprep.subr.mxu0 0.0
  %2949 = vmatpush1.msra.mxu0 0.0
  %2950 = vmatprep.subr.mxu0 0.0
  %2951 = vmatpush1.msra.mxu0 0.0
  %2952 = vmatprep.subr.mxu0 0.0
  %2953 = vmatpush1.msra.mxu0 0.0
  %2954 = vmatprep.subr.mxu0 0.0
  %2955 = vmatpush1.msra.mxu0 0.0
  %2956 = vmatprep.subr.mxu0 0.0
  %2957 = vmatpush1.msra.mxu0 0.0
  %2958 = vmatprep.subr.mxu0 0.0
  %2959 = vmatpush1.msra.mxu0 0.0
  %2960 = vmatprep.mubr.f32.mxu0 0.0
  %2961 = vmatmul.mubr.f32.gmra.mrb[0].mxu0 %v2891
  %v2962 = vpop.f32.mrb[0].mxu0
  %v2963 = vadd.f32 0.0, %v2962
  %v2964 = vpop.f32.mrb[0].mxu0
  %2965 = vmatprep.mubr.f32.mxu0 0.0
  %2966 = vmatmul.mubr.f32.gmra.mrb[0].mxu0 %v2894
  %v2967 = vpop.f32.mrb[0].mxu0
  %v2968 = vadd.f32 0.0, %v2967
  %v2969 = vpop.f32.mrb[0].mxu0
  %2970 = vdwg.mxu0
  %v2971 = vld [vmem:[%s14] sm:$0xff]
  %2972 = vmatprep.subr.mxu0 0.0
  %2973 = vmatpush1.msra.mxu0 %v2971
  %2974 = vmatprep.subr.mxu0 0.0
  %2975 = vmatpush1.msra.mxu0 0.0
  %2976 = vmatprep.subr.mxu0 0.0
  %2977 = vmatpush1.msra.mxu0 0.0
  %2978 = vmatprep.subr.mxu0 0.0
  %2979 = vmatpush1.msra.mxu0 0.0
  %2980 = vmatprep.subr.mxu0 0.0
  %2981 = vmatpush1.msra.mxu0 0.0
  %2982 = vmatprep.subr.mxu0 0.0
  %2983 = vmatpush1.msra.mxu0 0.0
  %2984 = vmatprep.subr.mxu0 0.0
  %2985 = vmatpush1.msra.mxu0 0.0
  %2986 = vmatprep.subr.mxu0 0.0
  %2987 = vmatpush1.msra.mxu0 0.0
  %2988 = vmatprep.subr.mxu0 0.0
  %2989 = vmatpush1.msra.mxu0 0.0
  %2990 = vmatprep.subr.mxu0 0.0
  %2991 = vmatpush1.msra.mxu0 0.0
  %2992 = vmatprep.subr.mxu0 0.0
  %2993 = vmatpush1.msra.mxu0 0.0
  %2994 = vmatprep.subr.mxu0 0.0
  %2995 = vmatpush1.msra.mxu0 0.0
  %2996 = vmatprep.subr.mxu0 0.0
  %2997 = vmatpush1.msra.mxu0 0.0
  %2998 = vmatprep.subr.mxu0 0.0
  %2999 = vmatpush1.msra.mxu0 0.0
  %3000 = vmatprep.subr.mxu0 0.0
  %3001 = vmatpush1.msra.mxu0 0.0
  %3002 = vmatprep.subr.mxu0 0.0
  %3003 = vmatpush1.msra.mxu0 0.0
  %3004 = vmatprep.subr.mxu0 0.0
  %3005 = vmatpush1.msra.mxu0 0.0
  %3006 = vmatprep.subr.mxu0 0.0
  %3007 = vmatpush1.msra.mxu0 0.0
  %3008 = vmatprep.subr.mxu0 0.0
  %3009 = vmatpush1.msra.mxu0 0.0
  %3010 = vmatprep.subr.mxu0 0.0
  %3011 = vmatpush1.msra.mxu0 0.0
  %3012 = vmatprep.subr.mxu0 0.0
  %3013 = vmatpush1.msra.mxu0 0.0
  %3014 = vmatprep.subr.mxu0 0.0
  %3015 = vmatpush1.msra.mxu0 0.0
  %3016 = vmatprep.subr.mxu0 0.0
  %3017 = vmatpush1.msra.mxu0 0.0
  %3018 = vmatprep.subr.mxu0 0.0
  %3019 = vmatpush1.msra.mxu0 0.0
  %3020 = vmatprep.subr.mxu0 0.0
  %3021 = vmatpush1.msra.mxu0 0.0
  %3022 = vmatprep.subr.mxu0 0.0
  %3023 = vmatpush1.msra.mxu0 0.0
  %3024 = vmatprep.subr.mxu0 0.0
  %3025 = vmatpush1.msra.mxu0 0.0
  %3026 = vmatprep.subr.mxu0 0.0
  %3027 = vmatpush1.msra.mxu0 0.0
  %3028 = vmatprep.subr.mxu0 0.0
  %3029 = vmatpush1.msra.mxu0 0.0
  %3030 = vmatprep.subr.mxu0 0.0
  %3031 = vmatpush1.msra.mxu0 0.0
  %3032 = vmatprep.subr.mxu0 0.0
  %3033 = vmatpush1.msra.mxu0 0.0
  %3034 = vmatprep.subr.mxu0 0.0
  %3035 = vmatpush1.msra.mxu0 0.0
  %3036 = vmatprep.mubr.f32.mxu0 0.0
  %3037 = vmatmul.mubr.f32.gmra.mrb[0].mxu0 %v2891
  %v3038 = vpop.f32.mrb[0].mxu0
  %v3039 = vadd.f32 0.0, %v3038
  %v3040 = vpop.f32.mrb[0].mxu0
  %3041 = vmatprep.mubr.f32.mxu0 0.0
  %3042 = vmatmul.mubr.f32.gmra.mrb[0].mxu0 %v2894
  %v3043 = vpop.f32.mrb[0].mxu0
  %v3044 = vadd.f32 0.0, %v3043
  %v3045 = vpop.f32.mrb[0].mxu0
  %3046 = vdwg.mxu0
  %v3048 = vsel %vm1751, %v2886, 0
  %v3051 = vsel %vm1751, %v2963, 0
  %v3054 = vsel %vm1751, %v2968, 0
  %3056 = vmatprep.subr.mxu0 0.0
  %3057 = vmatpush1.xpose.msra.mxu0 %v3051
  %3058 = vmatprep.subr.mxu0 0.0
  %3059 = vmatpush1.xpose.msra.mxu0 %v3054
  %3060 = vmatprep.subr.mxu0 0.0
  %3061 = vmatpush1.xpose.msra.mxu0 0.0
  %3062 = vmatprep.subr.mxu0 0.0
  %3063 = vmatpush1.xpose.msra.mxu0 0.0
  %3064 = vmatprep.subr.mxu0 0.0
  %3065 = vmatpush1.xpose.msra.mxu0 0.0
  %3066 = vmatprep.subr.mxu0 0.0
  %3067 = vmatpush1.xpose.msra.mxu0 0.0
  %3068 = vmatprep.subr.mxu0 0.0
  %3069 = vmatpush1.xpose.msra.mxu0 0.0
  %3070 = vmatprep.subr.mxu0 0.0
  %3071 = vmatpush1.xpose.msra.mxu0 0.0
  %3072 = vmatprep.subr.mxu0 0.0
  %3073 = vmatpush1.xpose.msra.mxu0 0.0
  %3074 = vmatprep.subr.mxu0 0.0
  %3075 = vmatpush1.xpose.msra.mxu0 0.0
  %3076 = vmatprep.subr.mxu0 0.0
  %3077 = vmatpush1.xpose.msra.mxu0 0.0
  %3078 = vmatprep.subr.mxu0 0.0
  %3079 = vmatpush1.xpose.msra.mxu0 0.0
  %3080 = vmatprep.subr.mxu0 0.0
  %3081 = vmatpush1.xpose.msra.mxu0 0.0
  %3082 = vmatprep.subr.mxu0 0.0
  %3083 = vmatpush1.xpose.msra.mxu0 0.0
  %3084 = vmatprep.subr.mxu0 0.0
  %3085 = vmatpush1.xpose.msra.mxu0 0.0
  %3086 = vmatprep.subr.mxu0 0.0
  %3087 = vmatpush1.xpose.msra.mxu0 0.0
  %3088 = vmatprep.subr.mxu0 0.0
  %3089 = vmatpush1.xpose.msra.mxu0 0.0
  %3090 = vmatprep.subr.mxu0 0.0
  %3091 = vmatpush1.xpose.msra.mxu0 0.0
  %3092 = vmatprep.subr.mxu0 0.0
  %3093 = vmatpush1.xpose.msra.mxu0 0.0
  %3094 = vmatprep.subr.mxu0 0.0
  %3095 = vmatpush1.xpose.msra.mxu0 0.0
  %3096 = vmatprep.subr.mxu0 0.0
  %3097 = vmatpush1.xpose.msra.mxu0 0.0
  %3098 = vmatprep.subr.mxu0 0.0
  %3099 = vmatpush1.xpose.msra.mxu0 0.0
  %3100 = vmatprep.subr.mxu0 0.0
  %3101 = vmatpush1.xpose.msra.mxu0 0.0
  %3102 = vmatprep.subr.mxu0 0.0
  %3103 = vmatpush1.xpose.msra.mxu0 0.0
  %3104 = vmatprep.subr.mxu0 0.0
  %3105 = vmatpush1.xpose.msra.mxu0 0.0
  %3106 = vmatprep.subr.mxu0 0.0
  %3107 = vmatpush1.xpose.msra.mxu0 0.0
  %3108 = vmatprep.subr.mxu0 0.0
  %3109 = vmatpush1.xpose.msra.mxu0 0.0
  %3110 = vmatprep.subr.mxu0 0.0
  %3111 = vmatpush1.xpose.msra.mxu0 0.0
  %3112 = vmatprep.subr.mxu0 0.0
  %3113 = vmatpush1.xpose.msra.mxu0 0.0
  %3114 = vmatprep.subr.mxu0 0.0
  %3115 = vmatpush1.xpose.msra.mxu0 0.0
  %3116 = vmatprep.subr.mxu0 0.0
  %3117 = vmatpush1.xpose.msra.mxu0 0.0
  %3118 = vmatprep.subr.mxu0 0.0
  %3119 = vmatpush1.xpose.msra.mxu0 0.0
  %3120 = vmatprep.mubr.f32.mxu0 0.0
  %3121 = vmatmul.mubr.f32.gmra.mrb[0].mxu0 %v3048
  %v3122 = vpop.f32.mrb[0].mxu0
  %v3123 = vadd.f32 0.0, %v3122
  %v3124 = vpop.f32.mrb[0].mxu0
  %3125 = vdwg.mxu0
  %v3126 = vmul.f32 %v3123, 0.35355338
  %vm3127 = vcmask 74752
  %v3128 = vsel %vm3127, %v3126, -inf
  %3129 = vmax.xlane.f32.xlu0 %v3128
  %v3130 = vpop.xlane.xlu0 %3129
  %v3131 = vsub.f32 %v3126, %v3130
  %v3132 = vmul.f32 %v3131, 1.442695
  %v3133 = vpow.pop %v3132
  %v3134 = vsel %vm3127, %v3133, 0.0
  %3135 = vadd.xlane.f32.xlu0 %v3134
  %v3136 = vpop.xlane.xlu0 %3135
  %v3137 = vrcp.pop %v3136
  %v3138 = vmul.f32 %v3133, %v3137
  %vm3139 = vcmask 80896
  %v3141 = vsel %vm3139, %v3138, 0
  %vm3143 = vcmask 1041408
  %v3145 = vsel %vm3143, %v3044, 0
  %3147 = vmatprep.subr.mxu0 0.0
  %3148 = vmatpush1.msra.mxu0 %v3039
  %3149 = vmatprep.subr.mxu0 0.0
  %3150 = vmatpush1.msra.mxu0 %v3145
  %3151 = vmatprep.subr.mxu0 0.0
  %3152 = vmatpush1.msra.mxu0 0.0
  %3153 = vmatprep.subr.mxu0 0.0
  %3154 = vmatpush1.msra.mxu0 0.0
  %3155 = vmatprep.subr.mxu0 0.0
  %3156 = vmatpush1.msra.mxu0 0.0
  %3157 = vmatprep.subr.mxu0 0.0
  %3158 = vmatpush1.msra.mxu0 0.0
  %3159 = vmatprep.subr.mxu0 0.0
  %3160 = vmatpush1.msra.mxu0 0.0
  %3161 = vmatprep.subr.mxu0 0.0
  %3162 = vmatpush1.msra.mxu0 0.0
  %3163 = vmatprep.subr.mxu0 0.0
  %3164 = vmatpush1.msra.mxu0 0.0
  %3165 = vmatprep.subr.mxu0 0.0
  %3166 = vmatpush1.msra.mxu0 0.0
  %3167 = vmatprep.subr.mxu0 0.0
  %3168 = vmatpush1.msra.mxu0 0.0
  %3169 = vmatprep.subr.mxu0 0.0
  %3170 = vmatpush1.msra.mxu0 0.0
  %3171 = vmatprep.subr.mxu0 0.0
  %3172 = vmatpush1.msra.mxu0 0.0
  %3173 = vmatprep.subr.mxu0 0.0
  %3174 = vmatpush1.msra.mxu0 0.0
  %3175 = vmatprep.subr.mxu0 0.0
  %3176 = vmatpush1.msra.mxu0 0.0
  %3177 = vmatprep.subr.mxu0 0.0
  %3178 = vmatpush1.msra.mxu0 0.0
  %3179 = vmatprep.subr.mxu0 0.0
  %3180 = vmatpush1.msra.mxu0 0.0
  %3181 = vmatprep.subr.mxu0 0.0
  %3182 = vmatpush1.msra.mxu0 0.0
  %3183 = vmatprep.subr.mxu0 0.0
  %3184 = vmatpush1.msra.mxu0 0.0
  %3185 = vmatprep.subr.mxu0 0.0
  %3186 = vmatpush1.msra.mxu0 0.0
  %3187 = vmatprep.subr.mxu0 0.0
  %3188 = vmatpush1.msra.mxu0 0.0
  %3189 = vmatprep.subr.mxu0 0.0
  %3190 = vmatpush1.msra.mxu0 0.0
  %3191 = vmatprep.subr.mxu0 0.0
  %3192 = vmatpush1.msra.mxu0 0.0
  %3193 = vmatprep.subr.mxu0 0.0
  %3194 = vmatpush1.msra.mxu0 0.0
  %3195 = vmatprep.subr.mxu0 0.0
  %3196 = vmatpush1.msra.mxu0 0.0
  %3197 = vmatprep.subr.mxu0 0.0
  %3198 = vmatpush1.msra.mxu0 0.0
  %3199 = vmatprep.subr.mxu0 0.0
  %3200 = vmatpush1.msra.mxu0 0.0
  %3201 = vmatprep.subr.mxu0 0.0
  %3202 = vmatpush1.msra.mxu0 0.0
  %3203 = vmatprep.subr.mxu0 0.0
  %3204 = vmatpush1.msra.mxu0 0.0
  %3205 = vmatprep.subr.mxu0 0.0
  %3206 = vmatpush1.msra.mxu0 0.0
  %3207 = vmatprep.subr.mxu0 0.0
  %3208 = vmatpush1.msra.mxu0 0.0
  %3209 = vmatprep.subr.mxu0 0.0
  %3210 = vmatpush1.msra.mxu0 0.0
  %3211 = vmatprep.mubr.f32.mxu0 0.0
  %3212 = vmatmul.mubr.f32.gmra.mrb[0].mxu0 %v3141
  %v3213 = vpop.f32.mrb[0].mxu0
  %v3214 = vadd.f32 0.0, %v3213
  %v3215 = vpop.f32.mrb[0].mxu0
  %3216 = vdwg.mxu0
  %vm3217 = vcmask 58368
  %3218 = vst.msk [vmem:[%s15] sm:$0x3] %vm3217, %v3214
  %3219 = vrot.lane.b32.xlu0 %v2886, 120
  %v3220 = vpop.permute.xlu0 %3219
  %3221 = vrot.lane.b32.xlu0 %v2963, 120
  %v3222 = vpop.permute.xlu0 %3221
  %3223 = vrot.lane.b32.xlu0 %v2968, 120
  %v3224 = vpop.permute.xlu0 %3223
  %v3225 = vsel %vm1751, %v3220, 0
  %v3227 = vsel %vm1751, %v3222, 0
  %v3229 = vsel %vm1751, %v3224, 0
  %3231 = vmatprep.subr.mxu0 0.0
  %3232 = vmatpush1.xpose.msra.mxu0 %v3227
  %3233 = vmatprep.subr.mxu0 0.0
  %3234 = vmatpush1.xpose.msra.mxu0 %v3229
  %3235 = vmatprep.subr.mxu0 0.0
  %3236 = vmatpush1.xpose.msra.mxu0 0.0
  %3237 = vmatprep.subr.mxu0 0.0
  %3238 = vmatpush1.xpose.msra.mxu0 0.0
  %3239 = vmatprep.subr.mxu0 0.0
  %3240 = vmatpush1.xpose.msra.mxu0 0.0
  %3241 = vmatprep.subr.mxu0 0.0
  %3242 = vmatpush1.xpose.msra.mxu0 0.0
  %3243 = vmatprep.subr.mxu0 0.0
  %3244 = vmatpush1.xpose.msra.mxu0 0.0
  %3245 = vmatprep.subr.mxu0 0.0
  %3246 = vmatpush1.xpose.msra.mxu0 0.0
  %3247 = vmatprep.subr.mxu0 0.0
  %3248 = vmatpush1.xpose.msra.mxu0 0.0
  %3249 = vmatprep.subr.mxu0 0.0
  %3250 = vmatpush1.xpose.msra.mxu0 0.0
  %3251 = vmatprep.subr.mxu0 0.0
  %3252 = vmatpush1.xpose.msra.mxu0 0.0
  %3253 = vmatprep.subr.mxu0 0.0
  %3254 = vmatpush1.xpose.msra.mxu0 0.0
  %3255 = vmatprep.subr.mxu0 0.0
  %3256 = vmatpush1.xpose.msra.mxu0 0.0
  %3257 = vmatprep.subr.mxu0 0.0
  %3258 = vmatpush1.xpose.msra.mxu0 0.0
  %3259 = vmatprep.subr.mxu0 0.0
  %3260 = vmatpush1.xpose.msra.mxu0 0.0
  %3261 = vmatprep.subr.mxu0 0.0
  %3262 = vmatpush1.xpose.msra.mxu0 0.0
  %3263 = vmatprep.subr.mxu0 0.0
  %3264 = vmatpush1.xpose.msra.mxu0 0.0
  %3265 = vmatprep.subr.mxu0 0.0
  %3266 = vmatpush1.xpose.msra.mxu0 0.0
  %3267 = vmatprep.subr.mxu0 0.0
  %3268 = vmatpush1.xpose.msra.mxu0 0.0
  %3269 = vmatprep.subr.mxu0 0.0
  %3270 = vmatpush1.xpose.msra.mxu0 0.0
  %3271 = vmatprep.subr.mxu0 0.0
  %3272 = vmatpush1.xpose.msra.mxu0 0.0
  %3273 = vmatprep.subr.mxu0 0.0
  %3274 = vmatpush1.xpose.msra.mxu0 0.0
  %3275 = vmatprep.subr.mxu0 0.0
  %3276 = vmatpush1.xpose.msra.mxu0 0.0
  %3277 = vmatprep.subr.mxu0 0.0
  %3278 = vmatpush1.xpose.msra.mxu0 0.0
  %3279 = vmatprep.subr.mxu0 0.0
  %3280 = vmatpush1.xpose.msra.mxu0 0.0
  %3281 = vmatprep.subr.mxu0 0.0
  %3282 = vmatpush1.xpose.msra.mxu0 0.0
  %3283 = vmatprep.subr.mxu0 0.0
  %3284 = vmatpush1.xpose.msra.mxu0 0.0
  %3285 = vmatprep.subr.mxu0 0.0
  %3286 = vmatpush1.xpose.msra.mxu0 0.0
  %3287 = vmatprep.subr.mxu0 0.0
  %3288 = vmatpush1.xpose.msra.mxu0 0.0
  %3289 = vmatprep.subr.mxu0 0.0
  %3290 = vmatpush1.xpose.msra.mxu0 0.0
  %3291 = vmatprep.subr.mxu0 0.0
  %3292 = vmatpush1.xpose.msra.mxu0 0.0
  %3293 = vmatprep.subr.mxu0 0.0
  %3294 = vmatpush1.xpose.msra.mxu0 0.0
  %3295 = vmatprep.mubr.f32.mxu0 0.0
  %3296 = vmatmul.mubr.f32.gmra.mrb[0].mxu0 %v3225
  %v3297 = vpop.f32.mrb[0].mxu0
  %v3298 = vadd.f32 0.0, %v3297
  %v3299 = vpop.f32.mrb[0].mxu0
  %3300 = vdwg.mxu0
  %v3301 = vmul.f32 %v3298, 0.35355338
  %v3302 = vsel %vm3127, %v3301, -inf
  %3303 = vmax.xlane.f32.xlu0 %v3302
  %v3304 = vpop.xlane.xlu0 %3303
  %v3305 = vsub.f32 %v3301, %v3304
  %v3306 = vmul.f32 %v3305, 1.442695
  %v3307 = vpow.pop %v3306
  %v3308 = vsel %vm3127, %v3307, 0.0
  %3309 = vadd.xlane.f32.xlu0 %v3308
  %v3310 = vpop.xlane.xlu0 %3309
  %v3311 = vrcp.pop %v3310
  %v3312 = vmul.f32 %v3307, %v3311
  %3314 = vrot.lane.b32.xlu0 %v3039, 120
  %v3315 = vpop.permute.xlu0 %3314
  %3316 = vrot.lane.b32.xlu0 %v3044, 120
  %v3317 = vpop.permute.xlu0 %3316
  %v3320 = vsel %vm3139, %v3312, 0
  %v3322 = vsel %vm3143, %v3317, 0
  %3324 = vmatprep.subr.mxu0 0.0
  %3325 = vmatpush1.msra.mxu0 %v3315
  %3326 = vmatprep.subr.mxu0 0.0
  %3327 = vmatpush1.msra.mxu0 %v3322
  %3328 = vmatprep.subr.mxu0 0.0
  %3329 = vmatpush1.msra.mxu0 0.0
  %3330 = vmatprep.subr.mxu0 0.0
  %3331 = vmatpush1.msra.mxu0 0.0
  %3332 = vmatprep.subr.mxu0 0.0
  %3333 = vmatpush1.msra.mxu0 0.0
  %3334 = vmatprep.subr.mxu0 0.0
  %3335 = vmatpush1.msra.mxu0 0.0
  %3336 = vmatprep.subr.mxu0 0.0
  %3337 = vmatpush1.msra.mxu0 0.0
  %3338 = vmatprep.subr.mxu0 0.0
  %3339 = vmatpush1.msra.mxu0 0.0
  %3340 = vmatprep.subr.mxu0 0.0
  %3341 = vmatpush1.msra.mxu0 0.0
  %3342 = vmatprep.subr.mxu0 0.0
  %3343 = vmatpush1.msra.mxu0 0.0
  %3344 = vmatprep.subr.mxu0 0.0
  %3345 = vmatpush1.msra.mxu0 0.0
  %3346 = vmatprep.subr.mxu0 0.0
  %3347 = vmatpush1.msra.mxu0 0.0
  %3348 = vmatprep.subr.mxu0 0.0
  %3349 = vmatpush1.msra.mxu0 0.0
  %3350 = vmatprep.subr.mxu0 0.0
  %3351 = vmatpush1.msra.mxu0 0.0
  %3352 = vmatprep.subr.mxu0 0.0
  %3353 = vmatpush1.msra.mxu0 0.0
  %3354 = vmatprep.subr.mxu0 0.0
  %3355 = vmatpush1.msra.mxu0 0.0
  %3356 = vmatprep.subr.mxu0 0.0
  %3357 = vmatpush1.msra.mxu0 0.0
  %3358 = vmatprep.subr.mxu0 0.0
  %3359 = vmatpush1.msra.mxu0 0.0
  %3360 = vmatprep.subr.mxu0 0.0
  %3361 = vmatpush1.msra.mxu0 0.0
  %3362 = vmatprep.subr.mxu0 0.0
  %3363 = vmatpush1.msra.mxu0 0.0
  %3364 = vmatprep.subr.mxu0 0.0
  %3365 = vmatpush1.msra.mxu0 0.0
  %3366 = vmatprep.subr.mxu0 0.0
  %3367 = vmatpush1.msra.mxu0 0.0
  %3368 = vmatprep.subr.mxu0 0.0
  %3369 = vmatpush1.msra.mxu0 0.0
  %3370 = vmatprep.subr.mxu0 0.0
  %3371 = vmatpush1.msra.mxu0 0.0
  %3372 = vmatprep.subr.mxu0 0.0
  %3373 = vmatpush1.msra.mxu0 0.0
  %3374 = vmatprep.subr.mxu0 0.0
  %3375 = vmatpush1.msra.mxu0 0.0
  %3376 = vmatprep.subr.mxu0 0.0
  %3377 = vmatpush1.msra.mxu0 0.0
  %3378 = vmatprep.subr.mxu0 0.0
  %3379 = vmatpush1.msra.mxu0 0.0
  %3380 = vmatprep.subr.mxu0 0.0
  %3381 = vmatpush1.msra.mxu0 0.0
  %3382 = vmatprep.subr.mxu0 0.0
  %3383 = vmatpush1.msra.mxu0 0.0
  %3384 = vmatprep.subr.mxu0 0.0
  %3385 = vmatpush1.msra.mxu0 0.0
  %3386 = vmatprep.subr.mxu0 0.0
  %3387 = vmatpush1.msra.mxu0 0.0
  %3388 = vmatprep.mubr.f32.mxu0 0.0
  %3389 = vmatmul.mubr.f32.gmra.mrb[0].mxu0 %v3320
  %v3390 = vpop.f32.mrb[0].mxu0
  %v3391 = vadd.f32 0.0, %v3390
  %v3392 = vpop.f32.mrb[0].mxu0
  %3393 = vdwg.mxu0
  %s3394 = scalar_lea.vmem %s15, 2
  %3395 = vst.msk [vmem:[%s3394] sm:$0x3] %vm3217, %v3391
  %3396 = vrot.lane.b32.xlu0 %v2886, 112
  %v3397 = vpop.permute.xlu0 %3396
  %3398 = vrot.lane.b32.xlu0 %v2963, 112
  %v3399 = vpop.permute.xlu0 %3398
  %3400 = vrot.lane.b32.xlu0 %v2968, 112
  %v3401 = vpop.permute.xlu0 %3400
  %v3402 = vsel %vm1751, %v3397, 0
  %v3404 = vsel %vm1751, %v3399, 0
  %v3406 = vsel %vm1751, %v3401, 0
  %3408 = vmatprep.subr.mxu0 0.0
  %3409 = vmatpush1.xpose.msra.mxu0 %v3404
  %3410 = vmatprep.subr.mxu0 0.0
  %3411 = vmatpush1.xpose.msra.mxu0 %v3406
  %3412 = vmatprep.subr.mxu0 0.0
  %3413 = vmatpush1.xpose.msra.mxu0 0.0
  %3414 = vmatprep.subr.mxu0 0.0
  %3415 = vmatpush1.xpose.msra.mxu0 0.0
  %3416 = vmatprep.subr.mxu0 0.0
  %3417 = vmatpush1.xpose.msra.mxu0 0.0
  %3418 = vmatprep.subr.mxu0 0.0
  %3419 = vmatpush1.xpose.msra.mxu0 0.0
  %3420 = vmatprep.subr.mxu0 0.0
  %3421 = vmatpush1.xpose.msra.mxu0 0.0
  %3422 = vmatprep.subr.mxu0 0.0
  %3423 = vmatpush1.xpose.msra.mxu0 0.0
  %3424 = vmatprep.subr.mxu0 0.0
  %3425 = vmatpush1.xpose.msra.mxu0 0.0
  %3426 = vmatprep.subr.mxu0 0.0
  %3427 = vmatpush1.xpose.msra.mxu0 0.0
  %3428 = vmatprep.subr.mxu0 0.0
  %3429 = vmatpush1.xpose.msra.mxu0 0.0
  %3430 = vmatprep.subr.mxu0 0.0
  %3431 = vmatpush1.xpose.msra.mxu0 0.0
  %3432 = vmatprep.subr.mxu0 0.0
  %3433 = vmatpush1.xpose.msra.mxu0 0.0
  %3434 = vmatprep.subr.mxu0 0.0
  %3435 = vmatpush1.xpose.msra.mxu0 0.0
  %3436 = vmatprep.subr.mxu0 0.0
  %3437 = vmatpush1.xpose.msra.mxu0 0.0
  %3438 = vmatprep.subr.mxu0 0.0
  %3439 = vmatpush1.xpose.msra.mxu0 0.0
  %3440 = vmatprep.subr.mxu0 0.0
  %3441 = vmatpush1.xpose.msra.mxu0 0.0
  %3442 = vmatprep.subr.mxu0 0.0
  %3443 = vmatpush1.xpose.msra.mxu0 0.0
  %3444 = vmatprep.subr.mxu0 0.0
  %3445 = vmatpush1.xpose.msra.mxu0 0.0
  %3446 = vmatprep.subr.mxu0 0.0
  %3447 = vmatpush1.xpose.msra.mxu0 0.0
  %3448 = vmatprep.subr.mxu0 0.0
  %3449 = vmatpush1.xpose.msra.mxu0 0.0
  %3450 = vmatprep.subr.mxu0 0.0
  %3451 = vmatpush1.xpose.msra.mxu0 0.0
  %3452 = vmatprep.subr.mxu0 0.0
  %3453 = vmatpush1.xpose.msra.mxu0 0.0
  %3454 = vmatprep.subr.mxu0 0.0
  %3455 = vmatpush1.xpose.msra.mxu0 0.0
  %3456 = vmatprep.subr.mxu0 0.0
  %3457 = vmatpush1.xpose.msra.mxu0 0.0
  %3458 = vmatprep.subr.mxu0 0.0
  %3459 = vmatpush1.xpose.msra.mxu0 0.0
  %3460 = vmatprep.subr.mxu0 0.0
  %3461 = vmatpush1.xpose.msra.mxu0 0.0
  %3462 = vmatprep.subr.mxu0 0.0
  %3463 = vmatpush1.xpose.msra.mxu0 0.0
  %3464 = vmatprep.subr.mxu0 0.0
  %3465 = vmatpush1.xpose.msra.mxu0 0.0
  %3466 = vmatprep.subr.mxu0 0.0
  %3467 = vmatpush1.xpose.msra.mxu0 0.0
  %3468 = vmatprep.subr.mxu0 0.0
  %3469 = vmatpush1.xpose.msra.mxu0 0.0
  %3470 = vmatprep.subr.mxu0 0.0
  %3471 = vmatpush1.xpose.msra.mxu0 0.0
  %3472 = vmatprep.mubr.f32.mxu0 0.0
  %3473 = vmatmul.mubr.f32.gmra.mrb[0].mxu0 %v3402
  %v3474 = vpop.f32.mrb[0].mxu0
  %v3475 = vadd.f32 0.0, %v3474
  %v3476 = vpop.f32.mrb[0].mxu0
  %3477 = vdwg.mxu0
  %v3478 = vmul.f32 %v3475, 0.35355338
  %v3479 = vsel %vm3127, %v3478, -inf
  %3480 = vmax.xlane.f32.xlu0 %v3479
  %v3481 = vpop.xlane.xlu0 %3480
  %v3482 = vsub.f32 %v3478, %v3481
  %v3483 = vmul.f32 %v3482, 1.442695
  %v3484 = vpow.pop %v3483
  %v3485 = vsel %vm3127, %v3484, 0.0
  %3486 = vadd.xlane.f32.xlu0 %v3485
  %v3487 = vpop.xlane.xlu0 %3486
  %v3488 = vrcp.pop %v3487
  %v3489 = vmul.f32 %v3484, %v3488
  %3490 = vrot.lane.b32.xlu0 %v3039, 112
  %v3491 = vpop.permute.xlu0 %3490
  %3492 = vrot.lane.b32.xlu0 %v3044, 112
  %v3493 = vpop.permute.xlu0 %3492
  %v3496 = vsel %vm3139, %v3489, 0
  %v3498 = vsel %vm3143, %v3493, 0
  %3500 = vmatprep.subr.mxu0 0.0
  %3501 = vmatpush1.msra.mxu0 %v3491
  %3502 = vmatprep.subr.mxu0 0.0
  %3503 = vmatpush1.msra.mxu0 %v3498
  %3504 = vmatprep.subr.mxu0 0.0
  %3505 = vmatpush1.msra.mxu0 0.0
  %3506 = vmatprep.subr.mxu0 0.0
  %3507 = vmatpush1.msra.mxu0 0.0
  %3508 = vmatprep.subr.mxu0 0.0
  %3509 = vmatpush1.msra.mxu0 0.0
  %3510 = vmatprep.subr.mxu0 0.0
  %3511 = vmatpush1.msra.mxu0 0.0
  %3512 = vmatprep.subr.mxu0 0.0
  %3513 = vmatpush1.msra.mxu0 0.0
  %3514 = vmatprep.subr.mxu0 0.0
  %3515 = vmatpush1.msra.mxu0 0.0
  %3516 = vmatprep.subr.mxu0 0.0
  %3517 = vmatpush1.msra.mxu0 0.0
  %3518 = vmatprep.subr.mxu0 0.0
  %3519 = vmatpush1.msra.mxu0 0.0
  %3520 = vmatprep.subr.mxu0 0.0
  %3521 = vmatpush1.msra.mxu0 0.0
  %3522 = vmatprep.subr.mxu0 0.0
  %3523 = vmatpush1.msra.mxu0 0.0
  %3524 = vmatprep.subr.mxu0 0.0
  %3525 = vmatpush1.msra.mxu0 0.0
  %3526 = vmatprep.subr.mxu0 0.0
  %3527 = vmatpush1.msra.mxu0 0.0
  %3528 = vmatprep.subr.mxu0 0.0
  %3529 = vmatpush1.msra.mxu0 0.0
  %3530 = vmatprep.subr.mxu0 0.0
  %3531 = vmatpush1.msra.mxu0 0.0
  %3532 = vmatprep.subr.mxu0 0.0
  %3533 = vmatpush1.msra.mxu0 0.0
  %3534 = vmatprep.subr.mxu0 0.0
  %3535 = vmatpush1.msra.mxu0 0.0
  %3536 = vmatprep.subr.mxu0 0.0
  %3537 = vmatpush1.msra.mxu0 0.0
  %3538 = vmatprep.subr.mxu0 0.0
  %3539 = vmatpush1.msra.mxu0 0.0
  %3540 = vmatprep.subr.mxu0 0.0
  %3541 = vmatpush1.msra.mxu0 0.0
  %3542 = vmatprep.subr.mxu0 0.0
  %3543 = vmatpush1.msra.mxu0 0.0
  %3544 = vmatprep.subr.mxu0 0.0
  %3545 = vmatpush1.msra.mxu0 0.0
  %3546 = vmatprep.subr.mxu0 0.0
  %3547 = vmatpush1.msra.mxu0 0.0
  %3548 = vmatprep.subr.mxu0 0.0
  %3549 = vmatpush1.msra.mxu0 0.0
  %3550 = vmatprep.subr.mxu0 0.0
  %3551 = vmatpush1.msra.mxu0 0.0
  %3552 = vmatprep.subr.mxu0 0.0
  %3553 = vmatpush1.msra.mxu0 0.0
  %3554 = vmatprep.subr.mxu0 0.0
  %3555 = vmatpush1.msra.mxu0 0.0
  %3556 = vmatprep.subr.mxu0 0.0
  %3557 = vmatpush1.msra.mxu0 0.0
  %3558 = vmatprep.subr.mxu0 0.0
  %3559 = vmatpush1.msra.mxu0 0.0
  %3560 = vmatprep.subr.mxu0 0.0
  %3561 = vmatpush1.msra.mxu0 0.0
  %3562 = vmatprep.subr.mxu0 0.0
  %3563 = vmatpush1.msra.mxu0 0.0
  %3564 = vmatprep.mubr.f32.mxu0 0.0
  %3565 = vmatmul.mubr.f32.gmra.mrb[0].mxu0 %v3496
  %v3566 = vpop.f32.mrb[0].mxu0
  %v3567 = vadd.f32 0.0, %v3566
  %v3568 = vpop.f32.mrb[0].mxu0
  %3569 = vdwg.mxu0
  %s3570 = scalar_lea.vmem %s15, 4
  %3571 = vst.msk [vmem:[%s3570] sm:$0x3] %vm3217, %v3567
  %3572 = vrot.lane.b32.xlu0 %v2886, 104
  %v3573 = vpop.permute.xlu0 %3572
  %3574 = vrot.lane.b32.xlu0 %v2963, 104
  %v3575 = vpop.permute.xlu0 %3574
  %3576 = vrot.lane.b32.xlu0 %v2968, 104
  %v3577 = vpop.permute.xlu0 %3576
  %v3578 = vsel %vm1751, %v3573, 0
  %v3580 = vsel %vm1751, %v3575, 0
  %v3582 = vsel %vm1751, %v3577, 0
  %3584 = vmatprep.subr.mxu0 0.0
  %3585 = vmatpush1.xpose.msra.mxu0 %v3580
  %3586 = vmatprep.subr.mxu0 0.0
  %3587 = vmatpush1.xpose.msra.mxu0 %v3582
  %3588 = vmatprep.subr.mxu0 0.0
  %3589 = vmatpush1.xpose.msra.mxu0 0.0
  %3590 = vmatprep.subr.mxu0 0.0
  %3591 = vmatpush1.xpose.msra.mxu0 0.0
  %3592 = vmatprep.subr.mxu0 0.0
  %3593 = vmatpush1.xpose.msra.mxu0 0.0
  %3594 = vmatprep.subr.mxu0 0.0
  %3595 = vmatpush1.xpose.msra.mxu0 0.0
  %3596 = vmatprep.subr.mxu0 0.0
  %3597 = vmatpush1.xpose.msra.mxu0 0.0
  %3598 = vmatprep.subr.mxu0 0.0
  %3599 = vmatpush1.xpose.msra.mxu0 0.0
  %3600 = vmatprep.subr.mxu0 0.0
  %3601 = vmatpush1.xpose.msra.mxu0 0.0
  %3602 = vmatprep.subr.mxu0 0.0
  %3603 = vmatpush1.xpose.msra.mxu0 0.0
  %3604 = vmatprep.subr.mxu0 0.0
  %3605 = vmatpush1.xpose.msra.mxu0 0.0
  %3606 = vmatprep.subr.mxu0 0.0
  %3607 = vmatpush1.xpose.msra.mxu0 0.0
  %3608 = vmatprep.subr.mxu0 0.0
  %3609 = vmatpush1.xpose.msra.mxu0 0.0
  %3610 = vmatprep.subr.mxu0 0.0
  %3611 = vmatpush1.xpose.msra.mxu0 0.0
  %3612 = vmatprep.subr.mxu0 0.0
  %3613 = vmatpush1.xpose.msra.mxu0 0.0
  %3614 = vmatprep.subr.mxu0 0.0
  %3615 = vmatpush1.xpose.msra.mxu0 0.0
  %3616 = vmatprep.subr.mxu0 0.0
  %3617 = vmatpush1.xpose.msra.mxu0 0.0
  %3618 = vmatprep.subr.mxu0 0.0
  %3619 = vmatpush1.xpose.msra.mxu0 0.0
  %3620 = vmatprep.subr.mxu0 0.0
  %3621 = vmatpush1.xpose.msra.mxu0 0.0
  %3622 = vmatprep.subr.mxu0 0.0
  %3623 = vmatpush1.xpose.msra.mxu0 0.0
  %3624 = vmatprep.subr.mxu0 0.0
  %3625 = vmatpush1.xpose.msra.mxu0 0.0
  %3626 = vmatprep.subr.mxu0 0.0
  %3627 = vmatpush1.xpose.msra.mxu0 0.0
  %3628 = vmatprep.subr.mxu0 0.0
  %3629 = vmatpush1.xpose.msra.mxu0 0.0
  %3630 = vmatprep.subr.mxu0 0.0
  %3631 = vmatpush1.xpose.msra.mxu0 0.0
  %3632 = vmatprep.subr.mxu0 0.0
  %3633 = vmatpush1.xpose.msra.mxu0 0.0
  %3634 = vmatprep.subr.mxu0 0.0
  %3635 = vmatpush1.xpose.msra.mxu0 0.0
  %3636 = vmatprep.subr.mxu0 0.0
  %3637 = vmatpush1.xpose.msra.mxu0 0.0
  %3638 = vmatprep.subr.mxu0 0.0
  %3639 = vmatpush1.xpose.msra.mxu0 0.0
  %3640 = vmatprep.subr.mxu0 0.0
  %3641 = vmatpush1.xpose.msra.mxu0 0.0
  %3642 = vmatprep.subr.mxu0 0.0
  %3643 = vmatpush1.xpose.msra.mxu0 0.0
  %3644 = vmatprep.subr.mxu0 0.0
  %3645 = vmatpush1.xpose.msra.mxu0 0.0
  %3646 = vmatprep.subr.mxu0 0.0
  %3647 = vmatpush1.xpose.msra.mxu0 0.0
  %3648 = vmatprep.mubr.f32.mxu0 0.0
  %3649 = vmatmul.mubr.f32.gmra.mrb[0].mxu0 %v3578
  %v3650 = vpop.f32.mrb[0].mxu0
  %v3651 = vadd.f32 0.0, %v3650
  %v3652 = vpop.f32.mrb[0].mxu0
  %3653 = vdwg.mxu0
  %v3654 = vmul.f32 %v3651, 0.35355338
  %v3655 = vsel %vm3127, %v3654, -inf
  %3656 = vmax.xlane.f32.xlu0 %v3655
  %v3657 = vpop.xlane.xlu0 %3656
  %v3658 = vsub.f32 %v3654, %v3657
  %v3659 = vmul.f32 %v3658, 1.442695
  %v3660 = vpow.pop %v3659
  %v3661 = vsel %vm3127, %v3660, 0.0
  %3662 = vadd.xlane.f32.xlu0 %v3661
  %v3663 = vpop.xlane.xlu0 %3662
  %v3664 = vrcp.pop %v3663
  %v3665 = vmul.f32 %v3660, %v3664
  %3666 = vrot.lane.b32.xlu0 %v3039, 104
  %v3667 = vpop.permute.xlu0 %3666
  %3668 = vrot.lane.b32.xlu0 %v3044, 104
  %v3669 = vpop.permute.xlu0 %3668
  %v3672 = vsel %vm3139, %v3665, 0
  %v3674 = vsel %vm3143, %v3669, 0
  %3676 = vmatprep.subr.mxu0 0.0
  %3677 = vmatpush1.msra.mxu0 %v3667
  %3678 = vmatprep.subr.mxu0 0.0
  %3679 = vmatpush1.msra.mxu0 %v3674
  %3680 = vmatprep.subr.mxu0 0.0
  %3681 = vmatpush1.msra.mxu0 0.0
  %3682 = vmatprep.subr.mxu0 0.0
  %3683 = vmatpush1.msra.mxu0 0.0
  %3684 = vmatprep.subr.mxu0 0.0
  %3685 = vmatpush1.msra.mxu0 0.0
  %3686 = vmatprep.subr.mxu0 0.0
  %3687 = vmatpush1.msra.mxu0 0.0
  %3688 = vmatprep.subr.mxu0 0.0
  %3689 = vmatpush1.msra.mxu0 0.0
  %3690 = vmatprep.subr.mxu0 0.0
  %3691 = vmatpush1.msra.mxu0 0.0
  %3692 = vmatprep.subr.mxu0 0.0
  %3693 = vmatpush1.msra.mxu0 0.0
  %3694 = vmatprep.subr.mxu0 0.0
  %3695 = vmatpush1.msra.mxu0 0.0
  %3696 = vmatprep.subr.mxu0 0.0
  %3697 = vmatpush1.msra.mxu0 0.0
  %3698 = vmatprep.subr.mxu0 0.0
  %3699 = vmatpush1.msra.mxu0 0.0
  %3700 = vmatprep.subr.mxu0 0.0
  %3701 = vmatpush1.msra.mxu0 0.0
  %3702 = vmatprep.subr.mxu0 0.0
  %3703 = vmatpush1.msra.mxu0 0.0
  %3704 = vmatprep.subr.mxu0 0.0
  %3705 = vmatpush1.msra.mxu0 0.0
  %3706 = vmatprep.subr.mxu0 0.0
  %3707 = vmatpush1.msra.mxu0 0.0
  %3708 = vmatprep.subr.mxu0 0.0
  %3709 = vmatpush1.msra.mxu0 0.0
  %3710 = vmatprep.subr.mxu0 0.0
  %3711 = vmatpush1.msra.mxu0 0.0
  %3712 = vmatprep.subr.mxu0 0.0
  %3713 = vmatpush1.msra.mxu0 0.0
  %3714 = vmatprep.subr.mxu0 0.0
  %3715 = vmatpush1.msra.mxu0 0.0
  %3716 = vmatprep.subr.mxu0 0.0
  %3717 = vmatpush1.msra.mxu0 0.0
  %3718 = vmatprep.subr.mxu0 0.0
  %3719 = vmatpush1.msra.mxu0 0.0
  %3720 = vmatprep.subr.mxu0 0.0
  %3721 = vmatpush1.msra.mxu0 0.0
  %3722 = vmatprep.subr.mxu0 0.0
  %3723 = vmatpush1.msra.mxu0 0.0
  %3724 = vmatprep.subr.mxu0 0.0
  %3725 = vmatpush1.msra.mxu0 0.0
  %3726 = vmatprep.subr.mxu0 0.0
  %3727 = vmatpush1.msra.mxu0 0.0
  %3728 = vmatprep.subr.mxu0 0.0
  %3729 = vmatpush1.msra.mxu0 0.0
  %3730 = vmatprep.subr.mxu0 0.0
  %3731 = vmatpush1.msra.mxu0 0.0
  %3732 = vmatprep.subr.mxu0 0.0
  %3733 = vmatpush1.msra.mxu0 0.0
  %3734 = vmatprep.subr.mxu0 0.0
  %3735 = vmatpush1.msra.mxu0 0.0
  %3736 = vmatprep.subr.mxu0 0.0
  %3737 = vmatpush1.msra.mxu0 0.0
  %3738 = vmatprep.subr.mxu0 0.0
  %3739 = vmatpush1.msra.mxu0 0.0
  %3740 = vmatprep.mubr.f32.mxu0 0.0
  %3741 = vmatmul.mubr.f32.gmra.mrb[0].mxu0 %v3672
  %v3742 = vpop.f32.mrb[0].mxu0
  %v3743 = vadd.f32 0.0, %v3742
  %v3744 = vpop.f32.mrb[0].mxu0
  %3745 = vdwg.mxu0
  %s3746 = scalar_lea.vmem %s15, 6
  %3747 = vst.msk [vmem:[%s3746] sm:$0x3] %vm3217, %v3743
  // Predicated region
  $region62: #{gst_forward.1} parent=0 // pred_check
    _
  $region63: #{gst_forward.1} parent=0 // pred_check_branch
    %3749 = sbr.rel (0) target = $region65
  $region64: #{gst_forward.1} parent=0 // pred_region
    _
  $region65: #{gst_forward.1} parent=0 // pred_fallthru
    _
  // Predicated region
  $region66: #{gst_forward.1} parent=0 // pred_check
    _
  $region67: #{gst_forward.1} parent=0 // pred_check_branch
    %3751 = sbr.rel (0) target = $region69
  $region68: #{gst_forward.1} parent=0 // pred_region
    _
  $region69: #{gst_forward.1} parent=0 // pred_fallthru
    _

</llo_original>
